<compile_context>
chip_gen: v7x
topology: tpu7x:2x2x1
jax: 0.10.0
libtpu: 0.0.40
codegen_flags: <defaults>
</compile_context>

<pallas_src>
import math
from functools import partial

import jax
import jax.numpy as jnp
from jax.experimental import pallas as pl
from jax.experimental.pallas import tpu as pltpu

TOP_K_EVERY_N = 3
TOP_K_RATIO = 0.5

# ---------------------------------------------------------------------------
# Backend / generation aware constants
# ---------------------------------------------------------------------------

def _backend_is_tpu():
    try:
        return jax.default_backend() == "tpu"
    except Exception:  # pragma: no cover
        return False


def _device_kind():
    try:
        return jax.devices()[0].device_kind.lower()
    except Exception:  # pragma: no cover
        return ""


_ON_TPU = _backend_is_tpu()
# MXU input dtype: bf16 only on a real TPU backend (CPU interpret has no bf16xbf16=f32 dot).
_MXU_DTYPE = jnp.bfloat16 if _ON_TPU else jnp.float32
# Writeback dtype for the big (N,HC)/(E,L*HC) intermediates (halves HBM traffic on TPU).
_INTER_DTYPE = jnp.bfloat16 if _ON_TPU else jnp.float32

_IS_V7 = "v7" in _device_kind()
_VMEM_LIMIT = (32 if _IS_V7 else 64) * 1024 * 1024   # v7x has 64 MiB VMEM; v5e/v6e 128 MiB
_ROW_TILE = 2048                                     # ~10 MiB/tile for the widest kernel
_NODE_TILE = 1024                                    # node-axis tile of the pooling kernel
_NEG = -3.0e38

_ROW_PARAMS = pltpu.CompilerParams(dimension_semantics=("parallel",),
                                   vmem_limit_bytes=_VMEM_LIMIT)
_POOL_PARAMS = pltpu.CompilerParams(dimension_semantics=("arbitrary",),
                                    vmem_limit_bytes=_VMEM_LIMIT)


def _row_tile(n):
    """Row-tile size and grid steps: full block when small, 2048-row tiles when large."""
    return (n, 1) if n <= _ROW_TILE else (_ROW_TILE, pl.cdiv(n, _ROW_TILE))


# ---------------------------------------------------------------------------
# Generic fused linear: y = act(x @ W + b), f32 accumulate, row tiled
# ---------------------------------------------------------------------------

def _linear_kernel(x_ref, w_ref, b_ref, o_ref, *, act):
    y = jnp.dot(x_ref[...].astype(w_ref.dtype), w_ref[...],
                preferred_element_type=jnp.float32) + b_ref[...]
    if act == "relu":
        y = jnp.maximum(y, 0.0)
    elif act == "sigmoid":
        y = jax.nn.sigmoid(y)
    o_ref[...] = y.astype(o_ref.dtype)


def pallas_linear(x, w, b=None, act="none", out_dtype=jnp.float32):
    x = x.astype(jnp.float32)
    n, kin = x.shape
    kin2, out = w.shape
    assert kin == kin2
    b = (jnp.zeros((1, out), jnp.float32) if b is None
         else jnp.reshape(b, (1, out)).astype(jnp.float32))
    tm, steps = _row_tile(n)
    return pl.pallas_call(
        partial(_linear_kernel, act=act),
        out_shape=jax.ShapeDtypeStruct((n, out), out_dtype),
        grid=(steps,),
        in_specs=[pl.BlockSpec((tm, kin), lambda i: (i, 0)),
                  pl.BlockSpec((kin, out), lambda i: (0, 0)),
                  pl.BlockSpec((1, out), lambda i: (0, 0))],
        out_specs=pl.BlockSpec((tm, out), lambda i: (i, 0)),
        compiler_params=_ROW_PARAMS,
    )(x, w, b)


# ---------------------------------------------------------------------------
# Fused Q/K/V/skip projection: one matmul, four separate (N, HC) outputs
# ---------------------------------------------------------------------------

def _qkvs_kernel(x_ref, w_ref, b_ref, q_ref, k_ref, v_ref, s_ref, *, hc):
    y = jnp.dot(x_ref[...].astype(w_ref.dtype), w_ref[...],
                preferred_element_type=jnp.float32) + b_ref[...]
    q_ref[...] = y[:, 0 * hc:1 * hc].astype(q_ref.dtype)
    k_ref[...] = y[:, 1 * hc:2 * hc].astype(k_ref.dtype)
    v_ref[...] = y[:, 2 * hc:3 * hc].astype(v_ref.dtype)
    s_ref[...] = y[:, 3 * hc:4 * hc].astype(s_ref.dtype)


def pallas_qkvs(x, w_qkvs, b_qkvs, hc):
    x = x.astype(jnp.float32)
    n, kin = x.shape
    tm, steps = _row_tile(n)
    out_sd = jax.ShapeDtypeStruct((n, hc), _INTER_DTYPE)
    out_spec = pl.BlockSpec((tm, hc), lambda i: (i, 0))
    return pl.pallas_call(
        partial(_qkvs_kernel, hc=hc),
        out_shape=(out_sd, out_sd, out_sd, out_sd),
        grid=(steps,),
        in_specs=[pl.BlockSpec((tm, kin), lambda i: (i, 0)),
                  pl.BlockSpec((kin, 4 * hc), lambda i: (0, 0)),
                  pl.BlockSpec((1, 4 * hc), lambda i: (0, 0))],
        out_specs=(out_spec, out_spec, out_spec, out_spec),
        compiler_params=_ROW_PARAMS,
    )(x, w_qkvs, b_qkvs)


# ---------------------------------------------------------------------------
# Fused conv epilogue: folded lin_beta + blend + transf Linear + ReLU + BN + residual
# ---------------------------------------------------------------------------

def _conv_epilogue_kernel(agg_ref, xr_ref, res_ref, wb_ref, wt_ref, bt_ref,
                          scale_ref, shift_ref, o_ref, *, add_residual):
    agg = agg_ref[...].astype(jnp.float32)           # (tm, HC) attention aggregation
    xr = xr_ref[...].astype(jnp.float32)             # (tm, HC) skip projection
    wb = wb_ref[...]                                 # (2, HC): rows [w1+w3 ; w2-w3]
    # lin_beta folded: beta = sigmoid(out@w1 + x_r@w2 + (out-x_r)@w3); stays in VMEM.
    logit = (jnp.sum(agg * wb[0:1, :], axis=-1, keepdims=True)
             + jnp.sum(xr * wb[1:2, :], axis=-1, keepdims=True))
    beta = jax.nn.sigmoid(logit)                     # (tm, 1)
    h = beta * xr + (1.0 - beta) * agg               # TransformerConv output (concat heads)
    y = jnp.dot(h.astype(wt_ref.dtype), wt_ref[...],
                preferred_element_type=jnp.float32) + bt_ref[...]
    y = jnp.maximum(y, 0.0)                          # relu(transf(.)) ...
    y = y * scale_ref[...] + shift_ref[...]          # ... then eval-mode BatchNorm affine
    if add_residual:
        y = y + res_ref[...]
    o_ref[...] = y.astype(o_ref.dtype)


def conv_epilogue(agg, x_r, residual, wbeta2, wt, bt, scale, shift):
    n, hc = agg.shape
    emb = wt.shape[1]
    add_residual = residual.shape == (n, emb)
    res = residual.astype(jnp.float32) if add_residual else jnp.zeros((1, emb), jnp.float32)
    tm, steps = _row_tile(n)
    res_spec = (pl.BlockSpec((tm, emb), lambda i: (i, 0)) if add_residual
                else pl.BlockSpec((1, emb), lambda i: (0, 0)))
    return pl.pallas_call(
        partial(_conv_epilogue_kernel, add_residual=add_residual),
        out_shape=jax.ShapeDtypeStruct((n, emb), jnp.float32),
        grid=(steps,),
        in_specs=[pl.BlockSpec((tm, hc), lambda i: (i, 0)),
                  pl.BlockSpec((tm, hc), lambda i: (i, 0)),
                  res_spec,
                  pl.BlockSpec((2, hc), lambda i: (0, 0)),
                  pl.BlockSpec((hc, emb), lambda i: (0, 0)),
                  pl.BlockSpec((1, emb), lambda i: (0, 0)),
                  pl.BlockSpec((1, emb), lambda i: (0, 0)),
                  pl.BlockSpec((1, emb), lambda i: (0, 0))],
        out_specs=pl.BlockSpec((tm, emb), lambda i: (i, 0)),
        compiler_params=_ROW_PARAMS,
    )(agg, x_r, res, wbeta2, wt, bt, scale, shift)


# ---------------------------------------------------------------------------
# Global max / mean pooling (gmp / gap): node-tiled, membership mask built in-kernel,
# f32 scratch accumulators, outputs written once on the last step.
# ---------------------------------------------------------------------------

def _global_pool_kernel(bidx_ref, x_ref, inv_cnt_ref, max_ref, mean_ref,
                        maxacc, sumacc, *, n_graphs, gpad, n_total):
    step = pl.program_id(0)
    tile = x_ref.shape[0]
    d = x_ref.shape[1]

    @pl.when(step == 0)
    def _():
        maxacc[...] = jnp.full_like(maxacc, _NEG)
        sumacc[...] = jnp.zeros_like(sumacc)

    rows = jax.lax.broadcasted_iota(jnp.int32, (tile, 1), 0) + step * tile
    valid = rows < n_total                                      # (tile, 1) row validity
    x = jnp.where(valid, x_ref[...].astype(jnp.float32), 0.0)   # (tile, D)
    b = bidx_ref[...]                                           # (tile, 1) int32
    gids = jax.lax.broadcasted_iota(jnp.int32, (tile, gpad), 1)
    member = (b == gids) & valid                                # (tile, gpad) bool

    # mean path: per-graph sums via the MXU (contract over the node-tile axis)
    sumacc[...] += jax.lax.dot_general(member.astype(jnp.float32), x,
                                       (((0,), (0,)), ((), ())),
                                       preferred_element_type=jnp.float32)

    # max path: one-pass accumulation into the 8-padded (G, D) scratch
    per_graph = [jnp.max(jnp.where(member[:, g:g + 1], x, _NEG), axis=0, keepdims=True)
                 for g in range(n_graphs)]
    if gpad > n_graphs:
        per_graph.append(jnp.full((gpad - n_graphs, d), _NEG, jnp.float32))
    maxacc[...] = jnp.maximum(maxacc[...], jnp.concatenate(per_graph, axis=0))

    @pl.when(step == pl.num_programs(0) - 1)
    def _():
        max_ref[...] = maxacc[0:n_graphs, :].astype(max_ref.dtype)
        mean_ref[...] = (sumacc[0:n_graphs, :] * inv_cnt_ref[...]).astype(mean_ref.dtype)


def pallas_global_pool(x, batch, counts):
    n, d = x.shape
    g = len(counts)
    gpad = max(8, ((g + 7) // 8) * 8)
    tile, steps = (n, 1) if n <= _NODE_TILE else (_NODE_TILE, pl.cdiv(n, _NODE_TILE))
    bidx = batch.astype(jnp.int32).reshape(n, 1)
    inv_cnt = jnp.array([[1.0 / max(int(c), 1)] for c in counts], jnp.float32)
    return pl.pallas_call(
        partial(_global_pool_kernel, n_graphs=g, gpad=gpad, n_total=n),
        out_shape=(jax.ShapeDtypeStruct((g, d), jnp.float32),
                   jax.ShapeDtypeStruct((g, d), jnp.float32)),
        grid=(steps,),
        in_specs=[pl.BlockSpec((tile, 1), lambda i: (i, 0)),
                  pl.BlockSpec((tile, d), lambda i: (i, 0)),
                  pl.BlockSpec((g, 1), lambda i: (0, 0))],
        out_specs=(pl.BlockSpec((g, d), lambda i: (0, 0)),
                   pl.BlockSpec((g, d), lambda i: (0, 0))),
        scratch_shapes=[pltpu.VMEM((gpad, d), jnp.float32),
                        pltpu.VMEM((gpad, d), jnp.float32)],
        compiler_params=_POOL_PARAMS,
    )(bidx, x.astype(jnp.float32), inv_cnt)


# ---------------------------------------------------------------------------
# Fused MLP head: (Linear -> BN -> ReLU)^k -> Linear -> sigmoid, single kernel
# ---------------------------------------------------------------------------

def _mlp_head_kernel(*refs, n_hidden):
    h_ref, o_ref = refs[0], refs[-1]
    y = h_ref[...].astype(jnp.float32)
    idx = 1
    for _ in range(n_hidden):
        w_ref, b_ref, s_ref, t_ref = refs[idx:idx + 4]
        idx += 4
        y = jnp.dot(y.astype(w_ref.dtype), w_ref[...],
                    preferred_element_type=jnp.float32) + b_ref[...]
        y = jnp.maximum(y * s_ref[...] + t_ref[...], 0.0)       # Linear -> BN -> ReLU
    w_ref, b_ref = refs[idx], refs[idx + 1]
    y = jnp.dot(y.astype(w_ref.dtype), w_ref[...],
                preferred_element_type=jnp.float32) + b_ref[...]
    o_ref[...] = jax.nn.sigmoid(y).astype(o_ref.dtype)


def pallas_mlp_head(h, layers, bns):
    g = h.shape[0]
    n_hidden = len(layers) - 1
    inputs = [h.astype(jnp.float32)]
    for lp, bn in zip(layers[:-1], bns):
        inputs += [lp["w"], lp["b"], bn["scale"], bn["shift"]]
    inputs += [layers[-1]["w"], layers[-1]["b"]]
    in_specs = [pl.BlockSpec(a.shape, lambda i: (0, 0)) for a in inputs]
    out_dim = layers[-1]["w"].shape[1]
    return pl.pallas_call(
        partial(_mlp_head_kernel, n_hidden=n_hidden),
        out_shape=jax.ShapeDtypeStruct((g, out_dim), jnp.float32),
        grid=(1,),
        in_specs=in_specs,
        out_specs=pl.BlockSpec((g, out_dim), lambda i: (0, 0)),
        compiler_params=_ROW_PARAMS,
    )(*inputs)


# ---------------------------------------------------------------------------
# TransformerConv block (PyG semantics, beta=True, concat=True), eval-mode
# ---------------------------------------------------------------------------

def transformer_conv_block(conv_p, layer_p, x, eemb, src, dst, edge_mask,
                           heads, out_ch, residual):
    n = x.shape[0]
    hc = heads * out_ch
    # ONE fused projection matmul -> four separate outputs (no XLA slice copies)
    q, k, v, x_r = pallas_qkvs(x, conv_p["w_qkvs"], conv_p["b_qkvs"], hc)
    q = q.reshape(n, heads, out_ch)
    k = k.reshape(n, heads, out_ch)
    v = v.reshape(n, heads, out_ch)

    # TODO(synk): per-edge gather, segment softmax and scatter-add are irregular
    # (data-dependent indices); kept in plain JAX/XLA. At scale this should become a
    # dst-sorted CSR Pallas kernel with scalar-prefetched row offsets, fused with the
    # conv epilogue below.
    eemb32 = eemb.astype(jnp.float32)
    k_j = k[src].astype(jnp.float32) + eemb32
    v_j = v[src].astype(jnp.float32) + eemb32
    alpha = jnp.sum(q[dst].astype(jnp.float32) * k_j, axis=-1) / math.sqrt(out_ch)  # (E, H)
    neg = jnp.float32(-1e30)
    alpha = jnp.where(edge_mask[:, None], alpha, neg)
    amax = jax.ops.segment_max(alpha, dst, num_segments=n)
    amax = jnp.where(amax > neg * 0.5, amax, 0.0)
    ex = jnp.where(edge_mask[:, None], jnp.exp(alpha - amax[dst]), 0.0)
    denom = jax.ops.segment_sum(ex, dst, num_segments=n)
    attn = ex / jnp.maximum(denom[dst], 1e-16)                  # dropout: no-op (eval)
    agg = jax.ops.segment_sum(v_j * attn[:, :, None], dst,
                              num_segments=n).reshape(n, hc)

    # fused: folded lin_beta + blend + transf Linear + ReLU + BN affine + residual add
    return conv_epilogue(agg, x_r, residual, conv_p["wbeta2"], layer_p["wt"],
                         layer_p["bt"], layer_p["scale"], layer_p["shift"])


# ---------------------------------------------------------------------------
# TopKPooling (PyG semantics; edges kept padded + masked for static shapes)
# ---------------------------------------------------------------------------

def topk_pool(p, x, src, dst, edge_mask, counts, ratio):
    n = x.shape[0]
    w = p["w"]                                                  # (D, 1)
    # 1-lane matvec: plain XLA (a Pallas call here is pure launch + masked-store cost)
    inv_norm = 1.0 / jnp.maximum(jnp.sqrt(jnp.sum(w * w)), 1e-12)
    score = jnp.tanh((x @ w)[:, 0] * inv_norm)

    # TODO(synk): data-dependent top-k selection / edge-index remapping stays as JAX glue.
    perm_parts, new_counts = [], []
    start = 0
    for n_g in counts:
        n_g = int(n_g)
        k_g = int(math.ceil(ratio * n_g))
        sg = score[start:start + n_g]
        _, idx = jax.lax.top_k(sg, k_g)
        perm_parts.append(idx.astype(jnp.int32) + start)
        new_counts.append(k_g)
        start += n_g
    perm = jnp.concatenate(perm_parts)
    n_new = int(sum(new_counts))
    new_batch = jnp.concatenate(
        [jnp.full((k_g,), g, dtype=jnp.int32) for g, k_g in enumerate(new_counts)])

    x_new = x[perm] * score[perm][:, None]

    mapping = jnp.full((n,), -1, dtype=jnp.int32).at[perm].set(
        jnp.arange(n_new, dtype=jnp.int32))
    new_src = mapping[src]
    new_dst = mapping[dst]
    valid = (new_src >= 0) & (new_dst >= 0) & edge_mask
    new_src = jnp.where(valid, new_src, 0)
    new_dst = jnp.where(valid, new_dst, 0)
    return x_new, new_src, new_dst, valid, new_batch, new_counts


# ---------------------------------------------------------------------------
# GraphEncoder + full model forward
# ---------------------------------------------------------------------------

def graph_encoder_forward(enc, x, edge_attr, src, dst, batch, counts, *, emb, heads):
    hc = emb * heads
    e = edge_attr.shape[0]
    num_layers = len(enc["convs"]) - 1
    edge_mask = jnp.ones((src.shape[0],), dtype=bool)

    # edge_attr is layer-invariant: project it for ALL conv layers in one fused matmul.
    eemb_all = pallas_linear(edge_attr, enc["w_edge_all"], out_dtype=_INTER_DTYPE)

    def eemb(li):
        return eemb_all[:, li * hc:(li + 1) * hc].reshape(e, heads, emb)

    x = x.astype(jnp.float32)
    x = transformer_conv_block(enc["convs"][0], enc["layers"][0], x, eemb(0),
                               src, dst, edge_mask, heads, emb, residual=x)

    global_rep = []
    for i in range(num_layers):
        x = transformer_conv_block(enc["convs"][i + 1], enc["layers"][i + 1], x,
                                   eemb(i + 1), src, dst, edge_mask, heads, emb,
                                   residual=x)
        if i % TOP_K_EVERY_N == 0 or i == num_layers - 1:
            x, src, dst, edge_mask, batch, counts = topk_pool(
                enc["pooling"][i], x, src, dst, edge_mask, counts, TOP_K_RATIO)
            gmax, gmean = pallas_global_pool(x, batch, counts)
            global_rep.append(jnp.concatenate([gmax, gmean], axis=1))
    return sum(global_rep)


def model_forward(params, x, edge_attr, edge_index, configuration_vector, batch_index,
                  counts, *, emb, heads):
    src = edge_index[0].astype(jnp.int32)
    dst = edge_index[1].astype(jnp.int32)
    g = graph_encoder_forward(params["encoder"], x, edge_attr.astype(jnp.float32),
                              src, dst, batch_index, counts, emb=emb, heads=heads)
    cfg = configuration_vector.reshape(g.shape[0], -1).astype(jnp.float32)
    h = jnp.concatenate([g, cfg], axis=1)
    return pallas_mlp_head(h, params["head"]["layers"], params["head"]["bns"])


# ---------------------------------------------------------------------------
# Deterministic parameter init (PyTorch layout) + one-time fuse/cast prepare
# ---------------------------------------------------------------------------

def _uniform(key, shape, lim):
    return jax.random.uniform(key, shape, jnp.float32, -lim, lim)


def _linear_init(key, fan_in, fan_out):
    kw, kb = jax.random.split(key)
    lim = 1.0 / math.sqrt(fan_in)
    return {"w": _uniform(kw, (fan_in, fan_out), lim), "b": _uniform(kb, (fan_out,), lim)}


def _conv_init(key, in_dim, edge_dim, heads, out_ch):
    hc = heads * out_ch
    ks = jax.random.split(key, 6)
    lq = _linear_init(ks[0], in_dim, hc)
    lk = _linear_init(ks[1], in_dim, hc)
    lv = _linear_init(ks[2], in_dim, hc)
    le = _linear_init(ks[3], edge_dim, hc)
    ls = _linear_init(ks[4], in_dim, hc)
    lb = _linear_init(ks[5], 3 * hc, 1)
    return {"wq": lq["w"], "bq": lq["b"], "wk": lk["w"], "bk": lk["b"],
            "wv": lv["w"], "bv": lv["b"], "we": le["w"],              # lin_edge: bias=False
            "wskip": ls["w"], "bskip": ls["b"], "wbeta": lb["w"]}     # lin_beta: bias=False


def _bn_init(dim, eps=1e-5):
    # TODO(synk): eval-mode BatchNorm1d with default running stats; for trained weights
    # recompute scale = gamma/sqrt(running_var+eps), shift = beta - running_mean*scale.
    return {"scale": jnp.full((dim,), 1.0 / math.sqrt(1.0 + eps), jnp.float32),
            "shift": jnp.zeros((dim,), jnp.float32)}


def init_graph_encoder(key, in_feats, edge_feats, emb, num_layers=3, heads=4):
    keys = jax.random.split(key, 2 + 3 * num_layers)
    ki = iter(keys)
    params = {
        "conv1": _conv_init(next(ki), in_feats, edge_feats, heads, emb),
        "transf1": _linear_init(next(ki), emb * heads, emb),
        "bn1": _bn_init(emb),
        "conv_layers": [], "transf_layers": [], "bn_layers": [], "pooling_layers": [],
    }
    for _ in range(num_layers):
        params["conv_layers"].append(_conv_init(next(ki), emb, edge_feats, heads, emb))
        params["transf_layers"].append(_linear_init(next(ki), emb * heads, emb))
        params["bn_layers"].append(_bn_init(emb))
        params["pooling_layers"].append(
            {"w": _uniform(next(ki), (emb, 1), 1.0 / math.sqrt(emb))})
    return params


def init_model(key, in_feats, edge_feats, graph_emb, config_size,
               hidden_dim=128, num_layers=3, heads=4):
    kg, *kl = jax.random.split(key, 1 + num_layers)
    params = {"graph_encoder": init_graph_encoder(kg, in_feats, edge_feats, graph_emb,
                                                  heads=heads)}
    input_dim = graph_emb * 2 + config_size
    layers = [_linear_init(kl[0], input_dim, hidden_dim)]
    bns = [_bn_init(hidden_dim)]
    for j in range(num_layers - 2):
        layers.append(_linear_init(kl[1 + j], hidden_dim, hidden_dim))
        bns.append(_bn_init(hidden_dim))
    layers.append(_linear_init(kl[num_layers - 1], hidden_dim, 1))
    params["layers"] = layers
    params["batch_norms"] = bns
    return params


def prepare_params(raw, *, emb, heads):
    """One-time weight fusion + MXU-dtype cast (mirrors loading a trained PyTorch model)."""
    hc = heads * emb

    def prep_conv(c):
        w_qkvs = jnp.concatenate([c["wq"], c["wk"], c["wv"], c["wskip"]],
                                 axis=1).astype(_MXU_DTYPE)                      # (in, 4HC)
        b_qkvs = jnp.concatenate([c["bq"], c["bk"], c["bv"], c["bskip"]]
                                 ).reshape(1, 4 * hc).astype(jnp.float32)
        wb = c["wbeta"][:, 0]
        w1, w2, w3 = wb[:hc], wb[hc:2 * hc], wb[2 * hc:]
        wbeta2 = jnp.stack([w1 + w3, w2 - w3], axis=0).astype(jnp.float32)       # (2, HC)
        return {"w_qkvs": w_qkvs, "b_qkvs": b_qkvs, "wbeta2": wbeta2}

    def prep_layer(t, bn):
        return {"wt": t["w"].astype(_MXU_DTYPE),
                "bt": t["b"].reshape(1, -1).astype(jnp.float32),
                "scale": bn["scale"].reshape(1, -1).astype(jnp.float32),
                "shift": bn["shift"].reshape(1, -1).astype(jnp.float32)}

    ge = raw["graph_encoder"]
    raw_convs = [ge["conv1"]] + list(ge["conv_layers"])
    encoder = {
        "convs": [prep_conv(c) for c in raw_convs],
        "layers": [prep_layer(ge["transf1"], ge["bn1"])] + [
            prep_layer(t, bn) for t, bn in zip(ge["transf_layers"], ge["bn_layers"])],
        "w_edge_all": jnp.concatenate([c["we"] for c in raw_convs],
                                      axis=1).astype(_MXU_DTYPE),
        "pooling": [{"w": p["w"].astype(jnp.float32)} for p in ge["pooling_layers"]],
    }
    head = {
        "layers": [{"w": lp["w"].astype(_MXU_DTYPE),
                    "b": lp["b"].reshape(1, -1).astype(jnp.float32)}
                   for lp in raw["layers"]],
        "bns": [{"scale": bn["scale"].reshape(1, -1).astype(jnp.float32),
                 "shift": bn["shift"].reshape(1, -1).astype(jnp.float32)}
                for bn in raw["batch_norms"]],
    }
    return {"encoder": encoder, "head": head}


# ---------------------------------------------------------------------------
if __name__ == "__main__":
    IN_FEATS = 32
    EDGE_FEATS = 8
    GRAPH_EMB = 32
    CONFIG_SIZE = 16
    HIDDEN = 64
    HEADS = 4

    counts = [10, 6]                 # nodes per graph (batch of 2 graphs)
    edges_per_graph = [24, 16]
    n_nodes = sum(counts)
    n_graphs = len(counts)
    n_edges = sum(edges_per_graph)

    key = jax.random.PRNGKey(0)
    kx, ke, kcfg, kedges, kparams = jax.random.split(key, 5)

    x = jax.random.normal(kx, (n_nodes, IN_FEATS), jnp.float32)
    edge_attr = jax.random.normal(ke, (n_edges, EDGE_FEATS), jnp.float32)
    configuration_vector = jax.random.normal(kcfg, (n_graphs, CONFIG_SIZE), jnp.float32)

    # edges strictly within each graph
    src_parts, dst_parts, start = [], [], 0
    ek = jax.random.split(kedges, 2 * n_graphs)
    for g, (n_g, e_g) in enumerate(zip(counts, edges_per_graph)):
        src_parts.append(start + jax.random.randint(ek[2 * g], (e_g,), 0, n_g, jnp.int32))
        dst_parts.append(start + jax.random.randint(ek[2 * g + 1], (e_g,), 0, n_g, jnp.int32))
        start += n_g
    edge_index = jnp.stack([jnp.concatenate(src_parts), jnp.concatenate(dst_parts)], axis=0)
    batch_index = jnp.concatenate([jnp.full((n_g,), g, jnp.int32)
                                   for g, n_g in enumerate(counts)])

    raw_params = init_model(kparams, IN_FEATS, EDGE_FEATS, GRAPH_EMB, CONFIG_SIZE,
                            hidden_dim=HIDDEN, num_layers=3, heads=HEADS)
    fast_params = prepare_params(raw_params, emb=GRAPH_EMB, heads=HEADS)

    fwd = jax.jit(model_forward, static_argnames=("counts", "emb", "heads"))
    pred = fwd(fast_params, x, edge_attr, edge_index, configuration_vector, batch_index,
               counts=tuple(counts), emb=GRAPH_EMB, heads=HEADS)
    pred = jax.block_until_ready(pred)
    assert pred.shape == (n_graphs, 1), pred.shape
    assert bool(jnp.all(jnp.isfinite(pred))), pred
    print("KERNEL_OK")
</pallas_src>

<mosaic_0001>
module attributes {stable_mosaic.version = 11 : i64} {
  func.func @_qkvs_kernel(%arg0: i32, %arg1: memref<16x32xf32, #tpu.memory_space<vmem>>, %arg2: memref<32x512xf32, #tpu.memory_space<vmem>>, %arg3: memref<1x512xf32, #tpu.memory_space<vmem>>, %arg4: memref<16x128xf32, #tpu.memory_space<vmem>>, %arg5: memref<16x128xf32, #tpu.memory_space<vmem>>, %arg6: memref<16x128xf32, #tpu.memory_space<vmem>>, %arg7: memref<16x128xf32, #tpu.memory_space<vmem>>) attributes {dimension_semantics = [#tpu.dimension_semantics<parallel>], iteration_bounds = array<i64: 1>, scalar_prefetch = 0 : i64, scratch_operands = 0 : i64, tpu.core_type = #tpu.core_type<tc>, window_params = [{transform_indices = @transform_0, window_bounds = array<i64: 16, 32>}, {pipeline_mode = #tpu.pipeline_mode<synchronous>, transform_indices = @transform_1, window_bounds = array<i64: 32, 512>}, {pipeline_mode = #tpu.pipeline_mode<synchronous>, transform_indices = @transform_2, window_bounds = array<i64: 1, 512>}, {transform_indices = @transform_3, window_bounds = array<i64: 16, 128>}, {transform_indices = @transform_4, window_bounds = array<i64: 16, 128>}, {transform_indices = @transform_5, window_bounds = array<i64: 16, 128>}, {transform_indices = @transform_6, window_bounds = array<i64: 16, 128>}]} {
    %c0 = arith.constant 0 : index
    %c0_0 = arith.constant 0 : index
    %0 = vector.load %arg1[%c0, %c0_0] : memref<16x32xf32, #tpu.memory_space<vmem>>, vector<16x32xf32>
    %c0_1 = arith.constant 0 : index
    %c0_2 = arith.constant 0 : index
    %1 = vector.load %arg2[%c0_1, %c0_2] : memref<32x512xf32, #tpu.memory_space<vmem>>, vector<32x512xf32>
    %cst = arith.constant dense<0.000000e+00> : vector<16x512xf32>
    %2 = tpu.matmul %0, %1, %cst {dimension_numbers = #tpu.dot_dimension_numbers<[1], [0], [0], [1], [0, 0, 1, 1], [], []>} : vector<16x32xf32>, vector<32x512xf32>, vector<16x512xf32> -> vector<16x512xf32>
    %c0_3 = arith.constant 0 : index
    %c0_4 = arith.constant 0 : index
    %3 = vector.load %arg3[%c0_3, %c0_4] : memref<1x512xf32, #tpu.memory_space<vmem>>, vector<1x512xf32>
    %4 = vector.broadcast %3 : vector<1x512xf32> to vector<16x512xf32>
    %5 = arith.addf %2, %4 : vector<16x512xf32>
    %6 = vector.extract_strided_slice %5 {offsets = [0, 0], sizes = [16, 128], strides = [1, 1]} : vector<16x512xf32> to vector<16x128xf32>
    %c0_5 = arith.constant 0 : index
    %c0_6 = arith.constant 0 : index
    %7 = vector.load %arg4[%c0_5, %c0_6] : memref<16x128xf32, #tpu.memory_space<vmem>>, vector<16x128xf32>
    tpu.vector_store %arg4[%c0_5, %c0_6], %6 {strides = array<i32>} : memref<16x128xf32, #tpu.memory_space<vmem>>, vector<16x128xf32>,
    %8 = vector.extract_strided_slice %5 {offsets = [0, 128], sizes = [16, 128], strides = [1, 1]} : vector<16x512xf32> to vector<16x128xf32>
    %c0_7 = arith.constant 0 : index
    %c0_8 = arith.constant 0 : index
    %9 = vector.load %arg5[%c0_7, %c0_8] : memref<16x128xf32, #tpu.memory_space<vmem>>, vector<16x128xf32>
    tpu.vector_store %arg5[%c0_7, %c0_8], %8 {strides = array<i32>} : memref<16x128xf32, #tpu.memory_space<vmem>>, vector<16x128xf32>,
    %10 = vector.extract_strided_slice %5 {offsets = [0, 256], sizes = [16, 128], strides = [1, 1]} : vector<16x512xf32> to vector<16x128xf32>
    %c0_9 = arith.constant 0 : index
    %c0_10 = arith.constant 0 : index
    %11 = vector.load %arg6[%c0_9, %c0_10] : memref<16x128xf32, #tpu.memory_space<vmem>>, vector<16x128xf32>
    tpu.vector_store %arg6[%c0_9, %c0_10], %10 {strides = array<i32>} : memref<16x128xf32, #tpu.memory_space<vmem>>, vector<16x128xf32>,
    %12 = vector.extract_strided_slice %5 {offsets = [0, 384], sizes = [16, 128], strides = [1, 1]} : vector<16x512xf32> to vector<16x128xf32>
    %c0_11 = arith.constant 0 : index
    %c0_12 = arith.constant 0 : index
    %13 = vector.load %arg7[%c0_11, %c0_12] : memref<16x128xf32, #tpu.memory_space<vmem>>, vector<16x128xf32>
    tpu.vector_store %arg7[%c0_11, %c0_12], %12 {strides = array<i32>} : memref<16x128xf32, #tpu.memory_space<vmem>>, vector<16x128xf32>,
    return
  }
  func.func @transform_0(%arg0: i32) -> (i32, i32) {
    %c0_i32 = arith.constant 0 : i32
    %c0_i32_0 = arith.constant 0 : i32
    return %arg0, %c0_i32 : i32, i32
  }
  func.func @transform_1(%arg0: i32) -> (i32, i32) {
    %c0_i32 = arith.constant 0 : i32
    %c0_i32_0 = arith.constant 0 : i32
    %c0_i32_1 = arith.constant 0 : i32
    return %c0_i32, %c0_i32_0 : i32, i32
  }
  func.func @transform_2(%arg0: i32) -> (i32, i32) {
    %c0_i32 = arith.constant 0 : i32
    %c0_i32_0 = arith.constant 0 : i32
    %c0_i32_1 = arith.constant 0 : i32
    return %c0_i32, %c0_i32_0 : i32, i32
  }
  func.func @transform_3(%arg0: i32) -> (i32, i32) {
    %c0_i32 = arith.constant 0 : i32
    %c0_i32_0 = arith.constant 0 : i32
    return %arg0, %c0_i32 : i32, i32
  }
  func.func @transform_4(%arg0: i32) -> (i32, i32) {
    %c0_i32 = arith.constant 0 : i32
    %c0_i32_0 = arith.constant 0 : i32
    return %arg0, %c0_i32 : i32, i32
  }
  func.func @transform_5(%arg0: i32) -> (i32, i32) {
    %c0_i32 = arith.constant 0 : i32
    %c0_i32_0 = arith.constant 0 : i32
    return %arg0, %c0_i32 : i32, i32
  }
  func.func @transform_6(%arg0: i32) -> (i32, i32) {
    %c0_i32 = arith.constant 0 : i32
    %c0_i32_0 = arith.constant 0 : i32
    return %arg0, %c0_i32 : i32, i32
  }
}

module attributes {stable_mosaic.version = 11 : i64} {
  func.func @_linear_kernel(%arg0: i32, %arg1: memref<40x8xf32, #tpu.memory_space<vmem>>, %arg2: memref<8x512xf32, #tpu.memory_space<vmem>>, %arg3: memref<1x512xf32, #tpu.memory_space<vmem>>, %arg4: memref<40x512xf32, #tpu.memory_space<vmem>>) attributes {dimension_semantics = [#tpu.dimension_semantics<parallel>], iteration_bounds = array<i64: 1>, scalar_prefetch = 0 : i64, scratch_operands = 0 : i64, tpu.core_type = #tpu.core_type<tc>, window_params = [{transform_indices = @transform_0, window_bounds = array<i64: 40, 8>}, {pipeline_mode = #tpu.pipeline_mode<synchronous>, transform_indices = @transform_1, window_bounds = array<i64: 8, 512>}, {pipeline_mode = #tpu.pipeline_mode<synchronous>, transform_indices = @transform_2, window_bounds = array<i64: 1, 512>}, {transform_indices = @transform_3, window_bounds = array<i64: 40, 512>}]} {
    %c0 = arith.constant 0 : index
    %c0_0 = arith.constant 0 : index
    %0 = vector.load %arg1[%c0, %c0_0] : memref<40x8xf32, #tpu.memory_space<vmem>>, vector<40x8xf32>
    %c0_1 = arith.constant 0 : index
    %c0_2 = arith.constant 0 : index
    %1 = vector.load %arg2[%c0_1, %c0_2] : memref<8x512xf32, #tpu.memory_space<vmem>>, vector<8x512xf32>
    %cst = arith.constant dense<0.000000e+00> : vector<40x512xf32>
    %2 = tpu.matmul %0, %1, %cst {dimension_numbers = #tpu.dot_dimension_numbers<[1], [0], [0], [1], [0, 0, 1, 1], [], []>} : vector<40x8xf32>, vector<8x512xf32>, vector<40x512xf32> -> vector<40x512xf32>
    %c0_3 = arith.constant 0 : index
    %c0_4 = arith.constant 0 : index
    %3 = vector.load %arg3[%c0_3, %c0_4] : memref<1x512xf32, #tpu.memory_space<vmem>>, vector<1x512xf32>
    %4 = vector.broadcast %3 : vector<1x512xf32> to vector<40x512xf32>
    %5 = arith.addf %2, %4 : vector<40x512xf32>
    %c0_5 = arith.constant 0 : index
    %c0_6 = arith.constant 0 : index
    %6 = vector.load %arg4[%c0_5, %c0_6] : memref<40x512xf32, #tpu.memory_space<vmem>>, vector<40x512xf32>
    tpu.vector_store %arg4[%c0_5, %c0_6], %5 {strides = array<i32>} : memref<40x512xf32, #tpu.memory_space<vmem>>, vector<40x512xf32>,
    return
  }
  func.func @transform_0(%arg0: i32) -> (i32, i32) {
    %c0_i32 = arith.constant 0 : i32
    %c0_i32_0 = arith.constant 0 : i32
    return %arg0, %c0_i32 : i32, i32
  }
  func.func @transform_1(%arg0: i32) -> (i32, i32) {
    %c0_i32 = arith.constant 0 : i32
    %c0_i32_0 = arith.constant 0 : i32
    %c0_i32_1 = arith.constant 0 : i32
    return %c0_i32, %c0_i32_0 : i32, i32
  }
  func.func @transform_2(%arg0: i32) -> (i32, i32) {
    %c0_i32 = arith.constant 0 : i32
    %c0_i32_0 = arith.constant 0 : i32
    %c0_i32_1 = arith.constant 0 : i32
    return %c0_i32, %c0_i32_0 : i32, i32
  }
  func.func @transform_3(%arg0: i32) -> (i32, i32) {
    %c0_i32 = arith.constant 0 : i32
    %c0_i32_0 = arith.constant 0 : i32
    return %arg0, %c0_i32 : i32, i32
  }
}

module attributes {stable_mosaic.version = 11 : i64} {
  func.func @_conv_epilogue_kernel(%arg0: i32, %arg1: memref<16x128xf32, #tpu.memory_space<vmem>>, %arg2: memref<16x128xf32, #tpu.memory_space<vmem>>, %arg3: memref<16x32xf32, #tpu.memory_space<vmem>>, %arg4: memref<2x128xf32, #tpu.memory_space<vmem>>, %arg5: memref<128x32xf32, #tpu.memory_space<vmem>>, %arg6: memref<1x32xf32, #tpu.memory_space<vmem>>, %arg7: memref<1x32xf32, #tpu.memory_space<vmem>>, %arg8: memref<1x32xf32, #tpu.memory_space<vmem>>, %arg9: memref<16x32xf32, #tpu.memory_space<vmem>>) attributes {dimension_semantics = [#tpu.dimension_semantics<parallel>], iteration_bounds = array<i64: 1>, scalar_prefetch = 0 : i64, scratch_operands = 0 : i64, tpu.core_type = #tpu.core_type<tc>, window_params = [{transform_indices = @transform_0, window_bounds = array<i64: 16, 128>}, {transform_indices = @transform_1, window_bounds = array<i64: 16, 128>}, {transform_indices = @transform_2, window_bounds = array<i64: 16, 32>}, {pipeline_mode = #tpu.pipeline_mode<synchronous>, transform_indices = @transform_3, window_bounds = array<i64: 2, 128>}, {pipeline_mode = #tpu.pipeline_mode<synchronous>, transform_indices = @transform_4, window_bounds = array<i64: 128, 32>}, {pipeline_mode = #tpu.pipeline_mode<synchronous>, transform_indices = @transform_5, window_bounds = array<i64: 1, 32>}, {pipeline_mode = #tpu.pipeline_mode<synchronous>, transform_indices = @transform_6, window_bounds = array<i64: 1, 32>}, {pipeline_mode = #tpu.pipeline_mode<synchronous>, transform_indices = @transform_7, window_bounds = array<i64: 1, 32>}, {transform_indices = @transform_8, window_bounds = array<i64: 16, 32>}]} {
    %c0 = arith.constant 0 : index
    %c0_0 = arith.constant 0 : index
    %0 = vector.load %arg1[%c0, %c0_0] : memref<16x128xf32, #tpu.memory_space<vmem>>, vector<16x128xf32>
    %c0_1 = arith.constant 0 : index
    %c0_2 = arith.constant 0 : index
    %1 = vector.load %arg2[%c0_1, %c0_2] : memref<16x128xf32, #tpu.memory_space<vmem>>, vector<16x128xf32>
    %c0_3 = arith.constant 0 : index
    %c0_4 = arith.constant 0 : index
    %2 = vector.load %arg4[%c0_3, %c0_4] : memref<2x128xf32, #tpu.memory_space<vmem>>, vector<2x128xf32>
    %3 = vector.extract_strided_slice %2 {offsets = [0, 0], sizes = [1, 128], strides = [1, 1]} : vector<2x128xf32> to vector<1x128xf32>
    %4 = vector.broadcast %3 : vector<1x128xf32> to vector<16x128xf32>
    %5 = arith.mulf %0, %4 : vector<16x128xf32>
    %cst = arith.constant dense<0.000000e+00> : vector<16xf32>
    %6 = vector.multi_reduction <add>, %5, %cst [1] : vector<16x128xf32> to vector<16xf32>
    %7 = vector.shape_cast %6 : vector<16xf32> to vector<16x1xf32>
    %8 = vector.extract_strided_slice %2 {offsets = [1, 0], sizes = [1, 128], strides = [1, 1]} : vector<2x128xf32> to vector<1x128xf32>
    %9 = vector.broadcast %8 : vector<1x128xf32> to vector<16x128xf32>
    %10 = arith.mulf %1, %9 : vector<16x128xf32>
    %cst_5 = arith.constant dense<0.000000e+00> : vector<16xf32>
    %11 = vector.multi_reduction <add>, %10, %cst_5 [1] : vector<16x128xf32> to vector<16xf32>
    %12 = vector.shape_cast %11 : vector<16xf32> to vector<16x1xf32>
    %13 = arith.addf %7, %12 : vector<16x1xf32>
    %14 = arith.negf %13 : vector<16x1xf32>
    %15 = math.exp %14 : vector<16x1xf32>
    %cst_6 = arith.constant 1.000000e+00 : f32
    %16 = vector.broadcast %cst_6 : f32 to vector<16x1xf32>
    %17 = arith.addf %16, %15 : vector<16x1xf32>
    %18 = arith.divf %16, %17 : vector<16x1xf32>
    %19 = vector.broadcast %18 : vector<16x1xf32> to vector<16x128xf32>
    %20 = arith.mulf %19, %1 : vector<16x128xf32>
    %cst_7 = arith.constant 1.000000e+00 : f32
    %21 = vector.broadcast %cst_7 : f32 to vector<16x1xf32>
    %22 = arith.subf %21, %18 : vector<16x1xf32>
    %23 = vector.broadcast %22 : vector<16x1xf32> to vector<16x128xf32>
    %24 = arith.mulf %23, %0 : vector<16x128xf32>
    %25 = arith.addf %20, %24 : vector<16x128xf32>
    %c0_8 = arith.constant 0 : index
    %c0_9 = arith.constant 0 : index
    %26 = vector.load %arg5[%c0_8, %c0_9] : memref<128x32xf32, #tpu.memory_space<vmem>>, vector<128x32xf32>
    %cst_10 = arith.constant dense<0.000000e+00> : vector<16x32xf32>
    %27 = tpu.matmul %25, %26, %cst_10 {dimension_numbers = #tpu.dot_dimension_numbers<[1], [0], [0], [1], [0, 0, 1, 1], [], []>} : vector<16x128xf32>, vector<128x32xf32>, vector<16x32xf32> -> vector<16x32xf32>
    %c0_11 = arith.constant 0 : index
    %c0_12 = arith.constant 0 : index
    %28 = vector.load %arg6[%c0_11, %c0_12] : memref<1x32xf32, #tpu.memory_space<vmem>>, vector<1x32xf32>
    %29 = vector.broadcast %28 : vector<1x32xf32> to vector<16x32xf32>
    %30 = arith.addf %27, %29 : vector<16x32xf32>
    %cst_13 = arith.constant 0.000000e+00 : f32
    %31 = vector.broadcast %cst_13 : f32 to vector<16x32xf32>
    %32 = arith.maximumf %30, %31 : vector<16x32xf32>
    %c0_14 = arith.constant 0 : index
    %c0_15 = arith.constant 0 : index
    %33 = vector.load %arg7[%c0_14, %c0_15] : memref<1x32xf32, #tpu.memory_space<vmem>>, vector<1x32xf32>
    %34 = vector.broadcast %33 : vector<1x32xf32> to vector<16x32xf32>
    %35 = arith.mulf %32, %34 : vector<16x32xf32>
    %c0_16 = arith.constant 0 : index
    %c0_17 = arith.constant 0 : index
    %36 = vector.load %arg8[%c0_16, %c0_17] : memref<1x32xf32, #tpu.memory_space<vmem>>, vector<1x32xf32>
    %37 = vector.broadcast %36 : vector<1x32xf32> to vector<16x32xf32>
    %38 = arith.addf %35, %37 : vector<16x32xf32>
    %c0_18 = arith.constant 0 : index
    %c0_19 = arith.constant 0 : index
    %39 = vector.load %arg3[%c0_18, %c0_19] : memref<16x32xf32, #tpu.memory_space<vmem>>, vector<16x32xf32>
    %40 = arith.addf %38, %39 : vector<16x32xf32>
    %c0_20 = arith.constant 0 : index
    %c0_21 = arith.constant 0 : index
    %41 = vector.load %arg9[%c0_20, %c0_21] : memref<16x32xf32, #tpu.memory_space<vmem>>, vector<16x32xf32>
    tpu.vector_store %arg9[%c0_20, %c0_21], %40 {strides = array<i32>} : memref<16x32xf32, #tpu.memory_space<vmem>>, vector<16x32xf32>,
    return
  }
  func.func @transform_0(%arg0: i32) -> (i32, i32) {
    %c0_i32 = arith.constant 0 : i32
    %c0_i32_0 = arith.constant 0 : i32
    return %arg0, %c0_i32 : i32, i32
  }
  func.func @transform_1(%arg0: i32) -> (i32, i32) {
    %c0_i32 = arith.constant 0 : i32
    %c0_i32_0 = arith.constant 0 : i32
    return %arg0, %c0_i32 : i32, i32
  }
  func.func @transform_2(%arg0: i32) -> (i32, i32) {
    %c0_i32 = arith.constant 0 : i32
    %c0_i32_0 = arith.constant 0 : i32
    return %arg0, %c0_i32 : i32, i32
  }
  func.func @transform_3(%arg0: i32) -> (i32, i32) {
    %c0_i32 = arith.constant 0 : i32
    %c0_i32_0 = arith.constant 0 : i32
    %c0_i32_1 = arith.constant 0 : i32
    return %c0_i32, %c0_i32_0 : i32, i32
  }
  func.func @transform_4(%arg0: i32) -> (i32, i32) {
    %c0_i32 = arith.constant 0 : i32
    %c0_i32_0 = arith.constant 0 : i32
    %c0_i32_1 = arith.constant 0 : i32
    return %c0_i32, %c0_i32_0 : i32, i32
  }
  func.func @transform_5(%arg0: i32) -> (i32, i32) {
    %c0_i32 = arith.constant 0 : i32
    %c0_i32_0 = arith.constant 0 : i32
    %c0_i32_1 = arith.constant 0 : i32
    return %c0_i32, %c0_i32_0 : i32, i32
  }
  func.func @transform_6(%arg0: i32) -> (i32, i32) {
    %c0_i32 = arith.constant 0 : i32
    %c0_i32_0 = arith.constant 0 : i32
    %c0_i32_1 = arith.constant 0 : i32
    return %c0_i32, %c0_i32_0 : i32, i32
  }
  func.func @transform_7(%arg0: i32) -> (i32, i32) {
    %c0_i32 = arith.constant 0 : i32
    %c0_i32_0 = arith.constant 0 : i32
    %c0_i32_1 = arith.constant 0 : i32
    return %c0_i32, %c0_i32_0 : i32, i32
  }
  func.func @transform_8(%arg0: i32) -> (i32, i32) {
    %c0_i32 = arith.constant 0 : i32
    %c0_i32_0 = arith.constant 0 : i32
    return %arg0, %c0_i32 : i32, i32
  }
}

module attributes {stable_mosaic.version = 11 : i64} {
  func.func @_qkvs_kernel(%arg0: i32, %arg1: memref<8x32xf32, #tpu.memory_space<vmem>>, %arg2: memref<32x512xf32, #tpu.memory_space<vmem>>, %arg3: memref<1x512xf32, #tpu.memory_space<vmem>>, %arg4: memref<8x128xf32, #tpu.memory_space<vmem>>, %arg5: memref<8x128xf32, #tpu.memory_space<vmem>>, %arg6: memref<8x128xf32, #tpu.memory_space<vmem>>, %arg7: memref<8x128xf32, #tpu.memory_space<vmem>>) attributes {dimension_semantics = [#tpu.dimension_semantics<parallel>], iteration_bounds = array<i64: 1>, scalar_prefetch = 0 : i64, scratch_operands = 0 : i64, tpu.core_type = #tpu.core_type<tc>, window_params = [{transform_indices = @transform_0, window_bounds = array<i64: 8, 32>}, {pipeline_mode = #tpu.pipeline_mode<synchronous>, transform_indices = @transform_1, window_bounds = array<i64: 32, 512>}, {pipeline_mode = #tpu.pipeline_mode<synchronous>, transform_indices = @transform_2, window_bounds = array<i64: 1, 512>}, {transform_indices = @transform_3, window_bounds = array<i64: 8, 128>}, {transform_indices = @transform_4, window_bounds = array<i64: 8, 128>}, {transform_indices = @transform_5, window_bounds = array<i64: 8, 128>}, {transform_indices = @transform_6, window_bounds = array<i64: 8, 128>}]} {
    %c0 = arith.constant 0 : index
    %c0_0 = arith.constant 0 : index
    %0 = vector.load %arg1[%c0, %c0_0] : memref<8x32xf32, #tpu.memory_space<vmem>>, vector<8x32xf32>
    %c0_1 = arith.constant 0 : index
    %c0_2 = arith.constant 0 : index
    %1 = vector.load %arg2[%c0_1, %c0_2] : memref<32x512xf32, #tpu.memory_space<vmem>>, vector<32x512xf32>
    %cst = arith.constant dense<0.000000e+00> : vector<8x512xf32>
    %2 = tpu.matmul %0, %1, %cst {dimension_numbers = #tpu.dot_dimension_numbers<[1], [0], [0], [1], [0, 0, 1, 1], [], []>} : vector<8x32xf32>, vector<32x512xf32>, vector<8x512xf32> -> vector<8x512xf32>
    %c0_3 = arith.constant 0 : index
    %c0_4 = arith.constant 0 : index
    %3 = vector.load %arg3[%c0_3, %c0_4] : memref<1x512xf32, #tpu.memory_space<vmem>>, vector<1x512xf32>
    %4 = vector.broadcast %3 : vector<1x512xf32> to vector<8x512xf32>
    %5 = arith.addf %2, %4 : vector<8x512xf32>
    %6 = vector.extract_strided_slice %5 {offsets = [0, 0], sizes = [8, 128], strides = [1, 1]} : vector<8x512xf32> to vector<8x128xf32>
    %c0_5 = arith.constant 0 : index
    %c0_6 = arith.constant 0 : index
    %7 = vector.load %arg4[%c0_5, %c0_6] : memref<8x128xf32, #tpu.memory_space<vmem>>, vector<8x128xf32>
    tpu.vector_store %arg4[%c0_5, %c0_6], %6 {strides = array<i32>} : memref<8x128xf32, #tpu.memory_space<vmem>>, vector<8x128xf32>,
    %8 = vector.extract_strided_slice %5 {offsets = [0, 128], sizes = [8, 128], strides = [1, 1]} : vector<8x512xf32> to vector<8x128xf32>
    %c0_7 = arith.constant 0 : index
    %c0_8 = arith.constant 0 : index
    %9 = vector.load %arg5[%c0_7, %c0_8] : memref<8x128xf32, #tpu.memory_space<vmem>>, vector<8x128xf32>
    tpu.vector_store %arg5[%c0_7, %c0_8], %8 {strides = array<i32>} : memref<8x128xf32, #tpu.memory_space<vmem>>, vector<8x128xf32>,
    %10 = vector.extract_strided_slice %5 {offsets = [0, 256], sizes = [8, 128], strides = [1, 1]} : vector<8x512xf32> to vector<8x128xf32>
    %c0_9 = arith.constant 0 : index
    %c0_10 = arith.constant 0 : index
    %11 = vector.load %arg6[%c0_9, %c0_10] : memref<8x128xf32, #tpu.memory_space<vmem>>, vector<8x128xf32>
    tpu.vector_store %arg6[%c0_9, %c0_10], %10 {strides = array<i32>} : memref<8x128xf32, #tpu.memory_space<vmem>>, vector<8x128xf32>,
    %12 = vector.extract_strided_slice %5 {offsets = [0, 384], sizes = [8, 128], strides = [1, 1]} : vector<8x512xf32> to vector<8x128xf32>
    %c0_11 = arith.constant 0 : index
    %c0_12 = arith.constant 0 : index
    %13 = vector.load %arg7[%c0_11, %c0_12] : memref<8x128xf32, #tpu.memory_space<vmem>>, vector<8x128xf32>
    tpu.vector_store %arg7[%c0_11, %c0_12], %12 {strides = array<i32>} : memref<8x128xf32, #tpu.memory_space<vmem>>, vector<8x128xf32>,
    return
  }
  func.func @transform_0(%arg0: i32) -> (i32, i32) {
    %c0_i32 = arith.constant 0 : i32
    %c0_i32_0 = arith.constant 0 : i32
    return %arg0, %c0_i32 : i32, i32
  }
  func.func @transform_1(%arg0: i32) -> (i32, i32) {
    %c0_i32 = arith.constant 0 : i32
    %c0_i32_0 = arith.constant 0 : i32
    %c0_i32_1 = arith.constant 0 : i32
    return %c0_i32, %c0_i32_0 : i32, i32
  }
  func.func @transform_2(%arg0: i32) -> (i32, i32) {
    %c0_i32 = arith.constant 0 : i32
    %c0_i32_0 = arith.constant 0 : i32
    %c0_i32_1 = arith.constant 0 : i32
    return %c0_i32, %c0_i32_0 : i32, i32
  }
  func.func @transform_3(%arg0: i32) -> (i32, i32) {
    %c0_i32 = arith.constant 0 : i32
    %c0_i32_0 = arith.constant 0 : i32
    return %arg0, %c0_i32 : i32, i32
  }
  func.func @transform_4(%arg0: i32) -> (i32, i32) {
    %c0_i32 = arith.constant 0 : i32
    %c0_i32_0 = arith.constant 0 : i32
    return %arg0, %c0_i32 : i32, i32
  }
  func.func @transform_5(%arg0: i32) -> (i32, i32) {
    %c0_i32 = arith.constant 0 : i32
    %c0_i32_0 = arith.constant 0 : i32
    return %arg0, %c0_i32 : i32, i32
  }
  func.func @transform_6(%arg0: i32) -> (i32, i32) {
    %c0_i32 = arith.constant 0 : i32
    %c0_i32_0 = arith.constant 0 : i32
    return %arg0, %c0_i32 : i32, i32
  }
}

module attributes {stable_mosaic.version = 11 : i64} {
  func.func @_conv_epilogue_kernel(%arg0: i32, %arg1: memref<8x128xf32, #tpu.memory_space<vmem>>, %arg2: memref<8x128xf32, #tpu.memory_space<vmem>>, %arg3: memref<8x32xf32, #tpu.memory_space<vmem>>, %arg4: memref<2x128xf32, #tpu.memory_space<vmem>>, %arg5: memref<128x32xf32, #tpu.memory_space<vmem>>, %arg6: memref<1x32xf32, #tpu.memory_space<vmem>>, %arg7: memref<1x32xf32, #tpu.memory_space<vmem>>, %arg8: memref<1x32xf32, #tpu.memory_space<vmem>>, %arg9: memref<8x32xf32, #tpu.memory_space<vmem>>) attributes {dimension_semantics = [#tpu.dimension_semantics<parallel>], iteration_bounds = array<i64: 1>, scalar_prefetch = 0 : i64, scratch_operands = 0 : i64, tpu.core_type = #tpu.core_type<tc>, window_params = [{transform_indices = @transform_0, window_bounds = array<i64: 8, 128>}, {transform_indices = @transform_1, window_bounds = array<i64: 8, 128>}, {transform_indices = @transform_2, window_bounds = array<i64: 8, 32>}, {pipeline_mode = #tpu.pipeline_mode<synchronous>, transform_indices = @transform_3, window_bounds = array<i64: 2, 128>}, {pipeline_mode = #tpu.pipeline_mode<synchronous>, transform_indices = @transform_4, window_bounds = array<i64: 128, 32>}, {pipeline_mode = #tpu.pipeline_mode<synchronous>, transform_indices = @transform_5, window_bounds = array<i64: 1, 32>}, {pipeline_mode = #tpu.pipeline_mode<synchronous>, transform_indices = @transform_6, window_bounds = array<i64: 1, 32>}, {pipeline_mode = #tpu.pipeline_mode<synchronous>, transform_indices = @transform_7, window_bounds = array<i64: 1, 32>}, {transform_indices = @transform_8, window_bounds = array<i64: 8, 32>}]} {
    %c0 = arith.constant 0 : index
    %c0_0 = arith.constant 0 : index
    %0 = vector.load %arg1[%c0, %c0_0] : memref<8x128xf32, #tpu.memory_space<vmem>>, vector<8x128xf32>
    %c0_1 = arith.constant 0 : index
    %c0_2 = arith.constant 0 : index
    %1 = vector.load %arg2[%c0_1, %c0_2] : memref<8x128xf32, #tpu.memory_space<vmem>>, vector<8x128xf32>
    %c0_3 = arith.constant 0 : index
    %c0_4 = arith.constant 0 : index
    %2 = vector.load %arg4[%c0_3, %c0_4] : memref<2x128xf32, #tpu.memory_space<vmem>>, vector<2x128xf32>
    %3 = vector.extract_strided_slice %2 {offsets = [0, 0], sizes = [1, 128], strides = [1, 1]} : vector<2x128xf32> to vector<1x128xf32>
    %4 = vector.broadcast %3 : vector<1x128xf32> to vector<8x128xf32>
    %5 = arith.mulf %0, %4 : vector<8x128xf32>
    %cst = arith.constant dense<0.000000e+00> : vector<8xf32>
    %6 = vector.multi_reduction <add>, %5, %cst [1] : vector<8x128xf32> to vector<8xf32>
    %7 = vector.shape_cast %6 : vector<8xf32> to vector<8x1xf32>
    %8 = vector.extract_strided_slice %2 {offsets = [1, 0], sizes = [1, 128], strides = [1, 1]} : vector<2x128xf32> to vector<1x128xf32>
    %9 = vector.broadcast %8 : vector<1x128xf32> to vector<8x128xf32>
    %10 = arith.mulf %1, %9 : vector<8x128xf32>
    %cst_5 = arith.constant dense<0.000000e+00> : vector<8xf32>
    %11 = vector.multi_reduction <add>, %10, %cst_5 [1] : vector<8x128xf32> to vector<8xf32>
    %12 = vector.shape_cast %11 : vector<8xf32> to vector<8x1xf32>
    %13 = arith.addf %7, %12 : vector<8x1xf32>
    %14 = arith.negf %13 : vector<8x1xf32>
    %15 = math.exp %14 : vector<8x1xf32>
    %cst_6 = arith.constant 1.000000e+00 : f32
    %16 = vector.broadcast %cst_6 : f32 to vector<8x1xf32>
    %17 = arith.addf %16, %15 : vector<8x1xf32>
    %18 = arith.divf %16, %17 : vector<8x1xf32>
    %19 = vector.broadcast %18 : vector<8x1xf32> to vector<8x128xf32>
    %20 = arith.mulf %19, %1 : vector<8x128xf32>
    %cst_7 = arith.constant 1.000000e+00 : f32
    %21 = vector.broadcast %cst_7 : f32 to vector<8x1xf32>
    %22 = arith.subf %21, %18 : vector<8x1xf32>
    %23 = vector.broadcast %22 : vector<8x1xf32> to vector<8x128xf32>
    %24 = arith.mulf %23, %0 : vector<8x128xf32>
    %25 = arith.addf %20, %24 : vector<8x128xf32>
    %c0_8 = arith.constant 0 : index
    %c0_9 = arith.constant 0 : index
    %26 = vector.load %arg5[%c0_8, %c0_9] : memref<128x32xf32, #tpu.memory_space<vmem>>, vector<128x32xf32>
    %cst_10 = arith.constant dense<0.000000e+00> : vector<8x32xf32>
    %27 = tpu.matmul %25, %26, %cst_10 {dimension_numbers = #tpu.dot_dimension_numbers<[1], [0], [0], [1], [0, 0, 1, 1], [], []>} : vector<8x128xf32>, vector<128x32xf32>, vector<8x32xf32> -> vector<8x32xf32>
    %c0_11 = arith.constant 0 : index
    %c0_12 = arith.constant 0 : index
    %28 = vector.load %arg6[%c0_11, %c0_12] : memref<1x32xf32, #tpu.memory_space<vmem>>, vector<1x32xf32>
    %29 = vector.broadcast %28 : vector<1x32xf32> to vector<8x32xf32>
    %30 = arith.addf %27, %29 : vector<8x32xf32>
    %cst_13 = arith.constant 0.000000e+00 : f32
    %31 = vector.broadcast %cst_13 : f32 to vector<8x32xf32>
    %32 = arith.maximumf %30, %31 : vector<8x32xf32>
    %c0_14 = arith.constant 0 : index
    %c0_15 = arith.constant 0 : index
    %33 = vector.load %arg7[%c0_14, %c0_15] : memref<1x32xf32, #tpu.memory_space<vmem>>, vector<1x32xf32>
    %34 = vector.broadcast %33 : vector<1x32xf32> to vector<8x32xf32>
    %35 = arith.mulf %32, %34 : vector<8x32xf32>
    %c0_16 = arith.constant 0 : index
    %c0_17 = arith.constant 0 : index
    %36 = vector.load %arg8[%c0_16, %c0_17] : memref<1x32xf32, #tpu.memory_space<vmem>>, vector<1x32xf32>
    %37 = vector.broadcast %36 : vector<1x32xf32> to vector<8x32xf32>
    %38 = arith.addf %35, %37 : vector<8x32xf32>
    %c0_18 = arith.constant 0 : index
    %c0_19 = arith.constant 0 : index
    %39 = vector.load %arg3[%c0_18, %c0_19] : memref<8x32xf32, #tpu.memory_space<vmem>>, vector<8x32xf32>
    %40 = arith.addf %38, %39 : vector<8x32xf32>
    %c0_20 = arith.constant 0 : index
    %c0_21 = arith.constant 0 : index
    %41 = vector.load %arg9[%c0_20, %c0_21] : memref<8x32xf32, #tpu.memory_space<vmem>>, vector<8x32xf32>
    tpu.vector_store %arg9[%c0_20, %c0_21], %40 {strides = array<i32>} : memref<8x32xf32, #tpu.memory_space<vmem>>, vector<8x32xf32>,
    return
  }
  func.func @transform_0(%arg0: i32) -> (i32, i32) {
    %c0_i32 = arith.constant 0 : i32
    %c0_i32_0 = arith.constant 0 : i32
    return %arg0, %c0_i32 : i32, i32
  }
  func.func @transform_1(%arg0: i32) -> (i32, i32) {
    %c0_i32 = arith.constant 0 : i32
    %c0_i32_0 = arith.constant 0 : i32
    return %arg0, %c0_i32 : i32, i32
  }
  func.func @transform_2(%arg0: i32) -> (i32, i32) {
    %c0_i32 = arith.constant 0 : i32
    %c0_i32_0 = arith.constant 0 : i32
    return %arg0, %c0_i32 : i32, i32
  }
  func.func @transform_3(%arg0: i32) -> (i32, i32) {
    %c0_i32 = arith.constant 0 : i32
    %c0_i32_0 = arith.constant 0 : i32
    %c0_i32_1 = arith.constant 0 : i32
    return %c0_i32, %c0_i32_0 : i32, i32
  }
  func.func @transform_4(%arg0: i32) -> (i32, i32) {
    %c0_i32 = arith.constant 0 : i32
    %c0_i32_0 = arith.constant 0 : i32
    %c0_i32_1 = arith.constant 0 : i32
    return %c0_i32, %c0_i32_0 : i32, i32
  }
  func.func @transform_5(%arg0: i32) -> (i32, i32) {
    %c0_i32 = arith.constant 0 : i32
    %c0_i32_0 = arith.constant 0 : i32
    %c0_i32_1 = arith.constant 0 : i32
    return %c0_i32, %c0_i32_0 : i32, i32
  }
  func.func @transform_6(%arg0: i32) -> (i32, i32) {
    %c0_i32 = arith.constant 0 : i32
    %c0_i32_0 = arith.constant 0 : i32
    %c0_i32_1 = arith.constant 0 : i32
    return %c0_i32, %c0_i32_0 : i32, i32
  }
  func.func @transform_7(%arg0: i32) -> (i32, i32) {
    %c0_i32 = arith.constant 0 : i32
    %c0_i32_0 = arith.constant 0 : i32
    %c0_i32_1 = arith.constant 0 : i32
    return %c0_i32, %c0_i32_0 : i32, i32
  }
  func.func @transform_8(%arg0: i32) -> (i32, i32) {
    %c0_i32 = arith.constant 0 : i32
    %c0_i32_0 = arith.constant 0 : i32
    return %arg0, %c0_i32 : i32, i32
  }
}

module attributes {stable_mosaic.version = 11 : i64} {
  func.func @_global_pool_kernel(%arg0: i32, %arg1: memref<5x1xi32, #tpu.memory_space<vmem>>, %arg2: memref<5x32xf32, #tpu.memory_space<vmem>>, %arg3: memref<2x1xf32, #tpu.memory_space<vmem>>, %arg4: memref<2x32xf32, #tpu.memory_space<vmem>>, %arg5: memref<2x32xf32, #tpu.memory_space<vmem>>, %arg6: memref<8x32xf32, #tpu.memory_space<vmem>>, %arg7: memref<8x32xf32, #tpu.memory_space<vmem>>) attributes {dimension_semantics = [#tpu.dimension_semantics<arbitrary>], iteration_bounds = array<i64: 1>, scalar_prefetch = 0 : i64, scratch_operands = 2 : i64, tpu.core_type = #tpu.core_type<tc>, window_params = [{transform_indices = @transform_0, window_bounds = array<i64: 5, 1>}, {transform_indices = @transform_1, window_bounds = array<i64: 5, 32>}, {pipeline_mode = #tpu.pipeline_mode<synchronous>, transform_indices = @transform_2, window_bounds = array<i64: 2, 1>}, {pipeline_mode = #tpu.pipeline_mode<synchronous>, transform_indices = @transform_3, window_bounds = array<i64: 2, 32>}, {pipeline_mode = #tpu.pipeline_mode<synchronous>, transform_indices = @transform_4, window_bounds = array<i64: 2, 32>}]} {
    %c0_i32 = arith.constant 0 : i32
    %0 = arith.cmpi eq, %arg0, %c0_i32 : i32
    %1 = arith.extui %0 : i1 to i32
    %c0_i32_0 = arith.constant 0 : i32
    %2 = arith.cmpi ne, %1, %c0_i32_0 : i32
    scf.if %2 {
      %cst_21 = arith.constant -3.000000e+38 : f32
      %48 = vector.broadcast %cst_21 : f32 to vector<8x32xf32>
      %c0_22 = arith.constant 0 : index
      %c0_23 = arith.constant 0 : index
      %49 = vector.load %arg6[%c0_22, %c0_23] : memref<8x32xf32, #tpu.memory_space<vmem>>, vector<8x32xf32>
      tpu.vector_store %arg6[%c0_22, %c0_23], %48 {strides = array<i32>} : memref<8x32xf32, #tpu.memory_space<vmem>>, vector<8x32xf32>,
      %cst_24 = arith.constant 0.000000e+00 : f32
      %50 = vector.broadcast %cst_24 : f32 to vector<8x32xf32>
      %c0_25 = arith.constant 0 : index
      %c0_26 = arith.constant 0 : index
      %51 = vector.load %arg7[%c0_25, %c0_26] : memref<8x32xf32, #tpu.memory_space<vmem>>, vector<8x32xf32>
      tpu.vector_store %arg7[%c0_25, %c0_26], %50 {strides = array<i32>} : memref<8x32xf32, #tpu.memory_space<vmem>>, vector<8x32xf32>,
    } else {
    }
    %3 = tpu.iota {dimensions = array<i32: 0>} : vector<5x1xi32>
    %c5_i32 = arith.constant 5 : i32
    %4 = arith.muli %arg0, %c5_i32 : i32
    %5 = vector.broadcast %4 : i32 to vector<5x1xi32>
    %6 = arith.addi %3, %5 : vector<5x1xi32>
    %c5_i32_1 = arith.constant 5 : i32
    %7 = vector.broadcast %c5_i32_1 : i32 to vector<5x1xi32>
    %8 = arith.cmpi slt, %6, %7 : vector<5x1xi32>
    %c0 = arith.constant 0 : index
    %c0_2 = arith.constant 0 : index
    %9 = vector.load %arg2[%c0, %c0_2] : memref<5x32xf32, #tpu.memory_space<vmem>>, vector<5x32xf32>
    %cst = arith.constant 0.000000e+00 : f32
    %10 = vector.shape_cast %8 : vector<5x1xi1> to vector<5x1xi1>
    %11 = vector.broadcast %10 : vector<5x1xi1> to vector<5x32xi1>
    %12 = vector.broadcast %cst : f32 to vector<5x32xf32>
    %13 = arith.select %11, %9, %12 : vector<5x32xi1>, vector<5x32xf32>
    %c0_3 = arith.constant 0 : index
    %c0_4 = arith.constant 0 : index
    %14 = vector.load %arg1[%c0_3, %c0_4] : memref<5x1xi32, #tpu.memory_space<vmem>>, vector<5x1xi32>
    %15 = tpu.iota {dimensions = array<i32: 1>} : vector<5x8xi32>
    %16 = vector.broadcast %14 : vector<5x1xi32> to vector<5x8xi32>
    %17 = arith.cmpi eq, %16, %15 : vector<5x8xi32>
    %18 = vector.broadcast %8 : vector<5x1xi1> to vector<5x8xi1>
    %19 = arith.andi %17, %18 : vector<5x8xi1>
    %c0_5 = arith.constant 0 : index
    %c0_6 = arith.constant 0 : index
    %20 = vector.load %arg7[%c0_5, %c0_6] : memref<8x32xf32, #tpu.memory_space<vmem>>, vector<8x32xf32>
    %21 = arith.extui %19 : vector<5x8xi1> to vector<5x8xi32>
    %22 = arith.sitofp %21 : vector<5x8xi32> to vector<5x8xf32>
    %cst_7 = arith.constant dense<0.000000e+00> : vector<8x32xf32>
    %23 = tpu.matmul %22, %13, %cst_7 {dimension_numbers = #tpu.dot_dimension_numbers<[0], [0], [1], [1], [0, 1, 1, 1], [], []>} : vector<5x8xf32>, vector<5x32xf32>, vector<8x32xf32> -> vector<8x32xf32>
    %24 = arith.addf %20, %23 : vector<8x32xf32>
    %c0_8 = arith.constant 0 : index
    %c0_9 = arith.constant 0 : index
    %25 = vector.load %arg7[%c0_8, %c0_9] : memref<8x32xf32, #tpu.memory_space<vmem>>, vector<8x32xf32>
    tpu.vector_store %arg7[%c0_8, %c0_9], %24 {strides = array<i32>} : memref<8x32xf32, #tpu.memory_space<vmem>>, vector<8x32xf32>,
    %26 = vector.extract_strided_slice %19 {offsets = [0, 0], sizes = [5, 1], strides = [1, 1]} : vector<5x8xi1> to vector<5x1xi1>
    %cst_10 = arith.constant -3.000000e+38 : f32
    %27 = vector.shape_cast %26 : vector<5x1xi1> to vector<5x1xi1>
    %28 = vector.broadcast %27 : vector<5x1xi1> to vector<5x32xi1>
    %29 = vector.broadcast %cst_10 : f32 to vector<5x32xf32>
    %30 = arith.select %28, %13, %29 : vector<5x32xi1>, vector<5x32xf32>
    %cst_11 = arith.constant dense<0xFF800000> : vector<32xf32>
    %31 = vector.multi_reduction <maximumf>, %30, %cst_11 [0] : vector<5x32xf32> to vector<32xf32>
    %32 = vector.shape_cast %31 : vector<32xf32> to vector<1x32xf32>
    %33 = vector.extract_strided_slice %19 {offsets = [0, 1], sizes = [5, 1], strides = [1, 1]} : vector<5x8xi1> to vector<5x1xi1>
    %cst_12 = arith.constant -3.000000e+38 : f32
    %34 = vector.shape_cast %33 : vector<5x1xi1> to vector<5x1xi1>
    %35 = vector.broadcast %34 : vector<5x1xi1> to vector<5x32xi1>
    %36 = vector.broadcast %cst_12 : f32 to vector<5x32xf32>
    %37 = arith.select %35, %13, %36 : vector<5x32xi1>, vector<5x32xf32>
    %cst_13 = arith.constant dense<0xFF800000> : vector<32xf32>
    %38 = vector.multi_reduction <maximumf>, %37, %cst_13 [0] : vector<5x32xf32> to vector<32xf32>
    %39 = vector.shape_cast %38 : vector<32xf32> to vector<1x32xf32>
    %cst_14 = arith.constant -3.000000e+38 : f32
    %40 = vector.broadcast %cst_14 : f32 to vector<6x32xf32>
    %c0_15 = arith.constant 0 : index
    %c0_16 = arith.constant 0 : index
    %41 = vector.load %arg6[%c0_15, %c0_16] : memref<8x32xf32, #tpu.memory_space<vmem>>, vector<8x32xf32>
    %42 = tpu.concatenate %32, %39, %40 in 0 : vector<1x32xf32>, vector<1x32xf32>, vector<6x32xf32> -> vector<8x32xf32>
    %43 = arith.maximumf %41, %42 : vector<8x32xf32>
    %c0_17 = arith.constant 0 : index
    %c0_18 = arith.constant 0 : index
    %44 = vector.load %arg6[%c0_17, %c0_18] : memref<8x32xf32, #tpu.memory_space<vmem>>, vector<8x32xf32>
    tpu.vector_store %arg6[%c0_17, %c0_18], %43 {strides = array<i32>} : memref<8x32xf32, #tpu.memory_space<vmem>>, vector<8x32xf32>,
    %c0_i32_19 = arith.constant 0 : i32
    %45 = arith.cmpi eq, %arg0, %c0_i32_19 : i32
    %46 = arith.extui %45 : i1 to i32
    %c0_i32_20 = arith.constant 0 : i32
    %47 = arith.cmpi ne, %46, %c0_i32_20 : i32
    scf.if %47 {
      %c0_21 = arith.constant 0 : index
      %c0_22 = arith.constant 0 : index
      %48 = vector.load %arg6[%c0_21, %c0_22] : memref<8x32xf32, #tpu.memory_space<vmem>>, vector<2x32xf32>
      %c0_23 = arith.constant 0 : index
      %c0_24 = arith.constant 0 : index
      %49 = vector.load %arg4[%c0_23, %c0_24] : memref<2x32xf32, #tpu.memory_space<vmem>>, vector<2x32xf32>
      tpu.vector_store %arg4[%c0_23, %c0_24], %48 {strides = array<i32>} : memref<2x32xf32, #tpu.memory_space<vmem>>, vector<2x32xf32>,
      %c0_25 = arith.constant 0 : index
      %c0_26 = arith.constant 0 : index
      %50 = vector.load %arg7[%c0_25, %c0_26] : memref<8x32xf32, #tpu.memory_space<vmem>>, vector<2x32xf32>
      %c0_27 = arith.constant 0 : index
      %c0_28 = arith.constant 0 : index
      %51 = vector.load %arg3[%c0_27, %c0_28] : memref<2x1xf32, #tpu.memory_space<vmem>>, vector<2x1xf32>
      %52 = vector.broadcast %51 : vector<2x1xf32> to vector<2x32xf32>
      %53 = arith.mulf %50, %52 : vector<2x32xf32>
      %c0_29 = arith.constant 0 : index
      %c0_30 = arith.constant 0 : index
      %54 = vector.load %arg5[%c0_29, %c0_30] : memref<2x32xf32, #tpu.memory_space<vmem>>, vector<2x32xf32>
      tpu.vector_store %arg5[%c0_29, %c0_30], %53 {strides = array<i32>} : memref<2x32xf32, #tpu.memory_space<vmem>>, vector<2x32xf32>,
    } else {
    }
    return
  }
  func.func @transform_0(%arg0: i32) -> (i32, i32) {
    %c0_i32 = arith.constant 0 : i32
    %c0_i32_0 = arith.constant 0 : i32
    return %arg0, %c0_i32 : i32, i32
  }
  func.func @transform_1(%arg0: i32) -> (i32, i32) {
    %c0_i32 = arith.constant 0 : i32
    %c0_i32_0 = arith.constant 0 : i32
    return %arg0, %c0_i32 : i32, i32
  }
  func.func @transform_2(%arg0: i32) -> (i32, i32) {
    %c0_i32 = arith.constant 0 : i32
    %c0_i32_0 = arith.constant 0 : i32
    %c0_i32_1 = arith.constant 0 : i32
    return %c0_i32, %c0_i32_0 : i32, i32
  }
  func.func @transform_3(%arg0: i32) -> (i32, i32) {
    %c0_i32 = arith.constant 0 : i32
    %c0_i32_0 = arith.constant 0 : i32
    %c0_i32_1 = arith.constant 0 : i32
    return %c0_i32, %c0_i32_0 : i32, i32
  }
  func.func @transform_4(%arg0: i32) -> (i32, i32) {
    %c0_i32 = arith.constant 0 : i32
    %c0_i32_0 = arith.constant 0 : i32
    %c0_i32_1 = arith.constant 0 : i32
    return %c0_i32, %c0_i32_0 : i32, i32
  }
}

module attributes {stable_mosaic.version = 11 : i64} {
  func.func @_global_pool_kernel(%arg0: i32, %arg1: memref<8x1xi32, #tpu.memory_space<vmem>>, %arg2: memref<8x32xf32, #tpu.memory_space<vmem>>, %arg3: memref<2x1xf32, #tpu.memory_space<vmem>>, %arg4: memref<2x32xf32, #tpu.memory_space<vmem>>, %arg5: memref<2x32xf32, #tpu.memory_space<vmem>>, %arg6: memref<8x32xf32, #tpu.memory_space<vmem>>, %arg7: memref<8x32xf32, #tpu.memory_space<vmem>>) attributes {dimension_semantics = [#tpu.dimension_semantics<arbitrary>], iteration_bounds = array<i64: 1>, scalar_prefetch = 0 : i64, scratch_operands = 2 : i64, tpu.core_type = #tpu.core_type<tc>, window_params = [{transform_indices = @transform_0, window_bounds = array<i64: 8, 1>}, {transform_indices = @transform_1, window_bounds = array<i64: 8, 32>}, {pipeline_mode = #tpu.pipeline_mode<synchronous>, transform_indices = @transform_2, window_bounds = array<i64: 2, 1>}, {pipeline_mode = #tpu.pipeline_mode<synchronous>, transform_indices = @transform_3, window_bounds = array<i64: 2, 32>}, {pipeline_mode = #tpu.pipeline_mode<synchronous>, transform_indices = @transform_4, window_bounds = array<i64: 2, 32>}]} {
    %c0_i32 = arith.constant 0 : i32
    %0 = arith.cmpi eq, %arg0, %c0_i32 : i32
    %1 = arith.extui %0 : i1 to i32
    %c0_i32_0 = arith.constant 0 : i32
    %2 = arith.cmpi ne, %1, %c0_i32_0 : i32
    scf.if %2 {
      %cst_21 = arith.constant -3.000000e+38 : f32
      %48 = vector.broadcast %cst_21 : f32 to vector<8x32xf32>
      %c0_22 = arith.constant 0 : index
      %c0_23 = arith.constant 0 : index
      %49 = vector.load %arg6[%c0_22, %c0_23] : memref<8x32xf32, #tpu.memory_space<vmem>>, vector<8x32xf32>
      tpu.vector_store %arg6[%c0_22, %c0_23], %48 {strides = array<i32>} : memref<8x32xf32, #tpu.memory_space<vmem>>, vector<8x32xf32>,
      %cst_24 = arith.constant 0.000000e+00 : f32
      %50 = vector.broadcast %cst_24 : f32 to vector<8x32xf32>
      %c0_25 = arith.constant 0 : index
      %c0_26 = arith.constant 0 : index
      %51 = vector.load %arg7[%c0_25, %c0_26] : memref<8x32xf32, #tpu.memory_space<vmem>>, vector<8x32xf32>
      tpu.vector_store %arg7[%c0_25, %c0_26], %50 {strides = array<i32>} : memref<8x32xf32, #tpu.memory_space<vmem>>, vector<8x32xf32>,
    } else {
    }
    %3 = tpu.iota {dimensions = array<i32: 0>} : vector<8x1xi32>
    %c8_i32 = arith.constant 8 : i32
    %4 = arith.muli %arg0, %c8_i32 : i32
    %5 = vector.broadcast %4 : i32 to vector<8x1xi32>
    %6 = arith.addi %3, %5 : vector<8x1xi32>
    %c8_i32_1 = arith.constant 8 : i32
    %7 = vector.broadcast %c8_i32_1 : i32 to vector<8x1xi32>
    %8 = arith.cmpi slt, %6, %7 : vector<8x1xi32>
    %c0 = arith.constant 0 : index
    %c0_2 = arith.constant 0 : index
    %9 = vector.load %arg2[%c0, %c0_2] : memref<8x32xf32, #tpu.memory_space<vmem>>, vector<8x32xf32>
    %cst = arith.constant 0.000000e+00 : f32
    %10 = vector.shape_cast %8 : vector<8x1xi1> to vector<8x1xi1>
    %11 = vector.broadcast %10 : vector<8x1xi1> to vector<8x32xi1>
    %12 = vector.broadcast %cst : f32 to vector<8x32xf32>
    %13 = arith.select %11, %9, %12 : vector<8x32xi1>, vector<8x32xf32>
    %c0_3 = arith.constant 0 : index
    %c0_4 = arith.constant 0 : index
    %14 = vector.load %arg1[%c0_3, %c0_4] : memref<8x1xi32, #tpu.memory_space<vmem>>, vector<8x1xi32>
    %15 = tpu.iota {dimensions = array<i32: 1>} : vector<8x8xi32>
    %16 = vector.broadcast %14 : vector<8x1xi32> to vector<8x8xi32>
    %17 = arith.cmpi eq, %16, %15 : vector<8x8xi32>
    %18 = vector.broadcast %8 : vector<8x1xi1> to vector<8x8xi1>
    %19 = arith.andi %17, %18 : vector<8x8xi1>
    %c0_5 = arith.constant 0 : index
    %c0_6 = arith.constant 0 : index
    %20 = vector.load %arg7[%c0_5, %c0_6] : memref<8x32xf32, #tpu.memory_space<vmem>>, vector<8x32xf32>
    %21 = arith.extui %19 : vector<8x8xi1> to vector<8x8xi32>
    %22 = arith.sitofp %21 : vector<8x8xi32> to vector<8x8xf32>
    %cst_7 = arith.constant dense<0.000000e+00> : vector<8x32xf32>
    %23 = tpu.matmul %22, %13, %cst_7 {dimension_numbers = #tpu.dot_dimension_numbers<[0], [0], [1], [1], [0, 1, 1, 1], [], []>} : vector<8x8xf32>, vector<8x32xf32>, vector<8x32xf32> -> vector<8x32xf32>
    %24 = arith.addf %20, %23 : vector<8x32xf32>
    %c0_8 = arith.constant 0 : index
    %c0_9 = arith.constant 0 : index
    %25 = vector.load %arg7[%c0_8, %c0_9] : memref<8x32xf32, #tpu.memory_space<vmem>>, vector<8x32xf32>
    tpu.vector_store %arg7[%c0_8, %c0_9], %24 {strides = array<i32>} : memref<8x32xf32, #tpu.memory_space<vmem>>, vector<8x32xf32>,
    %26 = vector.extract_strided_slice %19 {offsets = [0, 0], sizes = [8, 1], strides = [1, 1]} : vector<8x8xi1> to vector<8x1xi1>
    %cst_10 = arith.constant -3.000000e+38 : f32
    %27 = vector.shape_cast %26 : vector<8x1xi1> to vector<8x1xi1>
    %28 = vector.broadcast %27 : vector<8x1xi1> to vector<8x32xi1>
    %29 = vector.broadcast %cst_10 : f32 to vector<8x32xf32>
    %30 = arith.select %28, %13, %29 : vector<8x32xi1>, vector<8x32xf32>
    %cst_11 = arith.constant dense<0xFF800000> : vector<32xf32>
    %31 = vector.multi_reduction <maximumf>, %30, %cst_11 [0] : vector<8x32xf32> to vector<32xf32>
    %32 = vector.shape_cast %31 : vector<32xf32> to vector<1x32xf32>
    %33 = vector.extract_strided_slice %19 {offsets = [0, 1], sizes = [8, 1], strides = [1, 1]} : vector<8x8xi1> to vector<8x1xi1>
    %cst_12 = arith.constant -3.000000e+38 : f32
    %34 = vector.shape_cast %33 : vector<8x1xi1> to vector<8x1xi1>
    %35 = vector.broadcast %34 : vector<8x1xi1> to vector<8x32xi1>
    %36 = vector.broadcast %cst_12 : f32 to vector<8x32xf32>
    %37 = arith.select %35, %13, %36 : vector<8x32xi1>, vector<8x32xf32>
    %cst_13 = arith.constant dense<0xFF800000> : vector<32xf32>
    %38 = vector.multi_reduction <maximumf>, %37, %cst_13 [0] : vector<8x32xf32> to vector<32xf32>
    %39 = vector.shape_cast %38 : vector<32xf32> to vector<1x32xf32>
    %cst_14 = arith.constant -3.000000e+38 : f32
    %40 = vector.broadcast %cst_14 : f32 to vector<6x32xf32>
    %c0_15 = arith.constant 0 : index
    %c0_16 = arith.constant 0 : index
    %41 = vector.load %arg6[%c0_15, %c0_16] : memref<8x32xf32, #tpu.memory_space<vmem>>, vector<8x32xf32>
    %42 = tpu.concatenate %32, %39, %40 in 0 : vector<1x32xf32>, vector<1x32xf32>, vector<6x32xf32> -> vector<8x32xf32>
    %43 = arith.maximumf %41, %42 : vector<8x32xf32>
    %c0_17 = arith.constant 0 : index
    %c0_18 = arith.constant 0 : index
    %44 = vector.load %arg6[%c0_17, %c0_18] : memref<8x32xf32, #tpu.memory_space<vmem>>, vector<8x32xf32>
    tpu.vector_store %arg6[%c0_17, %c0_18], %43 {strides = array<i32>} : memref<8x32xf32, #tpu.memory_space<vmem>>, vector<8x32xf32>,
    %c0_i32_19 = arith.constant 0 : i32
    %45 = arith.cmpi eq, %arg0, %c0_i32_19 : i32
    %46 = arith.extui %45 : i1 to i32
    %c0_i32_20 = arith.constant 0 : i32
    %47 = arith.cmpi ne, %46, %c0_i32_20 : i32
    scf.if %47 {
      %c0_21 = arith.constant 0 : index
      %c0_22 = arith.constant 0 : index
      %48 = vector.load %arg6[%c0_21, %c0_22] : memref<8x32xf32, #tpu.memory_space<vmem>>, vector<2x32xf32>
      %c0_23 = arith.constant 0 : index
      %c0_24 = arith.constant 0 : index
      %49 = vector.load %arg4[%c0_23, %c0_24] : memref<2x32xf32, #tpu.memory_space<vmem>>, vector<2x32xf32>
      tpu.vector_store %arg4[%c0_23, %c0_24], %48 {strides = array<i32>} : memref<2x32xf32, #tpu.memory_space<vmem>>, vector<2x32xf32>,
      %c0_25 = arith.constant 0 : index
      %c0_26 = arith.constant 0 : index
      %50 = vector.load %arg7[%c0_25, %c0_26] : memref<8x32xf32, #tpu.memory_space<vmem>>, vector<2x32xf32>
      %c0_27 = arith.constant 0 : index
      %c0_28 = arith.constant 0 : index
      %51 = vector.load %arg3[%c0_27, %c0_28] : memref<2x1xf32, #tpu.memory_space<vmem>>, vector<2x1xf32>
      %52 = vector.broadcast %51 : vector<2x1xf32> to vector<2x32xf32>
      %53 = arith.mulf %50, %52 : vector<2x32xf32>
      %c0_29 = arith.constant 0 : index
      %c0_30 = arith.constant 0 : index
      %54 = vector.load %arg5[%c0_29, %c0_30] : memref<2x32xf32, #tpu.memory_space<vmem>>, vector<2x32xf32>
      tpu.vector_store %arg5[%c0_29, %c0_30], %53 {strides = array<i32>} : memref<2x32xf32, #tpu.memory_space<vmem>>, vector<2x32xf32>,
    } else {
    }
    return
  }
  func.func @transform_0(%arg0: i32) -> (i32, i32) {
    %c0_i32 = arith.constant 0 : i32
    %c0_i32_0 = arith.constant 0 : i32
    return %arg0, %c0_i32 : i32, i32
  }
  func.func @transform_1(%arg0: i32) -> (i32, i32) {
    %c0_i32 = arith.constant 0 : i32
    %c0_i32_0 = arith.constant 0 : i32
    return %arg0, %c0_i32 : i32, i32
  }
  func.func @transform_2(%arg0: i32) -> (i32, i32) {
    %c0_i32 = arith.constant 0 : i32
    %c0_i32_0 = arith.constant 0 : i32
    %c0_i32_1 = arith.constant 0 : i32
    return %c0_i32, %c0_i32_0 : i32, i32
  }
  func.func @transform_3(%arg0: i32) -> (i32, i32) {
    %c0_i32 = arith.constant 0 : i32
    %c0_i32_0 = arith.constant 0 : i32
    %c0_i32_1 = arith.constant 0 : i32
    return %c0_i32, %c0_i32_0 : i32, i32
  }
  func.func @transform_4(%arg0: i32) -> (i32, i32) {
    %c0_i32 = arith.constant 0 : i32
    %c0_i32_0 = arith.constant 0 : i32
    %c0_i32_1 = arith.constant 0 : i32
    return %c0_i32, %c0_i32_0 : i32, i32
  }
}

module attributes {stable_mosaic.version = 11 : i64} {
  func.func @_mlp_head_kernel(%arg0: i32, %arg1: memref<2x80xf32, #tpu.memory_space<vmem>>, %arg2: memref<80x64xf32, #tpu.memory_space<vmem>>, %arg3: memref<1x64xf32, #tpu.memory_space<vmem>>, %arg4: memref<1x64xf32, #tpu.memory_space<vmem>>, %arg5: memref<1x64xf32, #tpu.memory_space<vmem>>, %arg6: memref<64x64xf32, #tpu.memory_space<vmem>>, %arg7: memref<1x64xf32, #tpu.memory_space<vmem>>, %arg8: memref<1x64xf32, #tpu.memory_space<vmem>>, %arg9: memref<1x64xf32, #tpu.memory_space<vmem>>, %arg10: memref<64x1xf32, #tpu.memory_space<vmem>>, %arg11: memref<1x1xf32, #tpu.memory_space<vmem>>, %arg12: memref<2x1xf32, #tpu.memory_space<vmem>>) attributes {dimension_semantics = [#tpu.dimension_semantics<parallel>], iteration_bounds = array<i64: 1>, scalar_prefetch = 0 : i64, scratch_operands = 0 : i64, tpu.core_type = #tpu.core_type<tc>, window_params = [{pipeline_mode = #tpu.pipeline_mode<synchronous>, transform_indices = @transform_0, window_bounds = array<i64: 2, 80>}, {pipeline_mode = #tpu.pipeline_mode<synchronous>, transform_indices = @transform_1, window_bounds = array<i64: 80, 64>}, {pipeline_mode = #tpu.pipeline_mode<synchronous>, transform_indices = @transform_2, window_bounds = array<i64: 1, 64>}, {pipeline_mode = #tpu.pipeline_mode<synchronous>, transform_indices = @transform_3, window_bounds = array<i64: 1, 64>}, {pipeline_mode = #tpu.pipeline_mode<synchronous>, transform_indices = @transform_4, window_bounds = array<i64: 1, 64>}, {pipeline_mode = #tpu.pipeline_mode<synchronous>, transform_indices = @transform_5, window_bounds = array<i64: 64, 64>}, {pipeline_mode = #tpu.pipeline_mode<synchronous>, transform_indices = @transform_6, window_bounds = array<i64: 1, 64>}, {pipeline_mode = #tpu.pipeline_mode<synchronous>, transform_indices = @transform_7, window_bounds = array<i64: 1, 64>}, {pipeline_mode = #tpu.pipeline_mode<synchronous>, transform_indices = @transform_8, window_bounds = array<i64: 1, 64>}, {pipeline_mode = #tpu.pipeline_mode<synchronous>, transform_indices = @transform_9, window_bounds = array<i64: 64, 1>}, {pipeline_mode = #tpu.pipeline_mode<synchronous>, transform_indices = @transform_10, window_bounds = array<i64: 1, 1>}, {pipeline_mode = #tpu.pipeline_mode<synchronous>, transform_indices = @transform_11, window_bounds = array<i64: 2, 1>}]} {
    %c0 = arith.constant 0 : index
    %c0_0 = arith.constant 0 : index
    %0 = vector.load %arg1[%c0, %c0_0] : memref<2x80xf32, #tpu.memory_space<vmem>>, vector<2x80xf32>
    %c0_1 = arith.constant 0 : index
    %c0_2 = arith.constant 0 : index
    %1 = vector.load %arg2[%c0_1, %c0_2] : memref<80x64xf32, #tpu.memory_space<vmem>>, vector<80x64xf32>
    %cst = arith.constant dense<0.000000e+00> : vector<2x64xf32>
    %2 = tpu.matmul %0, %1, %cst {dimension_numbers = #tpu.dot_dimension_numbers<[1], [0], [0], [1], [0, 0, 1, 1], [], []>} : vector<2x80xf32>, vector<80x64xf32>, vector<2x64xf32> -> vector<2x64xf32>
    %c0_3 = arith.constant 0 : index
    %c0_4 = arith.constant 0 : index
    %3 = vector.load %arg3[%c0_3, %c0_4] : memref<1x64xf32, #tpu.memory_space<vmem>>, vector<1x64xf32>
    %4 = vector.broadcast %3 : vector<1x64xf32> to vector<2x64xf32>
    %5 = arith.addf %2, %4 : vector<2x64xf32>
    %c0_5 = arith.constant 0 : index
    %c0_6 = arith.constant 0 : index
    %6 = vector.load %arg4[%c0_5, %c0_6] : memref<1x64xf32, #tpu.memory_space<vmem>>, vector<1x64xf32>
    %7 = vector.broadcast %6 : vector<1x64xf32> to vector<2x64xf32>
    %8 = arith.mulf %5, %7 : vector<2x64xf32>
    %c0_7 = arith.constant 0 : index
    %c0_8 = arith.constant 0 : index
    %9 = vector.load %arg5[%c0_7, %c0_8] : memref<1x64xf32, #tpu.memory_space<vmem>>, vector<1x64xf32>
    %10 = vector.broadcast %9 : vector<1x64xf32> to vector<2x64xf32>
    %11 = arith.addf %8, %10 : vector<2x64xf32>
    %cst_9 = arith.constant 0.000000e+00 : f32
    %12 = vector.broadcast %cst_9 : f32 to vector<2x64xf32>
    %13 = arith.maximumf %11, %12 : vector<2x64xf32>
    %c0_10 = arith.constant 0 : index
    %c0_11 = arith.constant 0 : index
    %14 = vector.load %arg6[%c0_10, %c0_11] : memref<64x64xf32, #tpu.memory_space<vmem>>, vector<64x64xf32>
    %cst_12 = arith.constant dense<0.000000e+00> : vector<2x64xf32>
    %15 = tpu.matmul %13, %14, %cst_12 {dimension_numbers = #tpu.dot_dimension_numbers<[1], [0], [0], [1], [0, 0, 1, 1], [], []>} : vector<2x64xf32>, vector<64x64xf32>, vector<2x64xf32> -> vector<2x64xf32>
    %c0_13 = arith.constant 0 : index
    %c0_14 = arith.constant 0 : index
    %16 = vector.load %arg7[%c0_13, %c0_14] : memref<1x64xf32, #tpu.memory_space<vmem>>, vector<1x64xf32>
    %17 = vector.broadcast %16 : vector<1x64xf32> to vector<2x64xf32>
    %18 = arith.addf %15, %17 : vector<2x64xf32>
    %c0_15 = arith.constant 0 : index
    %c0_16 = arith.constant 0 : index
    %19 = vector.load %arg8[%c0_15, %c0_16] : memref<1x64xf32, #tpu.memory_space<vmem>>, vector<1x64xf32>
    %20 = vector.broadcast %19 : vector<1x64xf32> to vector<2x64xf32>
    %21 = arith.mulf %18, %20 : vector<2x64xf32>
    %c0_17 = arith.constant 0 : index
    %c0_18 = arith.constant 0 : index
    %22 = vector.load %arg9[%c0_17, %c0_18] : memref<1x64xf32, #tpu.memory_space<vmem>>, vector<1x64xf32>
    %23 = vector.broadcast %22 : vector<1x64xf32> to vector<2x64xf32>
    %24 = arith.addf %21, %23 : vector<2x64xf32>
    %cst_19 = arith.constant 0.000000e+00 : f32
    %25 = vector.broadcast %cst_19 : f32 to vector<2x64xf32>
    %26 = arith.maximumf %24, %25 : vector<2x64xf32>
    %c0_20 = arith.constant 0 : index
    %c0_21 = arith.constant 0 : index
    %27 = vector.load %arg10[%c0_20, %c0_21] : memref<64x1xf32, #tpu.memory_space<vmem>>, vector<64x1xf32>
    %cst_22 = arith.constant dense<0.000000e+00> : vector<2x1xf32>
    %28 = tpu.matmul %26, %27, %cst_22 {dimension_numbers = #tpu.dot_dimension_numbers<[1], [0], [0], [1], [0, 0, 1, 1], [], []>} : vector<2x64xf32>, vector<64x1xf32>, vector<2x1xf32> -> vector<2x1xf32>
    %c0_23 = arith.constant 0 : index
    %c0_24 = arith.constant 0 : index
    %29 = vector.load %arg11[%c0_23, %c0_24] : memref<1x1xf32, #tpu.memory_space<vmem>>, vector<1x1xf32>
    %30 = vector.broadcast %29 : vector<1x1xf32> to vector<2x1xf32>
    %31 = arith.addf %28, %30 : vector<2x1xf32>
    %32 = arith.negf %31 : vector<2x1xf32>
    %33 = math.exp %32 : vector<2x1xf32>
    %cst_25 = arith.constant 1.000000e+00 : f32
    %34 = vector.broadcast %cst_25 : f32 to vector<2x1xf32>
    %35 = arith.addf %34, %33 : vector<2x1xf32>
    %36 = arith.divf %34, %35 : vector<2x1xf32>
    %c0_26 = arith.constant 0 : index
    %c0_27 = arith.constant 0 : index
    %37 = vector.load %arg12[%c0_26, %c0_27] : memref<2x1xf32, #tpu.memory_space<vmem>>, vector<2x1xf32>
    tpu.vector_store %arg12[%c0_26, %c0_27], %36 {strides = array<i32>} : memref<2x1xf32, #tpu.memory_space<vmem>>, vector<2x1xf32>,
    return
  }
  func.func @transform_0(%arg0: i32) -> (i32, i32) {
    %c0_i32 = arith.constant 0 : i32
    %c0_i32_0 = arith.constant 0 : i32
    %c0_i32_1 = arith.constant 0 : i32
    return %c0_i32, %c0_i32_0 : i32, i32
  }
  func.func @transform_1(%arg0: i32) -> (i32, i32) {
    %c0_i32 = arith.constant 0 : i32
    %c0_i32_0 = arith.constant 0 : i32
    %c0_i32_1 = arith.constant 0 : i32
    return %c0_i32, %c0_i32_0 : i32, i32
  }
  func.func @transform_2(%arg0: i32) -> (i32, i32) {
    %c0_i32 = arith.constant 0 : i32
    %c0_i32_0 = arith.constant 0 : i32
    %c0_i32_1 = arith.constant 0 : i32
    return %c0_i32, %c0_i32_0 : i32, i32
  }
  func.func @transform_3(%arg0: i32) -> (i32, i32) {
    %c0_i32 = arith.constant 0 : i32
    %c0_i32_0 = arith.constant 0 : i32
    %c0_i32_1 = arith.constant 0 : i32
    return %c0_i32, %c0_i32_0 : i32, i32
  }
  func.func @transform_4(%arg0: i32) -> (i32, i32) {
    %c0_i32 = arith.constant 0 : i32
    %c0_i32_0 = arith.constant 0 : i32
    %c0_i32_1 = arith.constant 0 : i32
    return %c0_i32, %c0_i32_0 : i32, i32
  }
  func.func @transform_5(%arg0: i32) -> (i32, i32) {
    %c0_i32 = arith.constant 0 : i32
    %c0_i32_0 = arith.constant 0 : i32
    %c0_i32_1 = arith.constant 0 : i32
    return %c0_i32, %c0_i32_0 : i32, i32
  }
  func.func @transform_6(%arg0: i32) -> (i32, i32) {
    %c0_i32 = arith.constant 0 : i32
    %c0_i32_0 = arith.constant 0 : i32
    %c0_i32_1 = arith.constant 0 : i32
    return %c0_i32, %c0_i32_0 : i32, i32
  }
  func.func @transform_7(%arg0: i32) -> (i32, i32) {
    %c0_i32 = arith.constant 0 : i32
    %c0_i32_0 = arith.constant 0 : i32
    %c0_i32_1 = arith.constant 0 : i32
    return %c0_i32, %c0_i32_0 : i32, i32
  }
  func.func @transform_8(%arg0: i32) -> (i32, i32) {
    %c0_i32 = arith.constant 0 : i32
    %c0_i32_0 = arith.constant 0 : i32
    %c0_i32_1 = arith.constant 0 : i32
    return %c0_i32, %c0_i32_0 : i32, i32
  }
  func.func @transform_9(%arg0: i32) -> (i32, i32) {
    %c0_i32 = arith.constant 0 : i32
    %c0_i32_0 = arith.constant 0 : i32
    %c0_i32_1 = arith.constant 0 : i32
    return %c0_i32, %c0_i32_0 : i32, i32
  }
  func.func @transform_10(%arg0: i32) -> (i32, i32) {
    %c0_i32 = arith.constant 0 : i32
    %c0_i32_0 = arith.constant 0 : i32
    %c0_i32_1 = arith.constant 0 : i32
    return %c0_i32, %c0_i32_0 : i32, i32
  }
  func.func @transform_11(%arg0: i32) -> (i32, i32) {
    %c0_i32 = arith.constant 0 : i32
    %c0_i32_0 = arith.constant 0 : i32
    %c0_i32_1 = arith.constant 0 : i32
    return %c0_i32, %c0_i32_0 : i32, i32
  }
}

</mosaic_0001>

<llo_original>
// kernel: model_forward.13
$region0: #{model_forward.13}
  #allocation0 [shape = 'u32[]', space=smem, size = 0x4, offset = 0x4, fixed_abs, tag = 'smem constant byte address 0x4 - core index']
  #allocation1 [shape = 'u32[144,128]{1,0:T(1,128)}', space=vmem, size = 0x12000, scoped, tag = 'internal scratch']
  %s0 = inlined_call_operand.hbm [shape: f32[16,32], index: 0, kind: input, shape index: {}]
  %s1 = inlined_call_operand.hbm [shape: f32[32,512], index: 1, kind: input, shape index: {}]
  %s2 = inlined_call_operand.hbm [shape: f32[1,512], index: 2, kind: input, shape index: {}]
  %s3 = inlined_call_operand.hbm [shape: f32[16,128], index: 3, kind: output, shape index: {0}]
  %s4 = inlined_call_operand.hbm [shape: f32[16,128], index: 4, kind: output, shape index: {1}]
  %s5 = inlined_call_operand.hbm [shape: f32[16,128], index: 5, kind: output, shape index: {2}]
  %s6 = inlined_call_operand.hbm [shape: f32[16,128], index: 6, kind: output, shape index: {3}]
  %7 = xla_tuple %s3, %s4, %s5, %s6
  %s8 = sld [smem:[#allocation0]]
  $region58: #{model_forward.13} parent=0
    _
  %s10 = ssub.s32 1, %s8
  %s11 = scalar_select 0, %s10, %s8
  $region1: #{model_forward.13} parent=0
    #allocation2 [shape = 'u8[8192]{0}', space=vmem, size = 0x2000, scoped, tag = 'input window, operand 0, single buffered']
    #allocation3 [shape = 's32[1]{0}', space=sflag, size = 0x4, scoped, tag = 'scoped memory for model_forward.13']
    #allocation4 [shape = 's32[1]{0}', space=sflag, size = 0x4, scoped, tag = 'scoped memory for model_forward.13']
    #allocation5 [shape = 'u8[65536]{0}', space=vmem, size = 0x10000, scoped, tag = 'input window, operand 1, single buffered']
    #allocation6 [shape = 's32[1]{0}', space=sflag, size = 0x4, scoped, tag = 'scoped memory for model_forward.13']
    #allocation7 [shape = 'u8[2048]{0}', space=vmem, size = 0x800, scoped, tag = 'input window, operand 2, single buffered']
    #allocation8 [shape = 'u8[8192]{0}', space=vmem, size = 0x2000, scoped, tag = 'output window, operand 0, single buffered']
    #allocation9 [shape = 'u8[8192]{0}', space=vmem, size = 0x2000, scoped, tag = 'output window, operand 1, single buffered']
    #allocation10 [shape = 's32[1]{0}', space=sflag, size = 0x4, scoped, tag = 'scoped memory for model_forward.13']
    #allocation11 [shape = 'u8[8192]{0}', space=vmem, size = 0x2000, scoped, tag = 'output window, operand 2, single buffered']
    #allocation12 [shape = 'u8[8192]{0}', space=vmem, size = 0x2000, scoped, tag = 'output window, operand 3, single buffered']
    #allocation13 [shape = 's32[1]{0}', space=sflag, size = 0x4, scoped, tag = 'scoped memory for model_forward.13']
    %12 = vsyncpa [#allocation3], 0
    %13 = vsyncpa [#allocation6], 0
    %14 = vsyncpa [#allocation4], 0
    %15 = vsyncpa [#allocation10], 0
    %16 = vsyncpa [#allocation13], 0
    // Predicated region
    $region2: #{model_forward.13} parent=1 // pred_check
      _
    $region3: #{model_forward.13} parent=1 // pred_check_branch
      %18 = sbr.rel (0) target = $region5
    $region4: #{model_forward.13} parent=1 // pred_region
      %s20 = ssub.s32 256, 256
      %21 = vsyncadd [#allocation3], %s20
      %s22 = sshll.u32 [#allocation2], 4
      %s23 = int_to_ptr.vmem [resolvable:$true] %s22
      %28 = dma.hbm_to_vmem [thread:$0]  %s0, 256, %s23, [#allocation3], 128, 128, 8
    $region5: #{model_forward.13} parent=1 // pred_fallthru
      _
    // Predicated region
    $region6: #{model_forward.13} parent=1 // pred_check
      _
    $region7: #{model_forward.13} parent=1 // pred_check_branch
      %30 = sbr.rel (0) target = $region9
    $region8: #{model_forward.13} parent=1 // pred_region
      %s32 = ssub.s32 2048, 2048
      %33 = vsyncadd [#allocation6], %s32
      %s34 = sshll.u32 [#allocation5], 4
      %s35 = int_to_ptr.vmem [resolvable:$true] %s34
      %40 = dma.hbm_to_vmem [thread:$0]  %s1, 2048, %s35, [#allocation6], 512, 512, 32
    $region9: #{model_forward.13} parent=1 // pred_fallthru
      _
    // Predicated region
    $region10: #{model_forward.13} parent=1 // pred_check
      _
    $region11: #{model_forward.13} parent=1 // pred_check_branch
      %42 = sbr.rel (0) target = $region13
    $region12: #{model_forward.13} parent=1 // pred_region
      %s44 = ssub.s32 64, 64
      %45 = vsyncadd [#allocation6], %s44
      %s47 = sshll.u32 [#allocation7], 4
      %s48 = int_to_ptr.vmem [resolvable:$true] %s47
      %50 = dma.hbm_to_vmem [thread:$0]  %s2, 64, %s48, [#allocation6]
    $region13: #{model_forward.13} parent=1 // pred_fallthru
      _
    // Predicated region
    $region14: #{model_forward.13} parent=1 // pred_check
      _
    $region15: #{model_forward.13} parent=1 // pred_check_branch
      %52 = sbr.rel (0) target = $region17
    $region16: #{model_forward.13} parent=1 // pred_region
      %53 = dma.done [#allocation3], 256
    $region17: #{model_forward.13} parent=1 // pred_fallthru
      _
    // Predicated region
    $region18: #{model_forward.13} parent=1 // pred_check
      _
    $region19: #{model_forward.13} parent=1 // pred_check_branch
      %55 = sbr.rel (0) target = $region21
    $region20: #{model_forward.13} parent=1 // pred_region
      %56 = dma.done [#allocation6], 2048
    $region21: #{model_forward.13} parent=1 // pred_fallthru
      _
    // Predicated region
    $region22: #{model_forward.13} parent=1 // pred_check
      _
    $region23: #{model_forward.13} parent=1 // pred_check_branch
      %58 = sbr.rel (0) target = $region25
    $region24: #{model_forward.13} parent=1 // pred_region
      %59 = dma.done [#allocation6], 64
    $region25: #{model_forward.13} parent=1 // pred_fallthru
      _
    %v60 = vld [vmem:[#allocation2] sm:$0xff]
    %v61 = vld [vmem:[#allocation2 + $0x8] sm:$0xff]
    %v62 = vld [vmem:[#allocation5] sm:$0xff]
    %v63 = vld [vmem:[#allocation5 + $0x8] sm:$0xff]
    %v64 = vld [vmem:[#allocation5 + $0x10] sm:$0xff]
    %v65 = vld [vmem:[#allocation5 + $0x18] sm:$0xff]
    %v66 = vld [vmem:[#allocation5 + $0x20] sm:$0xff]
    %v67 = vld [vmem:[#allocation5 + $0x28] sm:$0xff]
    %v68 = vld [vmem:[#allocation5 + $0x30] sm:$0xff]
    %v69 = vld [vmem:[#allocation5 + $0x38] sm:$0xff]
    %v70 = vld [vmem:[#allocation5 + $0x40] sm:$0xff]
    %v71 = vld [vmem:[#allocation5 + $0x48] sm:$0xff]
    %v72 = vld [vmem:[#allocation5 + $0x50] sm:$0xff]
    %v73 = vld [vmem:[#allocation5 + $0x58] sm:$0xff]
    %v74 = vld [vmem:[#allocation5 + $0x60] sm:$0xff]
    %v75 = vld [vmem:[#allocation5 + $0x68] sm:$0xff]
    %v76 = vld [vmem:[#allocation5 + $0x70] sm:$0xff]
    %v77 = vld [vmem:[#allocation5 + $0x78] sm:$0xff]
    %v78 = vld [vmem:[#allocation7] sm:$0xf]
    %v80 = vlaneseq
    %v81 = vshrl.u32 %v80, 7
    %v82 = vsub.s32 0, %v81
    %v83 = vrot.slane %v78, %v82
    %v84 = vlaneseq
    %v85 = vshrl.u32 %v84, 7
    %v86 = vsub.s32 1, %v85
    %v87 = vrot.slane %v78, %v86
    %v88 = vlaneseq
    %v89 = vshrl.u32 %v88, 7
    %v90 = vsub.s32 2, %v89
    %v91 = vrot.slane %v78, %v90
    %v92 = vlaneseq
    %v93 = vshrl.u32 %v92, 7
    %v94 = vsub.s32 3, %v93
    %v95 = vrot.slane %v78, %v94
    %vm100 = vcmask 261120
    %v102 = vsel %vm100, %v60, 0
    %v105 = vsel %vm100, %v61, 0
    %107 = vmatprep.subr.mxu0 %v63
    %108 = vmatpush1.msra.mxu0 %v62
    %109 = vmatprep.subr.mxu0 %v67
    %110 = vmatpush1.msra.mxu0 %v66
    %111 = vmatprep.subr.mxu0 %v71
    %112 = vmatpush1.msra.mxu0 %v70
    %113 = vmatprep.subr.mxu0 %v75
    %114 = vmatpush1.msra.mxu0 %v74
    %115 = vmatprep.subr.mxu0 0.0
    %116 = vmatpush1.msra.mxu0 0.0
    %117 = vmatprep.subr.mxu0 0.0
    %118 = vmatpush1.msra.mxu0 0.0
    %119 = vmatprep.subr.mxu0 0.0
    %120 = vmatpush1.msra.mxu0 0.0
    %121 = vmatprep.subr.mxu0 0.0
    %122 = vmatpush1.msra.mxu0 0.0
    %123 = vmatprep.subr.mxu0 0.0
    %124 = vmatpush1.msra.mxu0 0.0
    %125 = vmatprep.subr.mxu0 0.0
    %126 = vmatpush1.msra.mxu0 0.0
    %127 = vmatprep.subr.mxu0 0.0
    %128 = vmatpush1.msra.mxu0 0.0
    %129 = vmatprep.subr.mxu0 0.0
    %130 = vmatpush1.msra.mxu0 0.0
    %131 = vmatprep.subr.mxu0 0.0
    %132 = vmatpush1.msra.mxu0 0.0
    %133 = vmatprep.subr.mxu0 0.0
    %134 = vmatpush1.msra.mxu0 0.0
    %135 = vmatprep.subr.mxu0 0.0
    %136 = vmatpush1.msra.mxu0 0.0
    %137 = vmatprep.subr.mxu0 0.0
    %138 = vmatpush1.msra.mxu0 0.0
    %139 = vmatprep.subr.mxu0 0.0
    %140 = vmatpush1.msra.mxu0 0.0
    %141 = vmatprep.subr.mxu0 0.0
    %142 = vmatpush1.msra.mxu0 0.0
    %143 = vmatprep.subr.mxu0 0.0
    %144 = vmatpush1.msra.mxu0 0.0
    %145 = vmatprep.subr.mxu0 0.0
    %146 = vmatpush1.msra.mxu0 0.0
    %147 = vmatprep.subr.mxu0 0.0
    %148 = vmatpush1.msra.mxu0 0.0
    %149 = vmatprep.subr.mxu0 0.0
    %150 = vmatpush1.msra.mxu0 0.0
    %151 = vmatprep.subr.mxu0 0.0
    %152 = vmatpush1.msra.mxu0 0.0
    %153 = vmatprep.subr.mxu0 0.0
    %154 = vmatpush1.msra.mxu0 0.0
    %155 = vmatprep.subr.mxu0 0.0
    %156 = vmatpush1.msra.mxu0 0.0
    %157 = vmatprep.subr.mxu0 0.0
    %158 = vmatpush1.msra.mxu0 0.0
    %159 = vmatprep.subr.mxu0 0.0
    %160 = vmatpush1.msra.mxu0 0.0
    %161 = vmatprep.subr.mxu0 0.0
    %162 = vmatpush1.msra.mxu0 0.0
    %163 = vmatprep.subr.mxu0 0.0
    %164 = vmatpush1.msra.mxu0 0.0
    %165 = vmatprep.subr.mxu0 0.0
    %166 = vmatpush1.msra.mxu0 0.0
    %167 = vmatprep.subr.mxu0 0.0
    %168 = vmatpush1.msra.mxu0 0.0
    %169 = vmatprep.subr.mxu0 0.0
    %170 = vmatpush1.msra.mxu0 0.0
    %171 = vmatprep.mubr.f32.mxu0 0.0
    %172 = vmatmul.mubr.f32.gmra.mrb[0].mxu0 %v102
    %v173 = vpop.f32.mrb[0].mxu0
    %v174 = vadd.f32 %v83, %v173
    %v175 = vpop.f32.mrb[0].mxu0
    %v176 = vadd.f32 %v87, %v175
    %177 = vmatprep.mubr.f32.mxu0 0.0
    %178 = vmatmul.mubr.f32.gmra.mrb[0].mxu0 %v105
    %v179 = vpop.f32.mrb[0].mxu0
    %v180 = vadd.f32 %v83, %v179
    %v181 = vpop.f32.mrb[0].mxu0
    %v182 = vadd.f32 %v87, %v181
    %183 = vdwg.mxu0
    %184 = vmatprep.subr.mxu0 %v65
    %185 = vmatpush1.msra.mxu0 %v64
    %186 = vmatprep.subr.mxu0 %v69
    %187 = vmatpush1.msra.mxu0 %v68
    %188 = vmatprep.subr.mxu0 %v73
    %189 = vmatpush1.msra.mxu0 %v72
    %190 = vmatprep.subr.mxu0 %v77
    %191 = vmatpush1.msra.mxu0 %v76
    %192 = vmatprep.subr.mxu0 0.0
    %193 = vmatpush1.msra.mxu0 0.0
    %194 = vmatprep.subr.mxu0 0.0
    %195 = vmatpush1.msra.mxu0 0.0
    %196 = vmatprep.subr.mxu0 0.0
    %197 = vmatpush1.msra.mxu0 0.0
    %198 = vmatprep.subr.mxu0 0.0
    %199 = vmatpush1.msra.mxu0 0.0
    %200 = vmatprep.subr.mxu0 0.0
    %201 = vmatpush1.msra.mxu0 0.0
    %202 = vmatprep.subr.mxu0 0.0
    %203 = vmatpush1.msra.mxu0 0.0
    %204 = vmatprep.subr.mxu0 0.0
    %205 = vmatpush1.msra.mxu0 0.0
    %206 = vmatprep.subr.mxu0 0.0
    %207 = vmatpush1.msra.mxu0 0.0
    %208 = vmatprep.subr.mxu0 0.0
    %209 = vmatpush1.msra.mxu0 0.0
    %210 = vmatprep.subr.mxu0 0.0
    %211 = vmatpush1.msra.mxu0 0.0
    %212 = vmatprep.subr.mxu0 0.0
    %213 = vmatpush1.msra.mxu0 0.0
    %214 = vmatprep.subr.mxu0 0.0
    %215 = vmatpush1.msra.mxu0 0.0
    %216 = vmatprep.subr.mxu0 0.0
    %217 = vmatpush1.msra.mxu0 0.0
    %218 = vmatprep.subr.mxu0 0.0
    %219 = vmatpush1.msra.mxu0 0.0
    %220 = vmatprep.subr.mxu0 0.0
    %221 = vmatpush1.msra.mxu0 0.0
    %222 = vmatprep.subr.mxu0 0.0
    %223 = vmatpush1.msra.mxu0 0.0
    %224 = vmatprep.subr.mxu0 0.0
    %225 = vmatpush1.msra.mxu0 0.0
    %226 = vmatprep.subr.mxu0 0.0
    %227 = vmatpush1.msra.mxu0 0.0
    %228 = vmatprep.subr.mxu0 0.0
    %229 = vmatpush1.msra.mxu0 0.0
    %230 = vmatprep.subr.mxu0 0.0
    %231 = vmatpush1.msra.mxu0 0.0
    %232 = vmatprep.subr.mxu0 0.0
    %233 = vmatpush1.msra.mxu0 0.0
    %234 = vmatprep.subr.mxu0 0.0
    %235 = vmatpush1.msra.mxu0 0.0
    %236 = vmatprep.subr.mxu0 0.0
    %237 = vmatpush1.msra.mxu0 0.0
    %238 = vmatprep.subr.mxu0 0.0
    %239 = vmatpush1.msra.mxu0 0.0
    %240 = vmatprep.subr.mxu0 0.0
    %241 = vmatpush1.msra.mxu0 0.0
    %242 = vmatprep.subr.mxu0 0.0
    %243 = vmatpush1.msra.mxu0 0.0
    %244 = vmatprep.subr.mxu0 0.0
    %245 = vmatpush1.msra.mxu0 0.0
    %246 = vmatprep.subr.mxu0 0.0
    %247 = vmatpush1.msra.mxu0 0.0
    %248 = vmatprep.mubr.f32.mxu0 0.0
    %249 = vmatmul.mubr.f32.gmra.mrb[0].mxu0 %v102
    %v250 = vpop.f32.mrb[0].mxu0
    %v251 = vadd.f32 %v91, %v250
    %v252 = vpop.f32.mrb[0].mxu0
    %v253 = vadd.f32 %v95, %v252
    %254 = vmatprep.mubr.f32.mxu0 0.0
    %255 = vmatmul.mubr.f32.gmra.mrb[0].mxu0 %v105
    %v256 = vpop.f32.mrb[0].mxu0
    %v257 = vadd.f32 %v91, %v256
    %v258 = vpop.f32.mrb[0].mxu0
    %v259 = vadd.f32 %v95, %v258
    %260 = vdwg.mxu0
    %261 = vst [vmem:[#allocation8] sm:$0xff] %v174
    %262 = vst [vmem:[#allocation8 + $0x8] sm:$0xff] %v180
    %263 = vst [vmem:[#allocation9] sm:$0xff] %v176
    %264 = vst [vmem:[#allocation9 + $0x8] sm:$0xff] %v182
    %265 = vst [vmem:[#allocation11] sm:$0xff] %v251
    %266 = vst [vmem:[#allocation11 + $0x8] sm:$0xff] %v257
    %267 = vst [vmem:[#allocation12] sm:$0xff] %v253
    %268 = vst [vmem:[#allocation12 + $0x8] sm:$0xff] %v259
    // Predicated region
    $region26: #{model_forward.13} parent=1 // pred_check
      _
    $region27: #{model_forward.13} parent=1 // pred_check_branch
      %270 = sbr.rel (0) target = $region29
    $region28: #{model_forward.13} parent=1 // pred_region
      %s272 = ssub.s32 256, 256
      %273 = vsyncadd [#allocation4], %s272
      %s274 = sshll.u32 [#allocation8], 4
      %s275 = int_to_ptr.vmem [resolvable:$true] %s274
      %280 = dma.vmem_to_hbm [thread:$0]  %s275, 256, %s3, [#allocation4], 128, 128, 8
    $region29: #{model_forward.13} parent=1 // pred_fallthru
      _
    // Predicated region
    $region30: #{model_forward.13} parent=1 // pred_check
      _
    $region31: #{model_forward.13} parent=1 // pred_check_branch
      %282 = sbr.rel (0) target = $region33
    $region32: #{model_forward.13} parent=1 // pred_region
      %s284 = ssub.s32 256, 256
      %285 = vsyncadd [#allocation10], %s284
      %s286 = sshll.u32 [#allocation9], 4
      %s287 = int_to_ptr.vmem [resolvable:$true] %s286
      %292 = dma.vmem_to_hbm [thread:$0]  %s287, 256, %s4, [#allocation10], 128, 128, 8
    $region33: #{model_forward.13} parent=1 // pred_fallthru
      _
    // Predicated region
    $region34: #{model_forward.13} parent=1 // pred_check
      _
    $region35: #{model_forward.13} parent=1 // pred_check_branch
      %294 = sbr.rel (0) target = $region37
    $region36: #{model_forward.13} parent=1 // pred_region
      %s296 = ssub.s32 256, 256
      %297 = vsyncadd [#allocation10], %s296
      %s298 = sshll.u32 [#allocation11], 4
      %s299 = int_to_ptr.vmem [resolvable:$true] %s298
      %304 = dma.vmem_to_hbm [thread:$0]  %s299, 256, %s5, [#allocation10], 128, 128, 8
    $region37: #{model_forward.13} parent=1 // pred_fallthru
      _
    // Predicated region
    $region38: #{model_forward.13} parent=1 // pred_check
      _
    $region39: #{model_forward.13} parent=1 // pred_check_branch
      %306 = sbr.rel (0) target = $region41
    $region40: #{model_forward.13} parent=1 // pred_region
      %s308 = ssub.s32 256, 256
      %309 = vsyncadd [#allocation13], %s308
      %s310 = sshll.u32 [#allocation12], 4
      %s311 = int_to_ptr.vmem [resolvable:$true] %s310
      %316 = dma.vmem_to_hbm [thread:$0]  %s311, 256, %s6, [#allocation13], 128, 128, 8
    $region41: #{model_forward.13} parent=1 // pred_fallthru
      _
    // Predicated region
    $region42: #{model_forward.13} parent=1 // pred_check
      _
    $region43: #{model_forward.13} parent=1 // pred_check_branch
      %318 = sbr.rel (0) target = $region45
    $region44: #{model_forward.13} parent=1 // pred_region
      %319 = dma.done [#allocation4], 256
    $region45: #{model_forward.13} parent=1 // pred_fallthru
      _
    // Predicated region
    $region46: #{model_forward.13} parent=1 // pred_check
      _
    $region47: #{model_forward.13} parent=1 // pred_check_branch
      %321 = sbr.rel (0) target = $region49
    $region48: #{model_forward.13} parent=1 // pred_region
      %322 = dma.done [#allocation10], 256
    $region49: #{model_forward.13} parent=1 // pred_fallthru
      _
    // Predicated region
    $region50: #{model_forward.13} parent=1 // pred_check
      _
    $region51: #{model_forward.13} parent=1 // pred_check_branch
      %324 = sbr.rel (0) target = $region53
    $region52: #{model_forward.13} parent=1 // pred_region
      %325 = dma.done [#allocation10], 256
    $region53: #{model_forward.13} parent=1 // pred_fallthru
      _
    // Predicated region
    $region54: #{model_forward.13} parent=1 // pred_check
      _
    $region55: #{model_forward.13} parent=1 // pred_check_branch
      %327 = sbr.rel (0) target = $region57
    $region56: #{model_forward.13} parent=1 // pred_region
      %328 = dma.done [#allocation13], 256
    $region57: #{model_forward.13} parent=1 // pred_fallthru
      _
    %329 = vsyncpa [#allocation3], 1
    %330 = vsyncpa [#allocation6], 1
    %331 = vsyncpa [#allocation4], 1
    %332 = vsyncpa [#allocation10], 1
    %333 = vsyncpa [#allocation13], 1

// kernel: model_forward.12
$region0: #{model_forward.12}
  #allocation0 [shape = 'u32[]', space=smem, size = 0x4, offset = 0x4, fixed_abs, tag = 'smem constant byte address 0x4 - core index']
  #allocation1 [shape = 'u32[144,128]{1,0:T(1,128)}', space=vmem, size = 0x12000, scoped, tag = 'internal scratch']
  %s0 = inlined_call_operand.hbm [shape: f32[40,8], index: 0, kind: input, shape index: {}]
  %s1 = inlined_call_operand.hbm [shape: f32[8,512], index: 1, kind: input, shape index: {}]
  %s2 = inlined_call_operand.hbm [shape: f32[1,512], index: 2, kind: input, shape index: {}]
  %s3 = inlined_call_operand.hbm [shape: f32[40,512], index: 3, kind: output, shape index: {}]
  %s4 = sld [smem:[#allocation0]]
  $region34: #{model_forward.12} parent=0
    _
  %s6 = ssub.s32 1, %s4
  %s7 = scalar_select 0, %s6, %s4
  $region1: #{model_forward.12} parent=0
    #allocation2 [shape = 'u8[20480]{0}', space=vmem, size = 0x5000, scoped, tag = 'input window, operand 0, single buffered']
    #allocation3 [shape = 's32[1]{0}', space=sflag, size = 0x4, scoped, tag = 'scoped memory for model_forward.12']
    #allocation4 [shape = 's32[1]{0}', space=sflag, size = 0x4, scoped, tag = 'scoped memory for model_forward.12']
    #allocation5 [shape = 'u8[16384]{0}', space=vmem, size = 0x4000, scoped, tag = 'input window, operand 1, single buffered']
    #allocation6 [shape = 's32[1]{0}', space=sflag, size = 0x4, scoped, tag = 'scoped memory for model_forward.12']
    #allocation7 [shape = 'u8[2048]{0}', space=vmem, size = 0x800, scoped, tag = 'input window, operand 2, single buffered']
    #allocation8 [shape = 'u8[81920]{0}', space=vmem, size = 0x14000, scoped, tag = 'output window, operand 0, single buffered']
    %8 = vsyncpa [#allocation3], 0
    %9 = vsyncpa [#allocation6], 0
    %10 = vsyncpa [#allocation4], 0
    // Predicated region
    $region2: #{model_forward.12} parent=1 // pred_check
      _
    $region3: #{model_forward.12} parent=1 // pred_check_branch
      %12 = sbr.rel (0) target = $region5
    $region4: #{model_forward.12} parent=1 // pred_region
      %s14 = ssub.s32 640, 640
      %15 = vsyncadd [#allocation3], %s14
      %s16 = sshll.u32 [#allocation2], 4
      %s17 = int_to_ptr.vmem [resolvable:$true] %s16
      %22 = dma.hbm_to_vmem [thread:$0]  %s0, 640, %s17, [#allocation3], 128, 128, 8
    $region5: #{model_forward.12} parent=1 // pred_fallthru
      _
    // Predicated region
    $region6: #{model_forward.12} parent=1 // pred_check
      _
    $region7: #{model_forward.12} parent=1 // pred_check_branch
      %24 = sbr.rel (0) target = $region9
    $region8: #{model_forward.12} parent=1 // pred_region
      %s26 = ssub.s32 512, 512
      %27 = vsyncadd [#allocation6], %s26
      %s29 = sshll.u32 [#allocation5], 4
      %s30 = int_to_ptr.vmem [resolvable:$true] %s29
      %32 = dma.hbm_to_vmem [thread:$0]  %s1, 512, %s30, [#allocation6]
    $region9: #{model_forward.12} parent=1 // pred_fallthru
      _
    // Predicated region
    $region10: #{model_forward.12} parent=1 // pred_check
      _
    $region11: #{model_forward.12} parent=1 // pred_check_branch
      %34 = sbr.rel (0) target = $region13
    $region12: #{model_forward.12} parent=1 // pred_region
      %s36 = ssub.s32 64, 64
      %37 = vsyncadd [#allocation6], %s36
      %s39 = sshll.u32 [#allocation7], 4
      %s40 = int_to_ptr.vmem [resolvable:$true] %s39
      %42 = dma.hbm_to_vmem [thread:$0]  %s2, 64, %s40, [#allocation6]
    $region13: #{model_forward.12} parent=1 // pred_fallthru
      _
    // Predicated region
    $region14: #{model_forward.12} parent=1 // pred_check
      _
    $region15: #{model_forward.12} parent=1 // pred_check_branch
      %44 = sbr.rel (0) target = $region17
    $region16: #{model_forward.12} parent=1 // pred_region
      %45 = dma.done [#allocation3], 640
    $region17: #{model_forward.12} parent=1 // pred_fallthru
      _
    // Predicated region
    $region18: #{model_forward.12} parent=1 // pred_check
      _
    $region19: #{model_forward.12} parent=1 // pred_check_branch
      %47 = sbr.rel (0) target = $region21
    $region20: #{model_forward.12} parent=1 // pred_region
      %48 = dma.done [#allocation6], 512
    $region21: #{model_forward.12} parent=1 // pred_fallthru
      _
    // Predicated region
    $region22: #{model_forward.12} parent=1 // pred_check
      _
    $region23: #{model_forward.12} parent=1 // pred_check_branch
      %50 = sbr.rel (0) target = $region25
    $region24: #{model_forward.12} parent=1 // pred_region
      %51 = dma.done [#allocation6], 64
    $region25: #{model_forward.12} parent=1 // pred_fallthru
      _
    %v52 = vld [vmem:[#allocation2] sm:$0xff]
    %v53 = vld [vmem:[#allocation2 + $0x8] sm:$0xff]
    %v54 = vld [vmem:[#allocation2 + $0x10] sm:$0xff]
    %v55 = vld [vmem:[#allocation2 + $0x18] sm:$0xff]
    %v56 = vld [vmem:[#allocation2 + $0x20] sm:$0xff]
    %v57 = vld [vmem:[#allocation5] sm:$0xff]
    %v58 = vld [vmem:[#allocation5 + $0x8] sm:$0xff]
    %v59 = vld [vmem:[#allocation5 + $0x10] sm:$0xff]
    %v60 = vld [vmem:[#allocation5 + $0x18] sm:$0xff]
    %v61 = vld [vmem:[#allocation7] sm:$0xf]
    %v63 = vlaneseq
    %v64 = vshrl.u32 %v63, 7
    %v65 = vsub.s32 0, %v64
    %v66 = vrot.slane %v61, %v65
    %v67 = vlaneseq
    %v68 = vshrl.u32 %v67, 7
    %v69 = vsub.s32 1, %v68
    %v70 = vrot.slane %v61, %v69
    %v71 = vlaneseq
    %v72 = vshrl.u32 %v71, 7
    %v73 = vsub.s32 2, %v72
    %v74 = vrot.slane %v61, %v73
    %v75 = vlaneseq
    %v76 = vshrl.u32 %v75, 7
    %v77 = vsub.s32 3, %v76
    %v78 = vrot.slane %v61, %v77
    %vm83 = vcmask 64512
    %v85 = vsel %vm83, %v52, 0
    %v88 = vsel %vm83, %v53, 0
    %v91 = vsel %vm83, %v54, 0
    %v94 = vsel %vm83, %v55, 0
    %v97 = vsel %vm83, %v56, 0
    %99 = vmatprep.subr.mxu0 %v58
    %100 = vmatpush1.msra.mxu0 %v57
    %101 = vmatprep.subr.mxu0 0.0
    %102 = vmatpush1.msra.mxu0 0.0
    %103 = vmatprep.subr.mxu0 0.0
    %104 = vmatpush1.msra.mxu0 0.0
    %105 = vmatprep.subr.mxu0 0.0
    %106 = vmatpush1.msra.mxu0 0.0
    %107 = vmatprep.subr.mxu0 0.0
    %108 = vmatpush1.msra.mxu0 0.0
    %109 = vmatprep.subr.mxu0 0.0
    %110 = vmatpush1.msra.mxu0 0.0
    %111 = vmatprep.subr.mxu0 0.0
    %112 = vmatpush1.msra.mxu0 0.0
    %113 = vmatprep.subr.mxu0 0.0
    %114 = vmatpush1.msra.mxu0 0.0
    %115 = vmatprep.subr.mxu0 0.0
    %116 = vmatpush1.msra.mxu0 0.0
    %117 = vmatprep.subr.mxu0 0.0
    %118 = vmatpush1.msra.mxu0 0.0
    %119 = vmatprep.subr.mxu0 0.0
    %120 = vmatpush1.msra.mxu0 0.0
    %121 = vmatprep.subr.mxu0 0.0
    %122 = vmatpush1.msra.mxu0 0.0
    %123 = vmatprep.subr.mxu0 0.0
    %124 = vmatpush1.msra.mxu0 0.0
    %125 = vmatprep.subr.mxu0 0.0
    %126 = vmatpush1.msra.mxu0 0.0
    %127 = vmatprep.subr.mxu0 0.0
    %128 = vmatpush1.msra.mxu0 0.0
    %129 = vmatprep.subr.mxu0 0.0
    %130 = vmatpush1.msra.mxu0 0.0
    %131 = vmatprep.subr.mxu0 0.0
    %132 = vmatpush1.msra.mxu0 0.0
    %133 = vmatprep.subr.mxu0 0.0
    %134 = vmatpush1.msra.mxu0 0.0
    %135 = vmatprep.subr.mxu0 0.0
    %136 = vmatpush1.msra.mxu0 0.0
    %137 = vmatprep.subr.mxu0 0.0
    %138 = vmatpush1.msra.mxu0 0.0
    %139 = vmatprep.subr.mxu0 0.0
    %140 = vmatpush1.msra.mxu0 0.0
    %141 = vmatprep.subr.mxu0 0.0
    %142 = vmatpush1.msra.mxu0 0.0
    %143 = vmatprep.subr.mxu0 0.0
    %144 = vmatpush1.msra.mxu0 0.0
    %145 = vmatprep.subr.mxu0 0.0
    %146 = vmatpush1.msra.mxu0 0.0
    %147 = vmatprep.subr.mxu0 0.0
    %148 = vmatpush1.msra.mxu0 0.0
    %149 = vmatprep.subr.mxu0 0.0
    %150 = vmatpush1.msra.mxu0 0.0
    %151 = vmatprep.subr.mxu0 0.0
    %152 = vmatpush1.msra.mxu0 0.0
    %153 = vmatprep.subr.mxu0 0.0
    %154 = vmatpush1.msra.mxu0 0.0
    %155 = vmatprep.subr.mxu0 0.0
    %156 = vmatpush1.msra.mxu0 0.0
    %157 = vmatprep.subr.mxu0 0.0
    %158 = vmatpush1.msra.mxu0 0.0
    %159 = vmatprep.subr.mxu0 0.0
    %160 = vmatpush1.msra.mxu0 0.0
    %161 = vmatprep.subr.mxu0 0.0
    %162 = vmatpush1.msra.mxu0 0.0
    %163 = vmatprep.mubr.f32.mxu0 0.0
    %164 = vmatmul.mubr.f32.gmra.mrb[0].mxu0 %v85
    %v165 = vpop.f32.mrb[0].mxu0
    %v166 = vadd.f32 %v66, %v165
    %v167 = vpop.f32.mrb[0].mxu0
    %v168 = vadd.f32 %v70, %v167
    %169 = vmatprep.mubr.f32.mxu0 0.0
    %170 = vmatmul.mubr.f32.gmra.mrb[0].mxu0 %v88
    %v171 = vpop.f32.mrb[0].mxu0
    %v172 = vadd.f32 %v66, %v171
    %v173 = vpop.f32.mrb[0].mxu0
    %v174 = vadd.f32 %v70, %v173
    %175 = vmatprep.mubr.f32.mxu0 0.0
    %176 = vmatmul.mubr.f32.gmra.mrb[0].mxu0 %v91
    %v177 = vpop.f32.mrb[0].mxu0
    %v178 = vadd.f32 %v66, %v177
    %v179 = vpop.f32.mrb[0].mxu0
    %v180 = vadd.f32 %v70, %v179
    %181 = vmatprep.mubr.f32.mxu0 0.0
    %182 = vmatmul.mubr.f32.gmra.mrb[0].mxu0 %v94
    %v183 = vpop.f32.mrb[0].mxu0
    %v184 = vadd.f32 %v66, %v183
    %v185 = vpop.f32.mrb[0].mxu0
    %v186 = vadd.f32 %v70, %v185
    %187 = vmatprep.mubr.f32.mxu0 0.0
    %188 = vmatmul.mubr.f32.gmra.mrb[0].mxu0 %v97
    %v189 = vpop.f32.mrb[0].mxu0
    %v190 = vadd.f32 %v66, %v189
    %v191 = vpop.f32.mrb[0].mxu0
    %v192 = vadd.f32 %v70, %v191
    %193 = vdwg.mxu0
    %194 = vmatprep.subr.mxu0 %v60
    %195 = vmatpush1.msra.mxu0 %v59
    %196 = vmatprep.subr.mxu0 0.0
    %197 = vmatpush1.msra.mxu0 0.0
    %198 = vmatprep.subr.mxu0 0.0
    %199 = vmatpush1.msra.mxu0 0.0
    %200 = vmatprep.subr.mxu0 0.0
    %201 = vmatpush1.msra.mxu0 0.0
    %202 = vmatprep.subr.mxu0 0.0
    %203 = vmatpush1.msra.mxu0 0.0
    %204 = vmatprep.subr.mxu0 0.0
    %205 = vmatpush1.msra.mxu0 0.0
    %206 = vmatprep.subr.mxu0 0.0
    %207 = vmatpush1.msra.mxu0 0.0
    %208 = vmatprep.subr.mxu0 0.0
    %209 = vmatpush1.msra.mxu0 0.0
    %210 = vmatprep.subr.mxu0 0.0
    %211 = vmatpush1.msra.mxu0 0.0
    %212 = vmatprep.subr.mxu0 0.0
    %213 = vmatpush1.msra.mxu0 0.0
    %214 = vmatprep.subr.mxu0 0.0
    %215 = vmatpush1.msra.mxu0 0.0
    %216 = vmatprep.subr.mxu0 0.0
    %217 = vmatpush1.msra.mxu0 0.0
    %218 = vmatprep.subr.mxu0 0.0
    %219 = vmatpush1.msra.mxu0 0.0
    %220 = vmatprep.subr.mxu0 0.0
    %221 = vmatpush1.msra.mxu0 0.0
    %222 = vmatprep.subr.mxu0 0.0
    %223 = vmatpush1.msra.mxu0 0.0
    %224 = vmatprep.subr.mxu0 0.0
    %225 = vmatpush1.msra.mxu0 0.0
    %226 = vmatprep.subr.mxu0 0.0
    %227 = vmatpush1.msra.mxu0 0.0
    %228 = vmatprep.subr.mxu0 0.0
    %229 = vmatpush1.msra.mxu0 0.0
    %230 = vmatprep.subr.mxu0 0.0
    %231 = vmatpush1.msra.mxu0 0.0
    %232 = vmatprep.subr.mxu0 0.0
    %233 = vmatpush1.msra.mxu0 0.0
    %234 = vmatprep.subr.mxu0 0.0
    %235 = vmatpush1.msra.mxu0 0.0
    %236 = vmatprep.subr.mxu0 0.0
    %237 = vmatpush1.msra.mxu0 0.0
    %238 = vmatprep.subr.mxu0 0.0
    %239 = vmatpush1.msra.mxu0 0.0
    %240 = vmatprep.subr.mxu0 0.0
    %241 = vmatpush1.msra.mxu0 0.0
    %242 = vmatprep.subr.mxu0 0.0
    %243 = vmatpush1.msra.mxu0 0.0
    %244 = vmatprep.subr.mxu0 0.0
    %245 = vmatpush1.msra.mxu0 0.0
    %246 = vmatprep.subr.mxu0 0.0
    %247 = vmatpush1.msra.mxu0 0.0
    %248 = vmatprep.subr.mxu0 0.0
    %249 = vmatpush1.msra.mxu0 0.0
    %250 = vmatprep.subr.mxu0 0.0
    %251 = vmatpush1.msra.mxu0 0.0
    %252 = vmatprep.subr.mxu0 0.0
    %253 = vmatpush1.msra.mxu0 0.0
    %254 = vmatprep.subr.mxu0 0.0
    %255 = vmatpush1.msra.mxu0 0.0
    %256 = vmatprep.subr.mxu0 0.0
    %257 = vmatpush1.msra.mxu0 0.0
    %258 = vmatprep.mubr.f32.mxu0 0.0
    %259 = vmatmul.mubr.f32.gmra.mrb[0].mxu0 %v85
    %v260 = vpop.f32.mrb[0].mxu0
    %v261 = vadd.f32 %v74, %v260
    %v262 = vpop.f32.mrb[0].mxu0
    %v263 = vadd.f32 %v78, %v262
    %264 = vmatprep.mubr.f32.mxu0 0.0
    %265 = vmatmul.mubr.f32.gmra.mrb[0].mxu0 %v88
    %v266 = vpop.f32.mrb[0].mxu0
    %v267 = vadd.f32 %v74, %v266
    %v268 = vpop.f32.mrb[0].mxu0
    %v269 = vadd.f32 %v78, %v268
    %270 = vmatprep.mubr.f32.mxu0 0.0
    %271 = vmatmul.mubr.f32.gmra.mrb[0].mxu0 %v91
    %v272 = vpop.f32.mrb[0].mxu0
    %v273 = vadd.f32 %v74, %v272
    %v274 = vpop.f32.mrb[0].mxu0
    %v275 = vadd.f32 %v78, %v274
    %276 = vmatprep.mubr.f32.mxu0 0.0
    %277 = vmatmul.mubr.f32.gmra.mrb[0].mxu0 %v94
    %v278 = vpop.f32.mrb[0].mxu0
    %v279 = vadd.f32 %v74, %v278
    %v280 = vpop.f32.mrb[0].mxu0
    %v281 = vadd.f32 %v78, %v280
    %282 = vmatprep.mubr.f32.mxu0 0.0
    %283 = vmatmul.mubr.f32.gmra.mrb[0].mxu0 %v97
    %v284 = vpop.f32.mrb[0].mxu0
    %v285 = vadd.f32 %v74, %v284
    %v286 = vpop.f32.mrb[0].mxu0
    %v287 = vadd.f32 %v78, %v286
    %288 = vdwg.mxu0
    %289 = vst [vmem:[#allocation8] sm:$0xff] %v166
    %290 = vst [vmem:[#allocation8 + $0x8] sm:$0xff] %v168
    %291 = vst [vmem:[#allocation8 + $0x10] sm:$0xff] %v261
    %292 = vst [vmem:[#allocation8 + $0x18] sm:$0xff] %v263
    %293 = vst [vmem:[#allocation8 + $0x20] sm:$0xff] %v172
    %294 = vst [vmem:[#allocation8 + $0x28] sm:$0xff] %v174
    %295 = vst [vmem:[#allocation8 + $0x30] sm:$0xff] %v267
    %296 = vst [vmem:[#allocation8 + $0x38] sm:$0xff] %v269
    %297 = vst [vmem:[#allocation8 + $0x40] sm:$0xff] %v178
    %298 = vst [vmem:[#allocation8 + $0x48] sm:$0xff] %v180
    %299 = vst [vmem:[#allocation8 + $0x50] sm:$0xff] %v273
    %300 = vst [vmem:[#allocation8 + $0x58] sm:$0xff] %v275
    %301 = vst [vmem:[#allocation8 + $0x60] sm:$0xff] %v184
    %302 = vst [vmem:[#allocation8 + $0x68] sm:$0xff] %v186
    %303 = vst [vmem:[#allocation8 + $0x70] sm:$0xff] %v279
    %304 = vst [vmem:[#allocation8 + $0x78] sm:$0xff] %v281
    %305 = vst [vmem:[#allocation8 + $0x80] sm:$0xff] %v190
    %306 = vst [vmem:[#allocation8 + $0x88] sm:$0xff] %v192
    %307 = vst [vmem:[#allocation8 + $0x90] sm:$0xff] %v285
    %308 = vst [vmem:[#allocation8 + $0x98] sm:$0xff] %v287
    // Predicated region
    $region26: #{model_forward.12} parent=1 // pred_check
      _
    $region27: #{model_forward.12} parent=1 // pred_check_branch
      %310 = sbr.rel (0) target = $region29
    $region28: #{model_forward.12} parent=1 // pred_region
      %s312 = ssub.s32 2560, 2560
      %313 = vsyncadd [#allocation4], %s312
      %s314 = sshll.u32 [#allocation8], 4
      %s315 = int_to_ptr.vmem [resolvable:$true] %s314
      %320 = dma.vmem_to_hbm [thread:$0]  %s315, 2560, %s3, [#allocation4], 512, 512, 32
    $region29: #{model_forward.12} parent=1 // pred_fallthru
      _
    // Predicated region
    $region30: #{model_forward.12} parent=1 // pred_check
      _
    $region31: #{model_forward.12} parent=1 // pred_check_branch
      %322 = sbr.rel (0) target = $region33
    $region32: #{model_forward.12} parent=1 // pred_region
      %323 = dma.done [#allocation4], 2560
    $region33: #{model_forward.12} parent=1 // pred_fallthru
      _
    %324 = vsyncpa [#allocation3], 1
    %325 = vsyncpa [#allocation6], 1
    %326 = vsyncpa [#allocation4], 1

// kernel: model_forward.14
$region0: #{model_forward.14}
  #allocation0 [shape = 'u32[]', space=smem, size = 0x4, offset = 0x4, fixed_abs, tag = 'smem constant byte address 0x4 - core index']
  #allocation1 [shape = 'u32[144,128]{1,0:T(1,128)}', space=vmem, size = 0x12000, scoped, tag = 'internal scratch']
  %s0 = inlined_call_operand.hbm [shape: f32[16,128], index: 0, kind: input, shape index: {}]
  %s1 = inlined_call_operand.hbm [shape: f32[16,128], index: 1, kind: input, shape index: {}]
  %s2 = inlined_call_operand.hbm [shape: f32[16,32], index: 2, kind: input, shape index: {}]
  %s3 = inlined_call_operand.hbm [shape: f32[2,128], index: 3, kind: input, shape index: {}]
  %s4 = inlined_call_operand.hbm [shape: f32[128,32], index: 4, kind: input, shape index: {}]
  %s5 = inlined_call_operand.hbm [shape: f32[1,32], index: 5, kind: input, shape index: {}]
  %s6 = inlined_call_operand.hbm [shape: f32[1,32], index: 6, kind: input, shape index: {}]
  %s7 = inlined_call_operand.hbm [shape: f32[1,32], index: 7, kind: input, shape index: {}]
  %s8 = inlined_call_operand.hbm [shape: f32[16,32], index: 8, kind: output, shape index: {}]
  %s9 = sld [smem:[#allocation0]]
  $region74: #{model_forward.14} parent=0
    _
  %s11 = ssub.s32 1, %s9
  %s12 = scalar_select 0, %s11, %s9
  $region1: #{model_forward.14} parent=0
    #allocation2 [shape = 'u8[8192]{0}', space=vmem, size = 0x2000, scoped, tag = 'input window, operand 0, single buffered']
    #allocation3 [shape = 's32[1]{0}', space=sflag, size = 0x4, scoped, tag = 'scoped memory for model_forward.14']
    #allocation4 [shape = 's32[1]{0}', space=sflag, size = 0x4, scoped, tag = 'scoped memory for model_forward.14']
    #allocation5 [shape = 'u8[8192]{0}', space=vmem, size = 0x2000, scoped, tag = 'input window, operand 1, single buffered']
    #allocation6 [shape = 's32[1]{0}', space=sflag, size = 0x4, scoped, tag = 'scoped memory for model_forward.14']
    #allocation7 [shape = 'u8[8192]{0}', space=vmem, size = 0x2000, scoped, tag = 'input window, operand 2, single buffered']
    #allocation8 [shape = 'u8[1024]{0}', space=vmem, size = 0x400, scoped, tag = 'input window, operand 3, single buffered']
    #allocation9 [shape = 's32[1]{0}', space=sflag, size = 0x4, scoped, tag = 'scoped memory for model_forward.14']
    #allocation10 [shape = 'u8[65536]{0}', space=vmem, size = 0x10000, scoped, tag = 'input window, operand 4, single buffered']
    #allocation11 [shape = 'u8[512]{0}', space=vmem, size = 0x400, scoped, tag = 'input window, operand 5, single buffered']
    #allocation12 [shape = 's32[1]{0}', space=sflag, size = 0x4, scoped, tag = 'scoped memory for model_forward.14']
    #allocation13 [shape = 'u8[512]{0}', space=vmem, size = 0x400, scoped, tag = 'input window, operand 6, single buffered']
    #allocation14 [shape = 'u8[512]{0}', space=vmem, size = 0x400, scoped, tag = 'input window, operand 7, single buffered']
    #allocation15 [shape = 's32[1]{0}', space=sflag, size = 0x4, scoped, tag = 'scoped memory for model_forward.14']
    #allocation16 [shape = 'u8[8192]{0}', space=vmem, size = 0x2000, scoped, tag = 'output window, operand 0, single buffered']
    %13 = vsyncpa [#allocation3], 0
    %14 = vsyncpa [#allocation6], 0
    %15 = vsyncpa [#allocation9], 0
    %16 = vsyncpa [#allocation12], 0
    %17 = vsyncpa [#allocation15], 0
    %18 = vsyncpa [#allocation4], 0
    // Predicated region
    $region2: #{model_forward.14} parent=1 // pred_check
      _
    $region3: #{model_forward.14} parent=1 // pred_check_branch
      %20 = sbr.rel (0) target = $region5
    $region4: #{model_forward.14} parent=1 // pred_region
      %s22 = ssub.s32 256, 256
      %23 = vsyncadd [#allocation3], %s22
      %s24 = sshll.u32 [#allocation2], 4
      %s25 = int_to_ptr.vmem [resolvable:$true] %s24
      %30 = dma.hbm_to_vmem [thread:$0]  %s0, 256, %s25, [#allocation3], 128, 128, 8
    $region5: #{model_forward.14} parent=1 // pred_fallthru
      _
    // Predicated region
    $region6: #{model_forward.14} parent=1 // pred_check
      _
    $region7: #{model_forward.14} parent=1 // pred_check_branch
      %32 = sbr.rel (0) target = $region9
    $region8: #{model_forward.14} parent=1 // pred_region
      %s34 = ssub.s32 256, 256
      %35 = vsyncadd [#allocation6], %s34
      %s36 = sshll.u32 [#allocation5], 4
      %s37 = int_to_ptr.vmem [resolvable:$true] %s36
      %42 = dma.hbm_to_vmem [thread:$0]  %s1, 256, %s37, [#allocation6], 128, 128, 8
    $region9: #{model_forward.14} parent=1 // pred_fallthru
      _
    // Predicated region
    $region10: #{model_forward.14} parent=1 // pred_check
      _
    $region11: #{model_forward.14} parent=1 // pred_check_branch
      %44 = sbr.rel (0) target = $region13
    $region12: #{model_forward.14} parent=1 // pred_region
      %s46 = ssub.s32 256, 256
      %47 = vsyncadd [#allocation6], %s46
      %s48 = sshll.u32 [#allocation7], 4
      %s49 = int_to_ptr.vmem [resolvable:$true] %s48
      %54 = dma.hbm_to_vmem [thread:$0]  %s2, 256, %s49, [#allocation6], 128, 128, 8
    $region13: #{model_forward.14} parent=1 // pred_fallthru
      _
    // Predicated region
    $region14: #{model_forward.14} parent=1 // pred_check
      _
    $region15: #{model_forward.14} parent=1 // pred_check_branch
      %56 = sbr.rel (0) target = $region17
    $region16: #{model_forward.14} parent=1 // pred_region
      %s58 = ssub.s32 32, 32
      %59 = vsyncadd [#allocation9], %s58
      %s61 = sshll.u32 [#allocation8], 4
      %s62 = int_to_ptr.vmem [resolvable:$true] %s61
      %64 = dma.hbm_to_vmem [thread:$0]  %s3, 32, %s62, [#allocation9]
    $region17: #{model_forward.14} parent=1 // pred_fallthru
      _
    // Predicated region
    $region18: #{model_forward.14} parent=1 // pred_check
      _
    $region19: #{model_forward.14} parent=1 // pred_check_branch
      %66 = sbr.rel (0) target = $region21
    $region20: #{model_forward.14} parent=1 // pred_region
      %s68 = ssub.s32 2048, 2048
      %69 = vsyncadd [#allocation9], %s68
      %s70 = sshll.u32 [#allocation10], 4
      %s71 = int_to_ptr.vmem [resolvable:$true] %s70
      %76 = dma.hbm_to_vmem [thread:$0]  %s4, 2048, %s71, [#allocation9], 128, 128, 8
    $region21: #{model_forward.14} parent=1 // pred_fallthru
      _
    // Predicated region
    $region22: #{model_forward.14} parent=1 // pred_check
      _
    $region23: #{model_forward.14} parent=1 // pred_check_branch
      %78 = sbr.rel (0) target = $region25
    $region24: #{model_forward.14} parent=1 // pred_region
      %s80 = ssub.s32 16, 16
      %81 = vsyncadd [#allocation12], %s80
      %s83 = sshll.u32 [#allocation11], 4
      %s84 = int_to_ptr.vmem [resolvable:$true] %s83
      %86 = dma.hbm_to_vmem [thread:$0]  %s5, 16, %s84, [#allocation12]
    $region25: #{model_forward.14} parent=1 // pred_fallthru
      _
    // Predicated region
    $region26: #{model_forward.14} parent=1 // pred_check
      _
    $region27: #{model_forward.14} parent=1 // pred_check_branch
      %88 = sbr.rel (0) target = $region29
    $region28: #{model_forward.14} parent=1 // pred_region
      %s90 = ssub.s32 16, 16
      %91 = vsyncadd [#allocation12], %s90
      %s93 = sshll.u32 [#allocation13], 4
      %s94 = int_to_ptr.vmem [resolvable:$true] %s93
      %96 = dma.hbm_to_vmem [thread:$0]  %s6, 16, %s94, [#allocation12]
    $region29: #{model_forward.14} parent=1 // pred_fallthru
      _
    // Predicated region
    $region30: #{model_forward.14} parent=1 // pred_check
      _
    $region31: #{model_forward.14} parent=1 // pred_check_branch
      %98 = sbr.rel (0) target = $region33
    $region32: #{model_forward.14} parent=1 // pred_region
      %s100 = ssub.s32 16, 16
      %101 = vsyncadd [#allocation15], %s100
      %s103 = sshll.u32 [#allocation14], 4
      %s104 = int_to_ptr.vmem [resolvable:$true] %s103
      %106 = dma.hbm_to_vmem [thread:$0]  %s7, 16, %s104, [#allocation15]
    $region33: #{model_forward.14} parent=1 // pred_fallthru
      _
    // Predicated region
    $region34: #{model_forward.14} parent=1 // pred_check
      _
    $region35: #{model_forward.14} parent=1 // pred_check_branch
      %108 = sbr.rel (0) target = $region37
    $region36: #{model_forward.14} parent=1 // pred_region
      %109 = dma.done [#allocation3], 256
    $region37: #{model_forward.14} parent=1 // pred_fallthru
      _
    // Predicated region
    $region38: #{model_forward.14} parent=1 // pred_check
      _
    $region39: #{model_forward.14} parent=1 // pred_check_branch
      %111 = sbr.rel (0) target = $region41
    $region40: #{model_forward.14} parent=1 // pred_region
      %112 = dma.done [#allocation6], 256
    $region41: #{model_forward.14} parent=1 // pred_fallthru
      _
    // Predicated region
    $region42: #{model_forward.14} parent=1 // pred_check
      _
    $region43: #{model_forward.14} parent=1 // pred_check_branch
      %114 = sbr.rel (0) target = $region45
    $region44: #{model_forward.14} parent=1 // pred_region
      %115 = dma.done [#allocation6], 256
    $region45: #{model_forward.14} parent=1 // pred_fallthru
      _
    // Predicated region
    $region46: #{model_forward.14} parent=1 // pred_check
      _
    $region47: #{model_forward.14} parent=1 // pred_check_branch
      %117 = sbr.rel (0) target = $region49
    $region48: #{model_forward.14} parent=1 // pred_region
      %118 = dma.done [#allocation9], 32
    $region49: #{model_forward.14} parent=1 // pred_fallthru
      _
    // Predicated region
    $region50: #{model_forward.14} parent=1 // pred_check
      _
    $region51: #{model_forward.14} parent=1 // pred_check_branch
      %120 = sbr.rel (0) target = $region53
    $region52: #{model_forward.14} parent=1 // pred_region
      %121 = dma.done [#allocation9], 2048
    $region53: #{model_forward.14} parent=1 // pred_fallthru
      _
    // Predicated region
    $region54: #{model_forward.14} parent=1 // pred_check
      _
    $region55: #{model_forward.14} parent=1 // pred_check_branch
      %123 = sbr.rel (0) target = $region57
    $region56: #{model_forward.14} parent=1 // pred_region
      %124 = dma.done [#allocation12], 16
    $region57: #{model_forward.14} parent=1 // pred_fallthru
      _
    // Predicated region
    $region58: #{model_forward.14} parent=1 // pred_check
      _
    $region59: #{model_forward.14} parent=1 // pred_check_branch
      %126 = sbr.rel (0) target = $region61
    $region60: #{model_forward.14} parent=1 // pred_region
      %127 = dma.done [#allocation12], 16
    $region61: #{model_forward.14} parent=1 // pred_fallthru
      _
    // Predicated region
    $region62: #{model_forward.14} parent=1 // pred_check
      _
    $region63: #{model_forward.14} parent=1 // pred_check_branch
      %129 = sbr.rel (0) target = $region65
    $region64: #{model_forward.14} parent=1 // pred_region
      %130 = dma.done [#allocation15], 16
    $region65: #{model_forward.14} parent=1 // pred_fallthru
      _
    %v131 = vld [vmem:[#allocation2] sm:$0xff]
    %v132 = vld [vmem:[#allocation2 + $0x8] sm:$0xff]
    %v133 = vld [vmem:[#allocation5] sm:$0xff]
    %v134 = vld [vmem:[#allocation5 + $0x8] sm:$0xff]
    %v135 = vld [vmem:[#allocation8] sm:$0x3]
    %v136 = vlaneseq
    %v137 = vshrl.u32 %v136, 7
    %v138 = vsub.s32 0, %v137
    %v139 = vrot.slane %v135, %v138
    %v140 = vmul.f32 %v131, %v139
    %v141 = vmul.f32 %v132, %v139
    %142 = vadd.xlane.f32.xlu0 %v140
    %v143 = vpop.xlane.xlu0 %142
    %144 = vadd.xlane.f32.xlu0 %v141
    %v145 = vpop.xlane.xlu0 %144
    %v146 = vlaneseq
    %v147 = vshrl.u32 %v146, 7
    %v148 = vsub.s32 1, %v147
    %v149 = vrot.slane %v135, %v148
    %v150 = vmul.f32 %v133, %v149
    %v151 = vmul.f32 %v134, %v149
    %152 = vadd.xlane.f32.xlu0 %v150
    %v153 = vpop.xlane.xlu0 %152
    %154 = vadd.xlane.f32.xlu0 %v151
    %v155 = vpop.xlane.xlu0 %154
    %v156 = vadd.f32 %v143, %v153
    %v157 = vadd.f32 %v145, %v155
    %v158 = vxor.u32 %v156, 2147483648
    %v159 = vxor.u32 %v157, 2147483648
    %v160 = vmul.f32 %v158, 1.442695
    %v161 = vpow.pop %v160
    %v162 = vmul.f32 %v159, 1.442695
    %v163 = vpow.pop %v162
    %v164 = vadd.f32 %v161, 1.0
    %v165 = vadd.f32 %v163, 1.0
    %v166 = vrcp.pop %v164
    %v167 = vmul.f32 1.0, %v166
    %v168 = vrcp.pop %v165
    %v169 = vmul.f32 1.0, %v168
    %v170 = vmul.f32 %v167, %v133
    %v171 = vmul.f32 %v169, %v134
    %v172 = vsub.f32 1.0, %v167
    %v173 = vsub.f32 1.0, %v169
    %v174 = vmul.f32 %v172, %v131
    %v175 = vmul.f32 %v173, %v132
    %v176 = vadd.f32 %v170, %v174
    %v177 = vadd.f32 %v171, %v175
    %v178 = vld [vmem:[#allocation10] sm:$0xff]
    %v179 = vld [vmem:[#allocation10 + $0x8] sm:$0xff]
    %v180 = vld [vmem:[#allocation10 + $0x10] sm:$0xff]
    %v181 = vld [vmem:[#allocation10 + $0x18] sm:$0xff]
    %v182 = vld [vmem:[#allocation10 + $0x20] sm:$0xff]
    %v183 = vld [vmem:[#allocation10 + $0x28] sm:$0xff]
    %v184 = vld [vmem:[#allocation10 + $0x30] sm:$0xff]
    %v185 = vld [vmem:[#allocation10 + $0x38] sm:$0xff]
    %v186 = vld [vmem:[#allocation10 + $0x40] sm:$0xff]
    %v187 = vld [vmem:[#allocation10 + $0x48] sm:$0xff]
    %v188 = vld [vmem:[#allocation10 + $0x50] sm:$0xff]
    %v189 = vld [vmem:[#allocation10 + $0x58] sm:$0xff]
    %v190 = vld [vmem:[#allocation10 + $0x60] sm:$0xff]
    %v191 = vld [vmem:[#allocation10 + $0x68] sm:$0xff]
    %v192 = vld [vmem:[#allocation10 + $0x70] sm:$0xff]
    %v193 = vld [vmem:[#allocation10 + $0x78] sm:$0xff]
    %v194 = vld [vmem:[#allocation11] sm:$0x1]
    %v196 = vlaneseq
    %v197 = vshrl.u32 %v196, 7
    %v198 = vsub.s32 0, %v197
    %v199 = vrot.slane %v194, %v198
    %201 = vmatprep.subr.mxu0 0.0
    %202 = vmatpush1.msra.mxu0 %v178
    %203 = vmatprep.subr.mxu0 0.0
    %204 = vmatpush1.msra.mxu0 %v179
    %205 = vmatprep.subr.mxu0 0.0
    %206 = vmatpush1.msra.mxu0 %v180
    %207 = vmatprep.subr.mxu0 0.0
    %208 = vmatpush1.msra.mxu0 %v181
    %209 = vmatprep.subr.mxu0 0.0
    %210 = vmatpush1.msra.mxu0 %v182
    %211 = vmatprep.subr.mxu0 0.0
    %212 = vmatpush1.msra.mxu0 %v183
    %213 = vmatprep.subr.mxu0 0.0
    %214 = vmatpush1.msra.mxu0 %v184
    %215 = vmatprep.subr.mxu0 0.0
    %216 = vmatpush1.msra.mxu0 %v185
    %217 = vmatprep.subr.mxu0 0.0
    %218 = vmatpush1.msra.mxu0 %v186
    %219 = vmatprep.subr.mxu0 0.0
    %220 = vmatpush1.msra.mxu0 %v187
    %221 = vmatprep.subr.mxu0 0.0
    %222 = vmatpush1.msra.mxu0 %v188
    %223 = vmatprep.subr.mxu0 0.0
    %224 = vmatpush1.msra.mxu0 %v189
    %225 = vmatprep.subr.mxu0 0.0
    %226 = vmatpush1.msra.mxu0 %v190
    %227 = vmatprep.subr.mxu0 0.0
    %228 = vmatpush1.msra.mxu0 %v191
    %229 = vmatprep.subr.mxu0 0.0
    %230 = vmatpush1.msra.mxu0 %v192
    %231 = vmatprep.subr.mxu0 0.0
    %232 = vmatpush1.msra.mxu0 %v193
    %233 = vmatprep.subr.mxu0 0.0
    %234 = vmatpush1.msra.mxu0 0.0
    %235 = vmatprep.subr.mxu0 0.0
    %236 = vmatpush1.msra.mxu0 0.0
    %237 = vmatprep.subr.mxu0 0.0
    %238 = vmatpush1.msra.mxu0 0.0
    %239 = vmatprep.subr.mxu0 0.0
    %240 = vmatpush1.msra.mxu0 0.0
    %241 = vmatprep.subr.mxu0 0.0
    %242 = vmatpush1.msra.mxu0 0.0
    %243 = vmatprep.subr.mxu0 0.0
    %244 = vmatpush1.msra.mxu0 0.0
    %245 = vmatprep.subr.mxu0 0.0
    %246 = vmatpush1.msra.mxu0 0.0
    %247 = vmatprep.subr.mxu0 0.0
    %248 = vmatpush1.msra.mxu0 0.0
    %249 = vmatprep.subr.mxu0 0.0
    %250 = vmatpush1.msra.mxu0 0.0
    %251 = vmatprep.subr.mxu0 0.0
    %252 = vmatpush1.msra.mxu0 0.0
    %253 = vmatprep.subr.mxu0 0.0
    %254 = vmatpush1.msra.mxu0 0.0
    %255 = vmatprep.subr.mxu0 0.0
    %256 = vmatpush1.msra.mxu0 0.0
    %257 = vmatprep.subr.mxu0 0.0
    %258 = vmatpush1.msra.mxu0 0.0
    %259 = vmatprep.subr.mxu0 0.0
    %260 = vmatpush1.msra.mxu0 0.0
    %261 = vmatprep.subr.mxu0 0.0
    %262 = vmatpush1.msra.mxu0 0.0
    %263 = vmatprep.subr.mxu0 0.0
    %264 = vmatpush1.msra.mxu0 0.0
    %265 = vmatprep.mubr.f32.mxu0 0.0
    %266 = vmatmul.mubr.f32.gmra.mrb[0].mxu0 %v176
    %v267 = vpop.f32.mrb[0].mxu0
    %v268 = vadd.f32 %v199, %v267
    %v269 = vpop.f32.mrb[0].mxu0
    %270 = vmatprep.mubr.f32.mxu0 0.0
    %271 = vmatmul.mubr.f32.gmra.mrb[0].mxu0 %v177
    %v272 = vpop.f32.mrb[0].mxu0
    %v273 = vadd.f32 %v199, %v272
    %v274 = vpop.f32.mrb[0].mxu0
    %275 = vdwg.mxu0
    %v276 = vmax.f32 %v268, 0.0
    %v277 = vmax.f32 %v273, 0.0
    %v278 = vld [vmem:[#allocation13] sm:$0x1]
    %v280 = vlaneseq
    %v281 = vshrl.u32 %v280, 7
    %v282 = vsub.s32 0, %v281
    %v283 = vrot.slane %v278, %v282
    %v285 = vmul.f32 %v276, %v283
    %v286 = vmul.f32 %v277, %v283
    %v287 = vld [vmem:[#allocation14] sm:$0x1]
    %v289 = vlaneseq
    %v290 = vshrl.u32 %v289, 7
    %v291 = vsub.s32 0, %v290
    %v292 = vrot.slane %v287, %v291
    %v294 = vadd.f32 %v285, %v292
    %v295 = vadd.f32 %v286, %v292
    %v296 = vld [vmem:[#allocation7] sm:$0xff]
    %v297 = vld [vmem:[#allocation7 + $0x8] sm:$0xff]
    %v298 = vadd.f32 %v294, %v296
    %v299 = vadd.f32 %v295, %v297
    %vm300 = vcmask 261120
    %301 = vst.msk [vmem:[#allocation16] sm:$0xff] %vm300, %v298
    %302 = vst.msk [vmem:[#allocation16 + $0x8] sm:$0xff] %vm300, %v299
    // Predicated region
    $region66: #{model_forward.14} parent=1 // pred_check
      _
    $region67: #{model_forward.14} parent=1 // pred_check_branch
      %304 = sbr.rel (0) target = $region69
    $region68: #{model_forward.14} parent=1 // pred_region
      %s306 = ssub.s32 256, 256
      %307 = vsyncadd [#allocation4], %s306
      %s308 = sshll.u32 [#allocation16], 4
      %s309 = int_to_ptr.vmem [resolvable:$true] %s308
      %314 = dma.vmem_to_hbm [thread:$0]  %s309, 256, %s8, [#allocation4], 128, 128, 8
    $region69: #{model_forward.14} parent=1 // pred_fallthru
      _
    // Predicated region
    $region70: #{model_forward.14} parent=1 // pred_check
      _
    $region71: #{model_forward.14} parent=1 // pred_check_branch
      %316 = sbr.rel (0) target = $region73
    $region72: #{model_forward.14} parent=1 // pred_region
      %317 = dma.done [#allocation4], 256
    $region73: #{model_forward.14} parent=1 // pred_fallthru
      _
    %318 = vsyncpa [#allocation3], 1
    %319 = vsyncpa [#allocation6], 1
    %320 = vsyncpa [#allocation9], 1
    %321 = vsyncpa [#allocation12], 1
    %322 = vsyncpa [#allocation15], 1
    %323 = vsyncpa [#allocation4], 1

// kernel: model_forward.18
$region0: #{model_forward.18}
  #allocation0 [shape = 'u32[]', space=smem, size = 0x4, offset = 0x4, fixed_abs, tag = 'smem constant byte address 0x4 - core index']
  #allocation1 [shape = 'u32[144,128]{1,0:T(1,128)}', space=vmem, size = 0x12000, scoped, tag = 'internal scratch']
  %s0 = inlined_call_operand.hbm [shape: f32[8,32], index: 0, kind: input, shape index: {}]
  %s1 = inlined_call_operand.hbm [shape: f32[32,512], index: 1, kind: input, shape index: {}]
  %s2 = inlined_call_operand.hbm [shape: f32[1,512], index: 2, kind: input, shape index: {}]
  %s3 = inlined_call_operand.hbm [shape: f32[8,128], index: 3, kind: output, shape index: {0}]
  %s4 = inlined_call_operand.hbm [shape: f32[8,128], index: 4, kind: output, shape index: {1}]
  %s5 = inlined_call_operand.hbm [shape: f32[8,128], index: 5, kind: output, shape index: {2}]
  %s6 = inlined_call_operand.hbm [shape: f32[8,128], index: 6, kind: output, shape index: {3}]
  %7 = xla_tuple %s3, %s4, %s5, %s6
  %s8 = sld [smem:[#allocation0]]
  $region58: #{model_forward.18} parent=0
    _
  %s10 = ssub.s32 1, %s8
  %s11 = scalar_select 0, %s10, %s8
  $region1: #{model_forward.18} parent=0
    #allocation2 [shape = 'u8[4096]{0}', space=vmem, size = 0x1000, scoped, tag = 'input window, operand 0, single buffered']
    #allocation3 [shape = 's32[1]{0}', space=sflag, size = 0x4, scoped, tag = 'scoped memory for model_forward.18']
    #allocation4 [shape = 's32[1]{0}', space=sflag, size = 0x4, scoped, tag = 'scoped memory for model_forward.18']
    #allocation5 [shape = 'u8[65536]{0}', space=vmem, size = 0x10000, scoped, tag = 'input window, operand 1, single buffered']
    #allocation6 [shape = 's32[1]{0}', space=sflag, size = 0x4, scoped, tag = 'scoped memory for model_forward.18']
    #allocation7 [shape = 'u8[2048]{0}', space=vmem, size = 0x800, scoped, tag = 'input window, operand 2, single buffered']
    #allocation8 [shape = 'u8[4096]{0}', space=vmem, size = 0x1000, scoped, tag = 'output window, operand 0, single buffered']
    #allocation9 [shape = 'u8[4096]{0}', space=vmem, size = 0x1000, scoped, tag = 'output window, operand 1, single buffered']
    #allocation10 [shape = 's32[1]{0}', space=sflag, size = 0x4, scoped, tag = 'scoped memory for model_forward.18']
    #allocation11 [shape = 'u8[4096]{0}', space=vmem, size = 0x1000, scoped, tag = 'output window, operand 2, single buffered']
    #allocation12 [shape = 'u8[4096]{0}', space=vmem, size = 0x1000, scoped, tag = 'output window, operand 3, single buffered']
    #allocation13 [shape = 's32[1]{0}', space=sflag, size = 0x4, scoped, tag = 'scoped memory for model_forward.18']
    %12 = vsyncpa [#allocation3], 0
    %13 = vsyncpa [#allocation6], 0
    %14 = vsyncpa [#allocation4], 0
    %15 = vsyncpa [#allocation10], 0
    %16 = vsyncpa [#allocation13], 0
    // Predicated region
    $region2: #{model_forward.18} parent=1 // pred_check
      _
    $region3: #{model_forward.18} parent=1 // pred_check_branch
      %18 = sbr.rel (0) target = $region5
    $region4: #{model_forward.18} parent=1 // pred_region
      %s20 = ssub.s32 128, 128
      %21 = vsyncadd [#allocation3], %s20
      %s23 = sshll.u32 [#allocation2], 4
      %s24 = int_to_ptr.vmem [resolvable:$true] %s23
      %26 = dma.hbm_to_vmem [thread:$0]  %s0, 128, %s24, [#allocation3]
    $region5: #{model_forward.18} parent=1 // pred_fallthru
      _
    // Predicated region
    $region6: #{model_forward.18} parent=1 // pred_check
      _
    $region7: #{model_forward.18} parent=1 // pred_check_branch
      %28 = sbr.rel (0) target = $region9
    $region8: #{model_forward.18} parent=1 // pred_region
      %s30 = ssub.s32 2048, 2048
      %31 = vsyncadd [#allocation6], %s30
      %s32 = sshll.u32 [#allocation5], 4
      %s33 = int_to_ptr.vmem [resolvable:$true] %s32
      %38 = dma.hbm_to_vmem [thread:$0]  %s1, 2048, %s33, [#allocation6], 512, 512, 32
    $region9: #{model_forward.18} parent=1 // pred_fallthru
      _
    // Predicated region
    $region10: #{model_forward.18} parent=1 // pred_check
      _
    $region11: #{model_forward.18} parent=1 // pred_check_branch
      %40 = sbr.rel (0) target = $region13
    $region12: #{model_forward.18} parent=1 // pred_region
      %s42 = ssub.s32 64, 64
      %43 = vsyncadd [#allocation6], %s42
      %s45 = sshll.u32 [#allocation7], 4
      %s46 = int_to_ptr.vmem [resolvable:$true] %s45
      %48 = dma.hbm_to_vmem [thread:$0]  %s2, 64, %s46, [#allocation6]
    $region13: #{model_forward.18} parent=1 // pred_fallthru
      _
    // Predicated region
    $region14: #{model_forward.18} parent=1 // pred_check
      _
    $region15: #{model_forward.18} parent=1 // pred_check_branch
      %50 = sbr.rel (0) target = $region17
    $region16: #{model_forward.18} parent=1 // pred_region
      %51 = dma.done [#allocation3], 128
    $region17: #{model_forward.18} parent=1 // pred_fallthru
      _
    // Predicated region
    $region18: #{model_forward.18} parent=1 // pred_check
      _
    $region19: #{model_forward.18} parent=1 // pred_check_branch
      %53 = sbr.rel (0) target = $region21
    $region20: #{model_forward.18} parent=1 // pred_region
      %54 = dma.done [#allocation6], 2048
    $region21: #{model_forward.18} parent=1 // pred_fallthru
      _
    // Predicated region
    $region22: #{model_forward.18} parent=1 // pred_check
      _
    $region23: #{model_forward.18} parent=1 // pred_check_branch
      %56 = sbr.rel (0) target = $region25
    $region24: #{model_forward.18} parent=1 // pred_region
      %57 = dma.done [#allocation6], 64
    $region25: #{model_forward.18} parent=1 // pred_fallthru
      _
    %v58 = vld [vmem:[#allocation2] sm:$0xff]
    %v59 = vld [vmem:[#allocation5] sm:$0xff]
    %v60 = vld [vmem:[#allocation5 + $0x8] sm:$0xff]
    %v61 = vld [vmem:[#allocation5 + $0x10] sm:$0xff]
    %v62 = vld [vmem:[#allocation5 + $0x18] sm:$0xff]
    %v63 = vld [vmem:[#allocation5 + $0x20] sm:$0xff]
    %v64 = vld [vmem:[#allocation5 + $0x28] sm:$0xff]
    %v65 = vld [vmem:[#allocation5 + $0x30] sm:$0xff]
    %v66 = vld [vmem:[#allocation5 + $0x38] sm:$0xff]
    %v67 = vld [vmem:[#allocation5 + $0x40] sm:$0xff]
    %v68 = vld [vmem:[#allocation5 + $0x48] sm:$0xff]
    %v69 = vld [vmem:[#allocation5 + $0x50] sm:$0xff]
    %v70 = vld [vmem:[#allocation5 + $0x58] sm:$0xff]
    %v71 = vld [vmem:[#allocation5 + $0x60] sm:$0xff]
    %v72 = vld [vmem:[#allocation5 + $0x68] sm:$0xff]
    %v73 = vld [vmem:[#allocation5 + $0x70] sm:$0xff]
    %v74 = vld [vmem:[#allocation5 + $0x78] sm:$0xff]
    %v75 = vld [vmem:[#allocation7] sm:$0xf]
    %v77 = vlaneseq
    %v78 = vshrl.u32 %v77, 7
    %v79 = vsub.s32 0, %v78
    %v80 = vrot.slane %v75, %v79
    %v81 = vlaneseq
    %v82 = vshrl.u32 %v81, 7
    %v83 = vsub.s32 1, %v82
    %v84 = vrot.slane %v75, %v83
    %v85 = vlaneseq
    %v86 = vshrl.u32 %v85, 7
    %v87 = vsub.s32 2, %v86
    %v88 = vrot.slane %v75, %v87
    %v89 = vlaneseq
    %v90 = vshrl.u32 %v89, 7
    %v91 = vsub.s32 3, %v90
    %v92 = vrot.slane %v75, %v91
    %vm97 = vcmask 261120
    %v99 = vsel %vm97, %v58, 0
    %101 = vmatprep.subr.mxu0 %v60
    %102 = vmatpush1.msra.mxu0 %v59
    %103 = vmatprep.subr.mxu0 %v64
    %104 = vmatpush1.msra.mxu0 %v63
    %105 = vmatprep.subr.mxu0 %v68
    %106 = vmatpush1.msra.mxu0 %v67
    %107 = vmatprep.subr.mxu0 %v72
    %108 = vmatpush1.msra.mxu0 %v71
    %109 = vmatprep.subr.mxu0 0.0
    %110 = vmatpush1.msra.mxu0 0.0
    %111 = vmatprep.subr.mxu0 0.0
    %112 = vmatpush1.msra.mxu0 0.0
    %113 = vmatprep.subr.mxu0 0.0
    %114 = vmatpush1.msra.mxu0 0.0
    %115 = vmatprep.subr.mxu0 0.0
    %116 = vmatpush1.msra.mxu0 0.0
    %117 = vmatprep.subr.mxu0 0.0
    %118 = vmatpush1.msra.mxu0 0.0
    %119 = vmatprep.subr.mxu0 0.0
    %120 = vmatpush1.msra.mxu0 0.0
    %121 = vmatprep.subr.mxu0 0.0
    %122 = vmatpush1.msra.mxu0 0.0
    %123 = vmatprep.subr.mxu0 0.0
    %124 = vmatpush1.msra.mxu0 0.0
    %125 = vmatprep.subr.mxu0 0.0
    %126 = vmatpush1.msra.mxu0 0.0
    %127 = vmatprep.subr.mxu0 0.0
    %128 = vmatpush1.msra.mxu0 0.0
    %129 = vmatprep.subr.mxu0 0.0
    %130 = vmatpush1.msra.mxu0 0.0
    %131 = vmatprep.subr.mxu0 0.0
    %132 = vmatpush1.msra.mxu0 0.0
    %133 = vmatprep.subr.mxu0 0.0
    %134 = vmatpush1.msra.mxu0 0.0
    %135 = vmatprep.subr.mxu0 0.0
    %136 = vmatpush1.msra.mxu0 0.0
    %137 = vmatprep.subr.mxu0 0.0
    %138 = vmatpush1.msra.mxu0 0.0
    %139 = vmatprep.subr.mxu0 0.0
    %140 = vmatpush1.msra.mxu0 0.0
    %141 = vmatprep.subr.mxu0 0.0
    %142 = vmatpush1.msra.mxu0 0.0
    %143 = vmatprep.subr.mxu0 0.0
    %144 = vmatpush1.msra.mxu0 0.0
    %145 = vmatprep.subr.mxu0 0.0
    %146 = vmatpush1.msra.mxu0 0.0
    %147 = vmatprep.subr.mxu0 0.0
    %148 = vmatpush1.msra.mxu0 0.0
    %149 = vmatprep.subr.mxu0 0.0
    %150 = vmatpush1.msra.mxu0 0.0
    %151 = vmatprep.subr.mxu0 0.0
    %152 = vmatpush1.msra.mxu0 0.0
    %153 = vmatprep.subr.mxu0 0.0
    %154 = vmatpush1.msra.mxu0 0.0
    %155 = vmatprep.subr.mxu0 0.0
    %156 = vmatpush1.msra.mxu0 0.0
    %157 = vmatprep.subr.mxu0 0.0
    %158 = vmatpush1.msra.mxu0 0.0
    %159 = vmatprep.subr.mxu0 0.0
    %160 = vmatpush1.msra.mxu0 0.0
    %161 = vmatprep.subr.mxu0 0.0
    %162 = vmatpush1.msra.mxu0 0.0
    %163 = vmatprep.subr.mxu0 0.0
    %164 = vmatpush1.msra.mxu0 0.0
    %165 = vmatprep.mubr.f32.mxu0 0.0
    %166 = vmatmul.mubr.f32.gmra.mrb[0].mxu0 %v99
    %v167 = vpop.f32.mrb[0].mxu0
    %v168 = vadd.f32 %v80, %v167
    %v169 = vpop.f32.mrb[0].mxu0
    %v170 = vadd.f32 %v84, %v169
    %171 = vdwg.mxu0
    %172 = vmatprep.subr.mxu0 %v62
    %173 = vmatpush1.msra.mxu0 %v61
    %174 = vmatprep.subr.mxu0 %v66
    %175 = vmatpush1.msra.mxu0 %v65
    %176 = vmatprep.subr.mxu0 %v70
    %177 = vmatpush1.msra.mxu0 %v69
    %178 = vmatprep.subr.mxu0 %v74
    %179 = vmatpush1.msra.mxu0 %v73
    %180 = vmatprep.subr.mxu0 0.0
    %181 = vmatpush1.msra.mxu0 0.0
    %182 = vmatprep.subr.mxu0 0.0
    %183 = vmatpush1.msra.mxu0 0.0
    %184 = vmatprep.subr.mxu0 0.0
    %185 = vmatpush1.msra.mxu0 0.0
    %186 = vmatprep.subr.mxu0 0.0
    %187 = vmatpush1.msra.mxu0 0.0
    %188 = vmatprep.subr.mxu0 0.0
    %189 = vmatpush1.msra.mxu0 0.0
    %190 = vmatprep.subr.mxu0 0.0
    %191 = vmatpush1.msra.mxu0 0.0
    %192 = vmatprep.subr.mxu0 0.0
    %193 = vmatpush1.msra.mxu0 0.0
    %194 = vmatprep.subr.mxu0 0.0
    %195 = vmatpush1.msra.mxu0 0.0
    %196 = vmatprep.subr.mxu0 0.0
    %197 = vmatpush1.msra.mxu0 0.0
    %198 = vmatprep.subr.mxu0 0.0
    %199 = vmatpush1.msra.mxu0 0.0
    %200 = vmatprep.subr.mxu0 0.0
    %201 = vmatpush1.msra.mxu0 0.0
    %202 = vmatprep.subr.mxu0 0.0
    %203 = vmatpush1.msra.mxu0 0.0
    %204 = vmatprep.subr.mxu0 0.0
    %205 = vmatpush1.msra.mxu0 0.0
    %206 = vmatprep.subr.mxu0 0.0
    %207 = vmatpush1.msra.mxu0 0.0
    %208 = vmatprep.subr.mxu0 0.0
    %209 = vmatpush1.msra.mxu0 0.0
    %210 = vmatprep.subr.mxu0 0.0
    %211 = vmatpush1.msra.mxu0 0.0
    %212 = vmatprep.subr.mxu0 0.0
    %213 = vmatpush1.msra.mxu0 0.0
    %214 = vmatprep.subr.mxu0 0.0
    %215 = vmatpush1.msra.mxu0 0.0
    %216 = vmatprep.subr.mxu0 0.0
    %217 = vmatpush1.msra.mxu0 0.0
    %218 = vmatprep.subr.mxu0 0.0
    %219 = vmatpush1.msra.mxu0 0.0
    %220 = vmatprep.subr.mxu0 0.0
    %221 = vmatpush1.msra.mxu0 0.0
    %222 = vmatprep.subr.mxu0 0.0
    %223 = vmatpush1.msra.mxu0 0.0
    %224 = vmatprep.subr.mxu0 0.0
    %225 = vmatpush1.msra.mxu0 0.0
    %226 = vmatprep.subr.mxu0 0.0
    %227 = vmatpush1.msra.mxu0 0.0
    %228 = vmatprep.subr.mxu0 0.0
    %229 = vmatpush1.msra.mxu0 0.0
    %230 = vmatprep.subr.mxu0 0.0
    %231 = vmatpush1.msra.mxu0 0.0
    %232 = vmatprep.subr.mxu0 0.0
    %233 = vmatpush1.msra.mxu0 0.0
    %234 = vmatprep.subr.mxu0 0.0
    %235 = vmatpush1.msra.mxu0 0.0
    %236 = vmatprep.mubr.f32.mxu0 0.0
    %237 = vmatmul.mubr.f32.gmra.mrb[0].mxu0 %v99
    %v238 = vpop.f32.mrb[0].mxu0
    %v239 = vadd.f32 %v88, %v238
    %v240 = vpop.f32.mrb[0].mxu0
    %v241 = vadd.f32 %v92, %v240
    %242 = vdwg.mxu0
    %243 = vst [vmem:[#allocation8] sm:$0xff] %v168
    %244 = vst [vmem:[#allocation9] sm:$0xff] %v170
    %245 = vst [vmem:[#allocation11] sm:$0xff] %v239
    %246 = vst [vmem:[#allocation12] sm:$0xff] %v241
    // Predicated region
    $region26: #{model_forward.18} parent=1 // pred_check
      _
    $region27: #{model_forward.18} parent=1 // pred_check_branch
      %248 = sbr.rel (0) target = $region29
    $region28: #{model_forward.18} parent=1 // pred_region
      %s250 = ssub.s32 128, 128
      %251 = vsyncadd [#allocation4], %s250
      %s253 = sshll.u32 [#allocation8], 4
      %s254 = int_to_ptr.vmem [resolvable:$true] %s253
      %256 = dma.vmem_to_hbm [thread:$0]  %s254, 128, %s3, [#allocation4]
    $region29: #{model_forward.18} parent=1 // pred_fallthru
      _
    // Predicated region
    $region30: #{model_forward.18} parent=1 // pred_check
      _
    $region31: #{model_forward.18} parent=1 // pred_check_branch
      %258 = sbr.rel (0) target = $region33
    $region32: #{model_forward.18} parent=1 // pred_region
      %s260 = ssub.s32 128, 128
      %261 = vsyncadd [#allocation10], %s260
      %s263 = sshll.u32 [#allocation9], 4
      %s264 = int_to_ptr.vmem [resolvable:$true] %s263
      %266 = dma.vmem_to_hbm [thread:$0]  %s264, 128, %s4, [#allocation10]
    $region33: #{model_forward.18} parent=1 // pred_fallthru
      _
    // Predicated region
    $region34: #{model_forward.18} parent=1 // pred_check
      _
    $region35: #{model_forward.18} parent=1 // pred_check_branch
      %268 = sbr.rel (0) target = $region37
    $region36: #{model_forward.18} parent=1 // pred_region
      %s270 = ssub.s32 128, 128
      %271 = vsyncadd [#allocation10], %s270
      %s273 = sshll.u32 [#allocation11], 4
      %s274 = int_to_ptr.vmem [resolvable:$true] %s273
      %276 = dma.vmem_to_hbm [thread:$0]  %s274, 128, %s5, [#allocation10]
    $region37: #{model_forward.18} parent=1 // pred_fallthru
      _
    // Predicated region
    $region38: #{model_forward.18} parent=1 // pred_check
      _
    $region39: #{model_forward.18} parent=1 // pred_check_branch
      %278 = sbr.rel (0) target = $region41
    $region40: #{model_forward.18} parent=1 // pred_region
      %s280 = ssub.s32 128, 128
      %281 = vsyncadd [#allocation13], %s280
      %s283 = sshll.u32 [#allocation12], 4
      %s284 = int_to_ptr.vmem [resolvable:$true] %s283
      %286 = dma.vmem_to_hbm [thread:$0]  %s284, 128, %s6, [#allocation13]
    $region41: #{model_forward.18} parent=1 // pred_fallthru
      _
    // Predicated region
    $region42: #{model_forward.18} parent=1 // pred_check
      _
    $region43: #{model_forward.18} parent=1 // pred_check_branch
      %288 = sbr.rel (0) target = $region45
    $region44: #{model_forward.18} parent=1 // pred_region
      %289 = dma.done [#allocation4], 128
    $region45: #{model_forward.18} parent=1 // pred_fallthru
      _
    // Predicated region
    $region46: #{model_forward.18} parent=1 // pred_check
      _
    $region47: #{model_forward.18} parent=1 // pred_check_branch
      %291 = sbr.rel (0) target = $region49
    $region48: #{model_forward.18} parent=1 // pred_region
      %292 = dma.done [#allocation10], 128
    $region49: #{model_forward.18} parent=1 // pred_fallthru
      _
    // Predicated region
    $region50: #{model_forward.18} parent=1 // pred_check
      _
    $region51: #{model_forward.18} parent=1 // pred_check_branch
      %294 = sbr.rel (0) target = $region53
    $region52: #{model_forward.18} parent=1 // pred_region
      %295 = dma.done [#allocation10], 128
    $region53: #{model_forward.18} parent=1 // pred_fallthru
      _
    // Predicated region
    $region54: #{model_forward.18} parent=1 // pred_check
      _
    $region55: #{model_forward.18} parent=1 // pred_check_branch
      %297 = sbr.rel (0) target = $region57
    $region56: #{model_forward.18} parent=1 // pred_region
      %298 = dma.done [#allocation13], 128
    $region57: #{model_forward.18} parent=1 // pred_fallthru
      _
    %299 = vsyncpa [#allocation3], 1
    %300 = vsyncpa [#allocation6], 1
    %301 = vsyncpa [#allocation4], 1
    %302 = vsyncpa [#allocation10], 1
    %303 = vsyncpa [#allocation13], 1

// kernel: model_forward.19
$region0: #{model_forward.19}
  #allocation0 [shape = 'u32[]', space=smem, size = 0x4, offset = 0x4, fixed_abs, tag = 'smem constant byte address 0x4 - core index']
  #allocation1 [shape = 'u32[144,128]{1,0:T(1,128)}', space=vmem, size = 0x12000, scoped, tag = 'internal scratch']
  %s0 = inlined_call_operand.hbm [shape: f32[8,128], index: 0, kind: input, shape index: {}]
  %s1 = inlined_call_operand.hbm [shape: f32[8,128], index: 1, kind: input, shape index: {}]
  %s2 = inlined_call_operand.hbm [shape: f32[8,32], index: 2, kind: input, shape index: {}]
  %s3 = inlined_call_operand.hbm [shape: f32[2,128], index: 3, kind: input, shape index: {}]
  %s4 = inlined_call_operand.hbm [shape: f32[128,32], index: 4, kind: input, shape index: {}]
  %s5 = inlined_call_operand.hbm [shape: f32[1,32], index: 5, kind: input, shape index: {}]
  %s6 = inlined_call_operand.hbm [shape: f32[1,32], index: 6, kind: input, shape index: {}]
  %s7 = inlined_call_operand.hbm [shape: f32[1,32], index: 7, kind: input, shape index: {}]
  %s8 = inlined_call_operand.hbm [shape: f32[8,32], index: 8, kind: output, shape index: {}]
  %s9 = sld [smem:[#allocation0]]
  $region74: #{model_forward.19} parent=0
    _
  %s11 = ssub.s32 1, %s9
  %s12 = scalar_select 0, %s11, %s9
  $region1: #{model_forward.19} parent=0
    #allocation2 [shape = 'u8[4096]{0}', space=vmem, size = 0x1000, scoped, tag = 'input window, operand 0, single buffered']
    #allocation3 [shape = 's32[1]{0}', space=sflag, size = 0x4, scoped, tag = 'scoped memory for model_forward.19']
    #allocation4 [shape = 's32[1]{0}', space=sflag, size = 0x4, scoped, tag = 'scoped memory for model_forward.19']
    #allocation5 [shape = 'u8[4096]{0}', space=vmem, size = 0x1000, scoped, tag = 'input window, operand 1, single buffered']
    #allocation6 [shape = 's32[1]{0}', space=sflag, size = 0x4, scoped, tag = 'scoped memory for model_forward.19']
    #allocation7 [shape = 'u8[4096]{0}', space=vmem, size = 0x1000, scoped, tag = 'input window, operand 2, single buffered']
    #allocation8 [shape = 'u8[1024]{0}', space=vmem, size = 0x400, scoped, tag = 'input window, operand 3, single buffered']
    #allocation9 [shape = 's32[1]{0}', space=sflag, size = 0x4, scoped, tag = 'scoped memory for model_forward.19']
    #allocation10 [shape = 'u8[65536]{0}', space=vmem, size = 0x10000, scoped, tag = 'input window, operand 4, single buffered']
    #allocation11 [shape = 'u8[512]{0}', space=vmem, size = 0x400, scoped, tag = 'input window, operand 5, single buffered']
    #allocation12 [shape = 's32[1]{0}', space=sflag, size = 0x4, scoped, tag = 'scoped memory for model_forward.19']
    #allocation13 [shape = 'u8[512]{0}', space=vmem, size = 0x400, scoped, tag = 'input window, operand 6, single buffered']
    #allocation14 [shape = 'u8[512]{0}', space=vmem, size = 0x400, scoped, tag = 'input window, operand 7, single buffered']
    #allocation15 [shape = 's32[1]{0}', space=sflag, size = 0x4, scoped, tag = 'scoped memory for model_forward.19']
    #allocation16 [shape = 'u8[4096]{0}', space=vmem, size = 0x1000, scoped, tag = 'output window, operand 0, single buffered']
    %13 = vsyncpa [#allocation3], 0
    %14 = vsyncpa [#allocation6], 0
    %15 = vsyncpa [#allocation9], 0
    %16 = vsyncpa [#allocation12], 0
    %17 = vsyncpa [#allocation15], 0
    %18 = vsyncpa [#allocation4], 0
    // Predicated region
    $region2: #{model_forward.19} parent=1 // pred_check
      _
    $region3: #{model_forward.19} parent=1 // pred_check_branch
      %20 = sbr.rel (0) target = $region5
    $region4: #{model_forward.19} parent=1 // pred_region
      %s22 = ssub.s32 128, 128
      %23 = vsyncadd [#allocation3], %s22
      %s25 = sshll.u32 [#allocation2], 4
      %s26 = int_to_ptr.vmem [resolvable:$true] %s25
      %28 = dma.hbm_to_vmem [thread:$0]  %s0, 128, %s26, [#allocation3]
    $region5: #{model_forward.19} parent=1 // pred_fallthru
      _
    // Predicated region
    $region6: #{model_forward.19} parent=1 // pred_check
      _
    $region7: #{model_forward.19} parent=1 // pred_check_branch
      %30 = sbr.rel (0) target = $region9
    $region8: #{model_forward.19} parent=1 // pred_region
      %s32 = ssub.s32 128, 128
      %33 = vsyncadd [#allocation6], %s32
      %s35 = sshll.u32 [#allocation5], 4
      %s36 = int_to_ptr.vmem [resolvable:$true] %s35
      %38 = dma.hbm_to_vmem [thread:$0]  %s1, 128, %s36, [#allocation6]
    $region9: #{model_forward.19} parent=1 // pred_fallthru
      _
    // Predicated region
    $region10: #{model_forward.19} parent=1 // pred_check
      _
    $region11: #{model_forward.19} parent=1 // pred_check_branch
      %40 = sbr.rel (0) target = $region13
    $region12: #{model_forward.19} parent=1 // pred_region
      %s42 = ssub.s32 128, 128
      %43 = vsyncadd [#allocation6], %s42
      %s45 = sshll.u32 [#allocation7], 4
      %s46 = int_to_ptr.vmem [resolvable:$true] %s45
      %48 = dma.hbm_to_vmem [thread:$0]  %s2, 128, %s46, [#allocation6]
    $region13: #{model_forward.19} parent=1 // pred_fallthru
      _
    // Predicated region
    $region14: #{model_forward.19} parent=1 // pred_check
      _
    $region15: #{model_forward.19} parent=1 // pred_check_branch
      %50 = sbr.rel (0) target = $region17
    $region16: #{model_forward.19} parent=1 // pred_region
      %s52 = ssub.s32 32, 32
      %53 = vsyncadd [#allocation9], %s52
      %s55 = sshll.u32 [#allocation8], 4
      %s56 = int_to_ptr.vmem [resolvable:$true] %s55
      %58 = dma.hbm_to_vmem [thread:$0]  %s3, 32, %s56, [#allocation9]
    $region17: #{model_forward.19} parent=1 // pred_fallthru
      _
    // Predicated region
    $region18: #{model_forward.19} parent=1 // pred_check
      _
    $region19: #{model_forward.19} parent=1 // pred_check_branch
      %60 = sbr.rel (0) target = $region21
    $region20: #{model_forward.19} parent=1 // pred_region
      %s62 = ssub.s32 2048, 2048
      %63 = vsyncadd [#allocation9], %s62
      %s64 = sshll.u32 [#allocation10], 4
      %s65 = int_to_ptr.vmem [resolvable:$true] %s64
      %70 = dma.hbm_to_vmem [thread:$0]  %s4, 2048, %s65, [#allocation9], 128, 128, 8
    $region21: #{model_forward.19} parent=1 // pred_fallthru
      _
    // Predicated region
    $region22: #{model_forward.19} parent=1 // pred_check
      _
    $region23: #{model_forward.19} parent=1 // pred_check_branch
      %72 = sbr.rel (0) target = $region25
    $region24: #{model_forward.19} parent=1 // pred_region
      %s74 = ssub.s32 16, 16
      %75 = vsyncadd [#allocation12], %s74
      %s77 = sshll.u32 [#allocation11], 4
      %s78 = int_to_ptr.vmem [resolvable:$true] %s77
      %80 = dma.hbm_to_vmem [thread:$0]  %s5, 16, %s78, [#allocation12]
    $region25: #{model_forward.19} parent=1 // pred_fallthru
      _
    // Predicated region
    $region26: #{model_forward.19} parent=1 // pred_check
      _
    $region27: #{model_forward.19} parent=1 // pred_check_branch
      %82 = sbr.rel (0) target = $region29
    $region28: #{model_forward.19} parent=1 // pred_region
      %s84 = ssub.s32 16, 16
      %85 = vsyncadd [#allocation12], %s84
      %s87 = sshll.u32 [#allocation13], 4
      %s88 = int_to_ptr.vmem [resolvable:$true] %s87
      %90 = dma.hbm_to_vmem [thread:$0]  %s6, 16, %s88, [#allocation12]
    $region29: #{model_forward.19} parent=1 // pred_fallthru
      _
    // Predicated region
    $region30: #{model_forward.19} parent=1 // pred_check
      _
    $region31: #{model_forward.19} parent=1 // pred_check_branch
      %92 = sbr.rel (0) target = $region33
    $region32: #{model_forward.19} parent=1 // pred_region
      %s94 = ssub.s32 16, 16
      %95 = vsyncadd [#allocation15], %s94
      %s97 = sshll.u32 [#allocation14], 4
      %s98 = int_to_ptr.vmem [resolvable:$true] %s97
      %100 = dma.hbm_to_vmem [thread:$0]  %s7, 16, %s98, [#allocation15]
    $region33: #{model_forward.19} parent=1 // pred_fallthru
      _
    // Predicated region
    $region34: #{model_forward.19} parent=1 // pred_check
      _
    $region35: #{model_forward.19} parent=1 // pred_check_branch
      %102 = sbr.rel (0) target = $region37
    $region36: #{model_forward.19} parent=1 // pred_region
      %103 = dma.done [#allocation3], 128
    $region37: #{model_forward.19} parent=1 // pred_fallthru
      _
    // Predicated region
    $region38: #{model_forward.19} parent=1 // pred_check
      _
    $region39: #{model_forward.19} parent=1 // pred_check_branch
      %105 = sbr.rel (0) target = $region41
    $region40: #{model_forward.19} parent=1 // pred_region
      %106 = dma.done [#allocation6], 128
    $region41: #{model_forward.19} parent=1 // pred_fallthru
      _
    // Predicated region
    $region42: #{model_forward.19} parent=1 // pred_check
      _
    $region43: #{model_forward.19} parent=1 // pred_check_branch
      %108 = sbr.rel (0) target = $region45
    $region44: #{model_forward.19} parent=1 // pred_region
      %109 = dma.done [#allocation6], 128
    $region45: #{model_forward.19} parent=1 // pred_fallthru
      _
    // Predicated region
    $region46: #{model_forward.19} parent=1 // pred_check
      _
    $region47: #{model_forward.19} parent=1 // pred_check_branch
      %111 = sbr.rel (0) target = $region49
    $region48: #{model_forward.19} parent=1 // pred_region
      %112 = dma.done [#allocation9], 32
    $region49: #{model_forward.19} parent=1 // pred_fallthru
      _
    // Predicated region
    $region50: #{model_forward.19} parent=1 // pred_check
      _
    $region51: #{model_forward.19} parent=1 // pred_check_branch
      %114 = sbr.rel (0) target = $region53
    $region52: #{model_forward.19} parent=1 // pred_region
      %115 = dma.done [#allocation9], 2048
    $region53: #{model_forward.19} parent=1 // pred_fallthru
      _
    // Predicated region
    $region54: #{model_forward.19} parent=1 // pred_check
      _
    $region55: #{model_forward.19} parent=1 // pred_check_branch
      %117 = sbr.rel (0) target = $region57
    $region56: #{model_forward.19} parent=1 // pred_region
      %118 = dma.done [#allocation12], 16
    $region57: #{model_forward.19} parent=1 // pred_fallthru
      _
    // Predicated region
    $region58: #{model_forward.19} parent=1 // pred_check
      _
    $region59: #{model_forward.19} parent=1 // pred_check_branch
      %120 = sbr.rel (0) target = $region61
    $region60: #{model_forward.19} parent=1 // pred_region
      %121 = dma.done [#allocation12], 16
    $region61: #{model_forward.19} parent=1 // pred_fallthru
      _
    // Predicated region
    $region62: #{model_forward.19} parent=1 // pred_check
      _
    $region63: #{model_forward.19} parent=1 // pred_check_branch
      %123 = sbr.rel (0) target = $region65
    $region64: #{model_forward.19} parent=1 // pred_region
      %124 = dma.done [#allocation15], 16
    $region65: #{model_forward.19} parent=1 // pred_fallthru
      _
    %v125 = vld [vmem:[#allocation2] sm:$0xff]
    %v126 = vld [vmem:[#allocation5] sm:$0xff]
    %v127 = vld [vmem:[#allocation8] sm:$0x3]
    %v128 = vlaneseq
    %v129 = vshrl.u32 %v128, 7
    %v130 = vsub.s32 0, %v129
    %v131 = vrot.slane %v127, %v130
    %v132 = vmul.f32 %v125, %v131
    %133 = vadd.xlane.f32.xlu0 %v132
    %v134 = vpop.xlane.xlu0 %133
    %v135 = vlaneseq
    %v136 = vshrl.u32 %v135, 7
    %v137 = vsub.s32 1, %v136
    %v138 = vrot.slane %v127, %v137
    %v139 = vmul.f32 %v126, %v138
    %140 = vadd.xlane.f32.xlu0 %v139
    %v141 = vpop.xlane.xlu0 %140
    %v142 = vadd.f32 %v134, %v141
    %v143 = vxor.u32 %v142, 2147483648
    %v144 = vmul.f32 %v143, 1.442695
    %v145 = vpow.pop %v144
    %v146 = vadd.f32 %v145, 1.0
    %v147 = vrcp.pop %v146
    %v148 = vmul.f32 1.0, %v147
    %v149 = vmul.f32 %v148, %v126
    %v150 = vsub.f32 1.0, %v148
    %v151 = vmul.f32 %v150, %v125
    %v152 = vadd.f32 %v149, %v151
    %v153 = vld [vmem:[#allocation10] sm:$0xff]
    %v154 = vld [vmem:[#allocation10 + $0x8] sm:$0xff]
    %v155 = vld [vmem:[#allocation10 + $0x10] sm:$0xff]
    %v156 = vld [vmem:[#allocation10 + $0x18] sm:$0xff]
    %v157 = vld [vmem:[#allocation10 + $0x20] sm:$0xff]
    %v158 = vld [vmem:[#allocation10 + $0x28] sm:$0xff]
    %v159 = vld [vmem:[#allocation10 + $0x30] sm:$0xff]
    %v160 = vld [vmem:[#allocation10 + $0x38] sm:$0xff]
    %v161 = vld [vmem:[#allocation10 + $0x40] sm:$0xff]
    %v162 = vld [vmem:[#allocation10 + $0x48] sm:$0xff]
    %v163 = vld [vmem:[#allocation10 + $0x50] sm:$0xff]
    %v164 = vld [vmem:[#allocation10 + $0x58] sm:$0xff]
    %v165 = vld [vmem:[#allocation10 + $0x60] sm:$0xff]
    %v166 = vld [vmem:[#allocation10 + $0x68] sm:$0xff]
    %v167 = vld [vmem:[#allocation10 + $0x70] sm:$0xff]
    %v168 = vld [vmem:[#allocation10 + $0x78] sm:$0xff]
    %v169 = vld [vmem:[#allocation11] sm:$0x1]
    %v171 = vlaneseq
    %v172 = vshrl.u32 %v171, 7
    %v173 = vsub.s32 0, %v172
    %v174 = vrot.slane %v169, %v173
    %176 = vmatprep.subr.mxu0 0.0
    %177 = vmatpush1.msra.mxu0 %v153
    %178 = vmatprep.subr.mxu0 0.0
    %179 = vmatpush1.msra.mxu0 %v154
    %180 = vmatprep.subr.mxu0 0.0
    %181 = vmatpush1.msra.mxu0 %v155
    %182 = vmatprep.subr.mxu0 0.0
    %183 = vmatpush1.msra.mxu0 %v156
    %184 = vmatprep.subr.mxu0 0.0
    %185 = vmatpush1.msra.mxu0 %v157
    %186 = vmatprep.subr.mxu0 0.0
    %187 = vmatpush1.msra.mxu0 %v158
    %188 = vmatprep.subr.mxu0 0.0
    %189 = vmatpush1.msra.mxu0 %v159
    %190 = vmatprep.subr.mxu0 0.0
    %191 = vmatpush1.msra.mxu0 %v160
    %192 = vmatprep.subr.mxu0 0.0
    %193 = vmatpush1.msra.mxu0 %v161
    %194 = vmatprep.subr.mxu0 0.0
    %195 = vmatpush1.msra.mxu0 %v162
    %196 = vmatprep.subr.mxu0 0.0
    %197 = vmatpush1.msra.mxu0 %v163
    %198 = vmatprep.subr.mxu0 0.0
    %199 = vmatpush1.msra.mxu0 %v164
    %200 = vmatprep.subr.mxu0 0.0
    %201 = vmatpush1.msra.mxu0 %v165
    %202 = vmatprep.subr.mxu0 0.0
    %203 = vmatpush1.msra.mxu0 %v166
    %204 = vmatprep.subr.mxu0 0.0
    %205 = vmatpush1.msra.mxu0 %v167
    %206 = vmatprep.subr.mxu0 0.0
    %207 = vmatpush1.msra.mxu0 %v168
    %208 = vmatprep.subr.mxu0 0.0
    %209 = vmatpush1.msra.mxu0 0.0
    %210 = vmatprep.subr.mxu0 0.0
    %211 = vmatpush1.msra.mxu0 0.0
    %212 = vmatprep.subr.mxu0 0.0
    %213 = vmatpush1.msra.mxu0 0.0
    %214 = vmatprep.subr.mxu0 0.0
    %215 = vmatpush1.msra.mxu0 0.0
    %216 = vmatprep.subr.mxu0 0.0
    %217 = vmatpush1.msra.mxu0 0.0
    %218 = vmatprep.subr.mxu0 0.0
    %219 = vmatpush1.msra.mxu0 0.0
    %220 = vmatprep.subr.mxu0 0.0
    %221 = vmatpush1.msra.mxu0 0.0
    %222 = vmatprep.subr.mxu0 0.0
    %223 = vmatpush1.msra.mxu0 0.0
    %224 = vmatprep.subr.mxu0 0.0
    %225 = vmatpush1.msra.mxu0 0.0
    %226 = vmatprep.subr.mxu0 0.0
    %227 = vmatpush1.msra.mxu0 0.0
    %228 = vmatprep.subr.mxu0 0.0
    %229 = vmatpush1.msra.mxu0 0.0
    %230 = vmatprep.subr.mxu0 0.0
    %231 = vmatpush1.msra.mxu0 0.0
    %232 = vmatprep.subr.mxu0 0.0
    %233 = vmatpush1.msra.mxu0 0.0
    %234 = vmatprep.subr.mxu0 0.0
    %235 = vmatpush1.msra.mxu0 0.0
    %236 = vmatprep.subr.mxu0 0.0
    %237 = vmatpush1.msra.mxu0 0.0
    %238 = vmatprep.subr.mxu0 0.0
    %239 = vmatpush1.msra.mxu0 0.0
    %240 = vmatprep.mubr.f32.mxu0 0.0
    %241 = vmatmul.mubr.f32.gmra.mrb[0].mxu0 %v152
    %v242 = vpop.f32.mrb[0].mxu0
    %v243 = vadd.f32 %v174, %v242
    %v244 = vpop.f32.mrb[0].mxu0
    %245 = vdwg.mxu0
    %v246 = vmax.f32 %v243, 0.0
    %v247 = vld [vmem:[#allocation13] sm:$0x1]
    %v249 = vlaneseq
    %v250 = vshrl.u32 %v249, 7
    %v251 = vsub.s32 0, %v250
    %v252 = vrot.slane %v247, %v251
    %v254 = vmul.f32 %v246, %v252
    %v255 = vld [vmem:[#allocation14] sm:$0x1]
    %v257 = vlaneseq
    %v258 = vshrl.u32 %v257, 7
    %v259 = vsub.s32 0, %v258
    %v260 = vrot.slane %v255, %v259
    %v262 = vadd.f32 %v254, %v260
    %v263 = vld [vmem:[#allocation7] sm:$0xff]
    %v264 = vadd.f32 %v262, %v263
    %vm265 = vcmask 261120
    %266 = vst.msk [vmem:[#allocation16] sm:$0xff] %vm265, %v264
    // Predicated region
    $region66: #{model_forward.19} parent=1 // pred_check
      _
    $region67: #{model_forward.19} parent=1 // pred_check_branch
      %268 = sbr.rel (0) target = $region69
    $region68: #{model_forward.19} parent=1 // pred_region
      %s270 = ssub.s32 128, 128
      %271 = vsyncadd [#allocation4], %s270
      %s273 = sshll.u32 [#allocation16], 4
      %s274 = int_to_ptr.vmem [resolvable:$true] %s273
      %276 = dma.vmem_to_hbm [thread:$0]  %s274, 128, %s8, [#allocation4]
    $region69: #{model_forward.19} parent=1 // pred_fallthru
      _
    // Predicated region
    $region70: #{model_forward.19} parent=1 // pred_check
      _
    $region71: #{model_forward.19} parent=1 // pred_check_branch
      %278 = sbr.rel (0) target = $region73
    $region72: #{model_forward.19} parent=1 // pred_region
      %279 = dma.done [#allocation4], 128
    $region73: #{model_forward.19} parent=1 // pred_fallthru
      _
    %280 = vsyncpa [#allocation3], 1
    %281 = vsyncpa [#allocation6], 1
    %282 = vsyncpa [#allocation9], 1
    %283 = vsyncpa [#allocation12], 1
    %284 = vsyncpa [#allocation15], 1
    %285 = vsyncpa [#allocation4], 1

// kernel: model_forward.22
$region0: #{model_forward.22}
  #allocation0 [shape = 'u32[]', space=smem, size = 0x4, offset = 0x4, fixed_abs, tag = 'smem constant byte address 0x4 - core index']
  #allocation1 [shape = 'u32[144,128]{1,0:T(1,128)}', space=vmem, size = 0x12000, scoped, tag = 'internal scratch']
  #allocation2 [shape = 'f32[8,32]{1,0:T(8,128)}', space=vmem, size = 0x1000, scoped, tag = 'scratch operand']
  #allocation3 [shape = 'f32[8,32]{1,0:T(8,128)}', space=vmem, size = 0x1000, scoped, tag = 'scratch operand']
  %s0 = inlined_call_operand.hbm [shape: s32[5,1], index: 0, kind: input, shape index: {}]
  %s1 = inlined_call_operand.hbm [shape: f32[5,32], index: 1, kind: input, shape index: {}]
  %s2 = inlined_call_operand.hbm [shape: f32[2,1], index: 2, kind: input, shape index: {}]
  %s3 = inlined_call_operand.hbm [shape: f32[2,32], index: 3, kind: output, shape index: {0}]
  %s4 = inlined_call_operand.hbm [shape: f32[2,32], index: 4, kind: output, shape index: {1}]
  %5 = xla_tuple %s3, %s4
  %s6 = sld [smem:[#allocation0]]
  $region50: #{model_forward.22} parent=0
    _
  %s8 = ssub.s32 1, %s6
  %s9 = scalar_select 0, %s8, %s6
  $region1: #{model_forward.22} parent=0
    #allocation4 [shape = 'u8[4096]{0}', space=vmem, size = 0x1000, scoped, tag = 'input window, operand 0, single buffered']
    #allocation5 [shape = 's32[1]{0}', space=sflag, size = 0x4, scoped, tag = 'scoped memory for model_forward.22']
    #allocation6 [shape = 's32[1]{0}', space=sflag, size = 0x4, scoped, tag = 'scoped memory for model_forward.22']
    #allocation7 [shape = 'u8[4096]{0}', space=vmem, size = 0x1000, scoped, tag = 'input window, operand 1, single buffered']
    #allocation8 [shape = 's32[1]{0}', space=sflag, size = 0x4, scoped, tag = 'scoped memory for model_forward.22']
    #allocation9 [shape = 'u8[1024]{0}', space=vmem, size = 0x400, scoped, tag = 'input window, operand 2, single buffered']
    #allocation10 [shape = 'u8[1024]{0}', space=vmem, size = 0x400, scoped, tag = 'output window, operand 0, single buffered']
    #allocation11 [shape = 'u8[1024]{0}', space=vmem, size = 0x400, scoped, tag = 'output window, operand 1, single buffered']
    #allocation12 [shape = 's32[1]{0}', space=sflag, size = 0x4, scoped, tag = 'scoped memory for model_forward.22']
    %10 = vsyncpa [#allocation5], 0
    %11 = vsyncpa [#allocation8], 0
    %12 = vsyncpa [#allocation6], 0
    %13 = vsyncpa [#allocation12], 0
    // Predicated region
    $region2: #{model_forward.22} parent=1 // pred_check
      _
    $region3: #{model_forward.22} parent=1 // pred_check_branch
      %15 = sbr.rel (0) target = $region5
    $region4: #{model_forward.22} parent=1 // pred_region
      %s17 = ssub.s32 128, 128
      %18 = vsyncadd [#allocation5], %s17
      %s20 = sshll.u32 [#allocation4], 4
      %s21 = int_to_ptr.vmem [resolvable:$true] %s20
      %23 = dma.hbm_to_vmem [thread:$0]  %s0, 128, %s21, [#allocation5]
    $region5: #{model_forward.22} parent=1 // pred_fallthru
      _
    // Predicated region
    $region6: #{model_forward.22} parent=1 // pred_check
      _
    $region7: #{model_forward.22} parent=1 // pred_check_branch
      %25 = sbr.rel (0) target = $region9
    $region8: #{model_forward.22} parent=1 // pred_region
      %s27 = ssub.s32 128, 128
      %28 = vsyncadd [#allocation8], %s27
      %s30 = sshll.u32 [#allocation7], 4
      %s31 = int_to_ptr.vmem [resolvable:$true] %s30
      %33 = dma.hbm_to_vmem [thread:$0]  %s1, 128, %s31, [#allocation8]
    $region9: #{model_forward.22} parent=1 // pred_fallthru
      _
    // Predicated region
    $region10: #{model_forward.22} parent=1 // pred_check
      _
    $region11: #{model_forward.22} parent=1 // pred_check_branch
      %35 = sbr.rel (0) target = $region13
    $region12: #{model_forward.22} parent=1 // pred_region
      %s37 = ssub.s32 32, 32
      %38 = vsyncadd [#allocation8], %s37
      %s40 = sshll.u32 [#allocation9], 4
      %s41 = int_to_ptr.vmem [resolvable:$true] %s40
      %43 = dma.hbm_to_vmem [thread:$0]  %s2, 32, %s41, [#allocation8]
    $region13: #{model_forward.22} parent=1 // pred_fallthru
      _
    // Predicated region
    $region14: #{model_forward.22} parent=1 // pred_check
      _
    $region15: #{model_forward.22} parent=1 // pred_check_branch
      %45 = sbr.rel (0) target = $region17
    $region16: #{model_forward.22} parent=1 // pred_region
      %46 = dma.done [#allocation5], 128
    $region17: #{model_forward.22} parent=1 // pred_fallthru
      _
    // Predicated region
    $region18: #{model_forward.22} parent=1 // pred_check
      _
    $region19: #{model_forward.22} parent=1 // pred_check_branch
      %48 = sbr.rel (0) target = $region21
    $region20: #{model_forward.22} parent=1 // pred_region
      %49 = dma.done [#allocation8], 128
    $region21: #{model_forward.22} parent=1 // pred_fallthru
      _
    // Predicated region
    $region22: #{model_forward.22} parent=1 // pred_check
      _
    $region23: #{model_forward.22} parent=1 // pred_check_branch
      %51 = sbr.rel (0) target = $region25
    $region24: #{model_forward.22} parent=1 // pred_region
      %52 = dma.done [#allocation8], 32
    $region25: #{model_forward.22} parent=1 // pred_fallthru
      _
    %p53 = scmp.eq.s32.totalorder 0, 0
    // Predicated region
    $region26: #{model_forward.22} parent=1 // pred_check
      %p54 = pneg %p53
    $region27: #{model_forward.22} parent=1 // pred_check_branch
      %56 = sbr.rel (%p54) target = $region29
    $region28: #{model_forward.22} parent=1 // pred_region
      %vm57 = vcmask 261120
      %58 = vst.msk [vmem:[#allocation2] sm:$0xff] %vm57, -3e+38
      %59 = vst.msk [vmem:[#allocation3] sm:$0xff] %vm57, 0.0
    $region29: #{model_forward.22} parent=1 // pred_fallthru
      _
    %v60 = vlaneseq
    %v61 = vshrl.u32 %v60, 7
    %s62 = smul.u32 0, 5
    %v63 = vstv %s62
    %v64 = vadd.s32 %v61, %v63
    %vm65 = vcmp.lt.s32.totalorder %v64, 5
    %v66 = vld [vmem:[#allocation7] sm:$0x1f]
    %v67 = vsel %vm65, 1, 0
    %vm68 = vcmp.eq.s32.totalorder %v67, 1
    %v69 = vsel %vm68, %v66, 0.0
    %v70 = vld [vmem:[#allocation4] sm:$0x1f]
    %v71 = vlaneseq
    %v72 = vand.u32 %v71, 127
    %73 = vset.pattern.permute.xlu0 0
    %74 = vperm.xlu0 %73, %v70
    %v75 = vpop.permute.xlu0 %74
    %vm76 = vcmp.eq.s32.totalorder %v75, %v72
    %vm77 = vmand %vm76, %vm68
    %v78 = vld [vmem:[#allocation3] sm:$0xff]
    %v79 = vsel %vm77, 1, 0
    %v80 = vcvt.s32.f32 %v79
    %81 = vxpose.xlu0.b32.start [1/16] %v80, 128
    %82 = vxpose.xlu0.b32.cont [2/16] 0.0, 128
    %83 = vxpose.xlu0.b32.cont [3/16] 0.0, 128
    %84 = vxpose.xlu0.b32.cont [4/16] 0.0, 128
    %85 = vxpose.xlu0.b32.cont [5/16] 0.0, 128
    %86 = vxpose.xlu0.b32.cont [6/16] 0.0, 128
    %87 = vxpose.xlu0.b32.cont [7/16] 0.0, 128
    %88 = vxpose.xlu0.b32.cont [8/16] 0.0, 128
    %89 = vxpose.xlu0.b32.cont [9/16] 0.0, 128
    %90 = vxpose.xlu0.b32.cont [10/16] 0.0, 128
    %91 = vxpose.xlu0.b32.cont [11/16] 0.0, 128
    %92 = vxpose.xlu0.b32.cont [12/16] 0.0, 128
    %93 = vxpose.xlu0.b32.cont [13/16] 0.0, 128
    %94 = vxpose.xlu0.b32.cont [14/16] 0.0, 128
    %95 = vxpose.xlu0.b32.cont [15/16] 0.0, 128
    %96 = vxpose.xlu0.b32.end [16/16] 0.0, 128
    %v97 = vpop.trf.xlu0
    %v98 = vpop.trf.xlu0
    %v99 = vpop.trf.xlu0
    %v100 = vpop.trf.xlu0
    %v101 = vpop.trf.xlu0
    %v102 = vpop.trf.xlu0
    %v103 = vpop.trf.xlu0
    %v104 = vpop.trf.xlu0
    %v105 = vpop.trf.xlu0
    %v106 = vpop.trf.xlu0
    %v107 = vpop.trf.xlu0
    %v108 = vpop.trf.xlu0
    %v109 = vpop.trf.xlu0
    %v110 = vpop.trf.xlu0
    %v111 = vpop.trf.xlu0
    %v112 = vpop.trf.xlu0
    %vm113 = vcmask 39936
    %v115 = vsel %vm113, %v97, 0
    %vm117 = vcmask 1044480
    %v119 = vsel %vm117, %v69, 0
    %121 = vmatprep.subr.mxu0 0.0
    %122 = vmatpush1.msra.mxu0 %v119
    %123 = vmatprep.subr.mxu0 0.0
    %124 = vmatpush1.msra.mxu0 0.0
    %125 = vmatprep.subr.mxu0 0.0
    %126 = vmatpush1.msra.mxu0 0.0
    %127 = vmatprep.subr.mxu0 0.0
    %128 = vmatpush1.msra.mxu0 0.0
    %129 = vmatprep.subr.mxu0 0.0
    %130 = vmatpush1.msra.mxu0 0.0
    %131 = vmatprep.subr.mxu0 0.0
    %132 = vmatpush1.msra.mxu0 0.0
    %133 = vmatprep.subr.mxu0 0.0
    %134 = vmatpush1.msra.mxu0 0.0
    %135 = vmatprep.subr.mxu0 0.0
    %136 = vmatpush1.msra.mxu0 0.0
    %137 = vmatprep.subr.mxu0 0.0
    %138 = vmatpush1.msra.mxu0 0.0
    %139 = vmatprep.subr.mxu0 0.0
    %140 = vmatpush1.msra.mxu0 0.0
    %141 = vmatprep.subr.mxu0 0.0
    %142 = vmatpush1.msra.mxu0 0.0
    %143 = vmatprep.subr.mxu0 0.0
    %144 = vmatpush1.msra.mxu0 0.0
    %145 = vmatprep.subr.mxu0 0.0
    %146 = vmatpush1.msra.mxu0 0.0
    %147 = vmatprep.subr.mxu0 0.0
    %148 = vmatpush1.msra.mxu0 0.0
    %149 = vmatprep.subr.mxu0 0.0
    %150 = vmatpush1.msra.mxu0 0.0
    %151 = vmatprep.subr.mxu0 0.0
    %152 = vmatpush1.msra.mxu0 0.0
    %153 = vmatprep.subr.mxu0 0.0
    %154 = vmatpush1.msra.mxu0 0.0
    %155 = vmatprep.subr.mxu0 0.0
    %156 = vmatpush1.msra.mxu0 0.0
    %157 = vmatprep.subr.mxu0 0.0
    %158 = vmatpush1.msra.mxu0 0.0
    %159 = vmatprep.subr.mxu0 0.0
    %160 = vmatpush1.msra.mxu0 0.0
    %161 = vmatprep.subr.mxu0 0.0
    %162 = vmatpush1.msra.mxu0 0.0
    %163 = vmatprep.subr.mxu0 0.0
    %164 = vmatpush1.msra.mxu0 0.0
    %165 = vmatprep.subr.mxu0 0.0
    %166 = vmatpush1.msra.mxu0 0.0
    %167 = vmatprep.subr.mxu0 0.0
    %168 = vmatpush1.msra.mxu0 0.0
    %169 = vmatprep.subr.mxu0 0.0
    %170 = vmatpush1.msra.mxu0 0.0
    %171 = vmatprep.subr.mxu0 0.0
    %172 = vmatpush1.msra.mxu0 0.0
    %173 = vmatprep.subr.mxu0 0.0
    %174 = vmatpush1.msra.mxu0 0.0
    %175 = vmatprep.subr.mxu0 0.0
    %176 = vmatpush1.msra.mxu0 0.0
    %177 = vmatprep.subr.mxu0 0.0
    %178 = vmatpush1.msra.mxu0 0.0
    %179 = vmatprep.subr.mxu0 0.0
    %180 = vmatpush1.msra.mxu0 0.0
    %181 = vmatprep.subr.mxu0 0.0
    %182 = vmatpush1.msra.mxu0 0.0
    %183 = vmatprep.subr.mxu0 0.0
    %184 = vmatpush1.msra.mxu0 0.0
    %185 = vmatprep.mubr.f32.mxu0 0.0
    %186 = vmatmul.mubr.f32.gmra.mrb[0].mxu0 %v115
    %v187 = vpop.f32.mrb[0].mxu0
    %v188 = vadd.f32 0.0, %v187
    %v189 = vpop.f32.mrb[0].mxu0
    %190 = vdwg.mxu0
    %v191 = vadd.f32 %v78, %v188
    %vm192 = vcmask 261120
    %193 = vst.msk [vmem:[#allocation3] sm:$0xff] %vm192, %v191
    %194 = vset.pattern.permute.xlu0 0
    %195 = vperm.xlu0 %194, %v79
    %v196 = vpop.permute.xlu0 %195
    %vm197 = vcmp.eq.s32.totalorder %v196, 1
    %v198 = vsel %vm197, %v69, -3e+38
    %vm199 = vcmask 258048
    %v200 = vsel %vm199, %v198, -inf
    %v201 = vrot.slane %v200, 4
    %v202 = vmax.f32 %v200, %v201
    %v203 = vrot.slane %v202, 2
    %v204 = vmax.f32 %v202, %v203
    %v205 = vrot.slane %v204, 1
    %v206 = vmax.f32 %v204, %v205
    %207 = vset.pattern.permute.xlu0 1
    %208 = vperm.xlu0 %207, %v79
    %v209 = vpop.permute.xlu0 %208
    %vm210 = vcmp.eq.s32.totalorder %v209, 1
    %v211 = vsel %vm210, %v69, -3e+38
    %v212 = vsel %vm199, %v211, -inf
    %v213 = vrot.slane %v212, 4
    %v214 = vmax.f32 %v212, %v213
    %v215 = vrot.slane %v214, 2
    %v216 = vmax.f32 %v214, %v215
    %v217 = vrot.slane %v216, 1
    %v218 = vmax.f32 %v216, %v217
    %v219 = vld [vmem:[#allocation2] sm:$0xff]
    %vm220 = vcmask 1040384
    %v221 = vsel %vm220, %v206, %v218
    %vm222 = vcmask 1041408
    %v223 = vsel %vm222, %v221, -3e+38
    %v224 = vmax.f32 %v219, %v223
    %225 = vst.msk [vmem:[#allocation2] sm:$0xff] %vm192, %v224
    // Predicated region
    $region30: #{model_forward.22} parent=1 // pred_check
      %p226 = pneg %p53
    $region31: #{model_forward.22} parent=1 // pred_check_branch
      %228 = sbr.rel (%p226) target = $region33
    $region32: #{model_forward.22} parent=1 // pred_region
      %v229 = vld [vmem:[#allocation2] sm:$0x3]
      %vm230 = vcmask 254976
      %231 = vst.msk [vmem:[#allocation10] sm:$0x3] %vm230, %v229
      %v232 = vld [vmem:[#allocation3] sm:$0x3]
      %v233 = vld [vmem:[#allocation9] sm:$0x3]
      %235 = vset.pattern.permute.xlu0 0
      %236 = vperm.xlu0 %235, %v233
      %v237 = vpop.permute.xlu0 %236
      %v239 = vmul.f32 %v232, %v237
      %240 = vst.msk [vmem:[#allocation11] sm:$0x3] %vm230, %v239
    $region33: #{model_forward.22} parent=1 // pred_fallthru
      _
    // Predicated region
    $region34: #{model_forward.22} parent=1 // pred_check
      _
    $region35: #{model_forward.22} parent=1 // pred_check_branch
      %242 = sbr.rel (0) target = $region37
    $region36: #{model_forward.22} parent=1 // pred_region
      %s244 = ssub.s32 32, 32
      %245 = vsyncadd [#allocation6], %s244
      %s247 = sshll.u32 [#allocation10], 4
      %s248 = int_to_ptr.vmem [resolvable:$true] %s247
      %250 = dma.vmem_to_hbm [thread:$0]  %s248, 32, %s3, [#allocation6]
    $region37: #{model_forward.22} parent=1 // pred_fallthru
      _
    // Predicated region
    $region38: #{model_forward.22} parent=1 // pred_check
      _
    $region39: #{model_forward.22} parent=1 // pred_check_branch
      %252 = sbr.rel (0) target = $region41
    $region40: #{model_forward.22} parent=1 // pred_region
      %s254 = ssub.s32 32, 32
      %255 = vsyncadd [#allocation12], %s254
      %s257 = sshll.u32 [#allocation11], 4
      %s258 = int_to_ptr.vmem [resolvable:$true] %s257
      %260 = dma.vmem_to_hbm [thread:$0]  %s258, 32, %s4, [#allocation12]
    $region41: #{model_forward.22} parent=1 // pred_fallthru
      _
    // Predicated region
    $region42: #{model_forward.22} parent=1 // pred_check
      _
    $region43: #{model_forward.22} parent=1 // pred_check_branch
      %262 = sbr.rel (0) target = $region45
    $region44: #{model_forward.22} parent=1 // pred_region
      %263 = dma.done [#allocation6], 32
    $region45: #{model_forward.22} parent=1 // pred_fallthru
      _
    // Predicated region
    $region46: #{model_forward.22} parent=1 // pred_check
      _
    $region47: #{model_forward.22} parent=1 // pred_check_branch
      %265 = sbr.rel (0) target = $region49
    $region48: #{model_forward.22} parent=1 // pred_region
      %266 = dma.done [#allocation12], 32
    $region49: #{model_forward.22} parent=1 // pred_fallthru
      _
    %267 = vsyncpa [#allocation5], 1
    %268 = vsyncpa [#allocation8], 1
    %269 = vsyncpa [#allocation6], 1
    %270 = vsyncpa [#allocation12], 1

// kernel: model_forward.17
$region0: #{model_forward.17}
  #allocation0 [shape = 'u32[]', space=smem, size = 0x4, offset = 0x4, fixed_abs, tag = 'smem constant byte address 0x4 - core index']
  #allocation1 [shape = 'u32[144,128]{1,0:T(1,128)}', space=vmem, size = 0x12000, scoped, tag = 'internal scratch']
  #allocation2 [shape = 'f32[8,32]{1,0:T(8,128)}', space=vmem, size = 0x1000, scoped, tag = 'scratch operand']
  #allocation3 [shape = 'f32[8,32]{1,0:T(8,128)}', space=vmem, size = 0x1000, scoped, tag = 'scratch operand']
  %s0 = inlined_call_operand.hbm [shape: s32[8,1], index: 0, kind: input, shape index: {}]
  %s1 = inlined_call_operand.hbm [shape: f32[8,32], index: 1, kind: input, shape index: {}]
  %s2 = inlined_call_operand.hbm [shape: f32[2,1], index: 2, kind: input, shape index: {}]
  %s3 = inlined_call_operand.hbm [shape: f32[2,32], index: 3, kind: output, shape index: {0}]
  %s4 = inlined_call_operand.hbm [shape: f32[2,32], index: 4, kind: output, shape index: {1}]
  %5 = xla_tuple %s3, %s4
  %s6 = sld [smem:[#allocation0]]
  $region50: #{model_forward.17} parent=0
    _
  %s8 = ssub.s32 1, %s6
  %s9 = scalar_select 0, %s8, %s6
  $region1: #{model_forward.17} parent=0
    #allocation4 [shape = 'u8[4096]{0}', space=vmem, size = 0x1000, scoped, tag = 'input window, operand 0, single buffered']
    #allocation5 [shape = 's32[1]{0}', space=sflag, size = 0x4, scoped, tag = 'scoped memory for model_forward.17']
    #allocation6 [shape = 's32[1]{0}', space=sflag, size = 0x4, scoped, tag = 'scoped memory for model_forward.17']
    #allocation7 [shape = 'u8[4096]{0}', space=vmem, size = 0x1000, scoped, tag = 'input window, operand 1, single buffered']
    #allocation8 [shape = 's32[1]{0}', space=sflag, size = 0x4, scoped, tag = 'scoped memory for model_forward.17']
    #allocation9 [shape = 'u8[1024]{0}', space=vmem, size = 0x400, scoped, tag = 'input window, operand 2, single buffered']
    #allocation10 [shape = 'u8[1024]{0}', space=vmem, size = 0x400, scoped, tag = 'output window, operand 0, single buffered']
    #allocation11 [shape = 'u8[1024]{0}', space=vmem, size = 0x400, scoped, tag = 'output window, operand 1, single buffered']
    #allocation12 [shape = 's32[1]{0}', space=sflag, size = 0x4, scoped, tag = 'scoped memory for model_forward.17']
    %10 = vsyncpa [#allocation5], 0
    %11 = vsyncpa [#allocation8], 0
    %12 = vsyncpa [#allocation6], 0
    %13 = vsyncpa [#allocation12], 0
    // Predicated region
    $region2: #{model_forward.17} parent=1 // pred_check
      _
    $region3: #{model_forward.17} parent=1 // pred_check_branch
      %15 = sbr.rel (0) target = $region5
    $region4: #{model_forward.17} parent=1 // pred_region
      %s17 = ssub.s32 128, 128
      %18 = vsyncadd [#allocation5], %s17
      %s20 = sshll.u32 [#allocation4], 4
      %s21 = int_to_ptr.vmem [resolvable:$true] %s20
      %23 = dma.hbm_to_vmem [thread:$0]  %s0, 128, %s21, [#allocation5]
    $region5: #{model_forward.17} parent=1 // pred_fallthru
      _
    // Predicated region
    $region6: #{model_forward.17} parent=1 // pred_check
      _
    $region7: #{model_forward.17} parent=1 // pred_check_branch
      %25 = sbr.rel (0) target = $region9
    $region8: #{model_forward.17} parent=1 // pred_region
      %s27 = ssub.s32 128, 128
      %28 = vsyncadd [#allocation8], %s27
      %s30 = sshll.u32 [#allocation7], 4
      %s31 = int_to_ptr.vmem [resolvable:$true] %s30
      %33 = dma.hbm_to_vmem [thread:$0]  %s1, 128, %s31, [#allocation8]
    $region9: #{model_forward.17} parent=1 // pred_fallthru
      _
    // Predicated region
    $region10: #{model_forward.17} parent=1 // pred_check
      _
    $region11: #{model_forward.17} parent=1 // pred_check_branch
      %35 = sbr.rel (0) target = $region13
    $region12: #{model_forward.17} parent=1 // pred_region
      %s37 = ssub.s32 32, 32
      %38 = vsyncadd [#allocation8], %s37
      %s40 = sshll.u32 [#allocation9], 4
      %s41 = int_to_ptr.vmem [resolvable:$true] %s40
      %43 = dma.hbm_to_vmem [thread:$0]  %s2, 32, %s41, [#allocation8]
    $region13: #{model_forward.17} parent=1 // pred_fallthru
      _
    // Predicated region
    $region14: #{model_forward.17} parent=1 // pred_check
      _
    $region15: #{model_forward.17} parent=1 // pred_check_branch
      %45 = sbr.rel (0) target = $region17
    $region16: #{model_forward.17} parent=1 // pred_region
      %46 = dma.done [#allocation5], 128
    $region17: #{model_forward.17} parent=1 // pred_fallthru
      _
    // Predicated region
    $region18: #{model_forward.17} parent=1 // pred_check
      _
    $region19: #{model_forward.17} parent=1 // pred_check_branch
      %48 = sbr.rel (0) target = $region21
    $region20: #{model_forward.17} parent=1 // pred_region
      %49 = dma.done [#allocation8], 128
    $region21: #{model_forward.17} parent=1 // pred_fallthru
      _
    // Predicated region
    $region22: #{model_forward.17} parent=1 // pred_check
      _
    $region23: #{model_forward.17} parent=1 // pred_check_branch
      %51 = sbr.rel (0) target = $region25
    $region24: #{model_forward.17} parent=1 // pred_region
      %52 = dma.done [#allocation8], 32
    $region25: #{model_forward.17} parent=1 // pred_fallthru
      _
    %p53 = scmp.eq.s32.totalorder 0, 0
    // Predicated region
    $region26: #{model_forward.17} parent=1 // pred_check
      %p54 = pneg %p53
    $region27: #{model_forward.17} parent=1 // pred_check_branch
      %56 = sbr.rel (%p54) target = $region29
    $region28: #{model_forward.17} parent=1 // pred_region
      %vm57 = vcmask 261120
      %58 = vst.msk [vmem:[#allocation2] sm:$0xff] %vm57, -3e+38
      %59 = vst.msk [vmem:[#allocation3] sm:$0xff] %vm57, 0.0
    $region29: #{model_forward.17} parent=1 // pred_fallthru
      _
    %v60 = vlaneseq
    %v61 = vshrl.u32 %v60, 7
    %s62 = smul.u32 0, 8
    %v63 = vstv %s62
    %v64 = vadd.s32 %v61, %v63
    %vm65 = vcmp.lt.s32.totalorder %v64, 8
    %v66 = vld [vmem:[#allocation7] sm:$0xff]
    %v67 = vsel %vm65, 1, 0
    %vm68 = vcmp.eq.s32.totalorder %v67, 1
    %v69 = vsel %vm68, %v66, 0.0
    %v70 = vld [vmem:[#allocation4] sm:$0xff]
    %v71 = vlaneseq
    %v72 = vand.u32 %v71, 127
    %73 = vset.pattern.permute.xlu0 0
    %74 = vperm.xlu0 %73, %v70
    %v75 = vpop.permute.xlu0 %74
    %vm76 = vcmp.eq.s32.totalorder %v75, %v72
    %vm77 = vmand %vm76, %vm68
    %v78 = vld [vmem:[#allocation3] sm:$0xff]
    %v79 = vsel %vm77, 1, 0
    %v80 = vcvt.s32.f32 %v79
    %81 = vxpose.xlu0.b32.start [1/16] %v80, 128
    %82 = vxpose.xlu0.b32.cont [2/16] 0.0, 128
    %83 = vxpose.xlu0.b32.cont [3/16] 0.0, 128
    %84 = vxpose.xlu0.b32.cont [4/16] 0.0, 128
    %85 = vxpose.xlu0.b32.cont [5/16] 0.0, 128
    %86 = vxpose.xlu0.b32.cont [6/16] 0.0, 128
    %87 = vxpose.xlu0.b32.cont [7/16] 0.0, 128
    %88 = vxpose.xlu0.b32.cont [8/16] 0.0, 128
    %89 = vxpose.xlu0.b32.cont [9/16] 0.0, 128
    %90 = vxpose.xlu0.b32.cont [10/16] 0.0, 128
    %91 = vxpose.xlu0.b32.cont [11/16] 0.0, 128
    %92 = vxpose.xlu0.b32.cont [12/16] 0.0, 128
    %93 = vxpose.xlu0.b32.cont [13/16] 0.0, 128
    %94 = vxpose.xlu0.b32.cont [14/16] 0.0, 128
    %95 = vxpose.xlu0.b32.cont [15/16] 0.0, 128
    %96 = vxpose.xlu0.b32.end [16/16] 0.0, 128
    %v97 = vpop.trf.xlu0
    %v98 = vpop.trf.xlu0
    %v99 = vpop.trf.xlu0
    %v100 = vpop.trf.xlu0
    %v101 = vpop.trf.xlu0
    %v102 = vpop.trf.xlu0
    %v103 = vpop.trf.xlu0
    %v104 = vpop.trf.xlu0
    %v105 = vpop.trf.xlu0
    %v106 = vpop.trf.xlu0
    %v107 = vpop.trf.xlu0
    %v108 = vpop.trf.xlu0
    %v109 = vpop.trf.xlu0
    %v110 = vpop.trf.xlu0
    %v111 = vpop.trf.xlu0
    %v112 = vpop.trf.xlu0
    %vm113 = vcmask 64512
    %v115 = vsel %vm113, %v97, 0
    %117 = vmatprep.subr.mxu0 0.0
    %118 = vmatpush1.msra.mxu0 %v69
    %119 = vmatprep.subr.mxu0 0.0
    %120 = vmatpush1.msra.mxu0 0.0
    %121 = vmatprep.subr.mxu0 0.0
    %122 = vmatpush1.msra.mxu0 0.0
    %123 = vmatprep.subr.mxu0 0.0
    %124 = vmatpush1.msra.mxu0 0.0
    %125 = vmatprep.subr.mxu0 0.0
    %126 = vmatpush1.msra.mxu0 0.0
    %127 = vmatprep.subr.mxu0 0.0
    %128 = vmatpush1.msra.mxu0 0.0
    %129 = vmatprep.subr.mxu0 0.0
    %130 = vmatpush1.msra.mxu0 0.0
    %131 = vmatprep.subr.mxu0 0.0
    %132 = vmatpush1.msra.mxu0 0.0
    %133 = vmatprep.subr.mxu0 0.0
    %134 = vmatpush1.msra.mxu0 0.0
    %135 = vmatprep.subr.mxu0 0.0
    %136 = vmatpush1.msra.mxu0 0.0
    %137 = vmatprep.subr.mxu0 0.0
    %138 = vmatpush1.msra.mxu0 0.0
    %139 = vmatprep.subr.mxu0 0.0
    %140 = vmatpush1.msra.mxu0 0.0
    %141 = vmatprep.subr.mxu0 0.0
    %142 = vmatpush1.msra.mxu0 0.0
    %143 = vmatprep.subr.mxu0 0.0
    %144 = vmatpush1.msra.mxu0 0.0
    %145 = vmatprep.subr.mxu0 0.0
    %146 = vmatpush1.msra.mxu0 0.0
    %147 = vmatprep.subr.mxu0 0.0
    %148 = vmatpush1.msra.mxu0 0.0
    %149 = vmatprep.subr.mxu0 0.0
    %150 = vmatpush1.msra.mxu0 0.0
    %151 = vmatprep.subr.mxu0 0.0
    %152 = vmatpush1.msra.mxu0 0.0
    %153 = vmatprep.subr.mxu0 0.0
    %154 = vmatpush1.msra.mxu0 0.0
    %155 = vmatprep.subr.mxu0 0.0
    %156 = vmatpush1.msra.mxu0 0.0
    %157 = vmatprep.subr.mxu0 0.0
    %158 = vmatpush1.msra.mxu0 0.0
    %159 = vmatprep.subr.mxu0 0.0
    %160 = vmatpush1.msra.mxu0 0.0
    %161 = vmatprep.subr.mxu0 0.0
    %162 = vmatpush1.msra.mxu0 0.0
    %163 = vmatprep.subr.mxu0 0.0
    %164 = vmatpush1.msra.mxu0 0.0
    %165 = vmatprep.subr.mxu0 0.0
    %166 = vmatpush1.msra.mxu0 0.0
    %167 = vmatprep.subr.mxu0 0.0
    %168 = vmatpush1.msra.mxu0 0.0
    %169 = vmatprep.subr.mxu0 0.0
    %170 = vmatpush1.msra.mxu0 0.0
    %171 = vmatprep.subr.mxu0 0.0
    %172 = vmatpush1.msra.mxu0 0.0
    %173 = vmatprep.subr.mxu0 0.0
    %174 = vmatpush1.msra.mxu0 0.0
    %175 = vmatprep.subr.mxu0 0.0
    %176 = vmatpush1.msra.mxu0 0.0
    %177 = vmatprep.subr.mxu0 0.0
    %178 = vmatpush1.msra.mxu0 0.0
    %179 = vmatprep.subr.mxu0 0.0
    %180 = vmatpush1.msra.mxu0 0.0
    %181 = vmatprep.mubr.f32.mxu0 0.0
    %182 = vmatmul.mubr.f32.gmra.mrb[0].mxu0 %v115
    %v183 = vpop.f32.mrb[0].mxu0
    %v184 = vadd.f32 0.0, %v183
    %v185 = vpop.f32.mrb[0].mxu0
    %186 = vdwg.mxu0
    %v187 = vadd.f32 %v78, %v184
    %vm188 = vcmask 261120
    %189 = vst.msk [vmem:[#allocation3] sm:$0xff] %vm188, %v187
    %190 = vset.pattern.permute.xlu0 0
    %191 = vperm.xlu0 %190, %v79
    %v192 = vpop.permute.xlu0 %191
    %vm193 = vcmp.eq.s32.totalorder %v192, 1
    %v194 = vsel %vm193, %v69, -3e+38
    %v195 = vsel %vm188, %v194, -inf
    %v196 = vrot.slane %v195, 4
    %v197 = vmax.f32 %v195, %v196
    %v198 = vrot.slane %v197, 2
    %v199 = vmax.f32 %v197, %v198
    %v200 = vrot.slane %v199, 1
    %v201 = vmax.f32 %v199, %v200
    %202 = vset.pattern.permute.xlu0 1
    %203 = vperm.xlu0 %202, %v79
    %v204 = vpop.permute.xlu0 %203
    %vm205 = vcmp.eq.s32.totalorder %v204, 1
    %v206 = vsel %vm205, %v69, -3e+38
    %v207 = vsel %vm188, %v206, -inf
    %v208 = vrot.slane %v207, 4
    %v209 = vmax.f32 %v207, %v208
    %v210 = vrot.slane %v209, 2
    %v211 = vmax.f32 %v209, %v210
    %v212 = vrot.slane %v211, 1
    %v213 = vmax.f32 %v211, %v212
    %v214 = vld [vmem:[#allocation2] sm:$0xff]
    %vm215 = vcmask 1040384
    %v216 = vsel %vm215, %v201, %v213
    %vm217 = vcmask 1041408
    %v218 = vsel %vm217, %v216, -3e+38
    %v219 = vmax.f32 %v214, %v218
    %220 = vst.msk [vmem:[#allocation2] sm:$0xff] %vm188, %v219
    // Predicated region
    $region30: #{model_forward.17} parent=1 // pred_check
      %p221 = pneg %p53
    $region31: #{model_forward.17} parent=1 // pred_check_branch
      %223 = sbr.rel (%p221) target = $region33
    $region32: #{model_forward.17} parent=1 // pred_region
      %v224 = vld [vmem:[#allocation2] sm:$0x3]
      %vm225 = vcmask 254976
      %226 = vst.msk [vmem:[#allocation10] sm:$0x3] %vm225, %v224
      %v227 = vld [vmem:[#allocation3] sm:$0x3]
      %v228 = vld [vmem:[#allocation9] sm:$0x3]
      %230 = vset.pattern.permute.xlu0 0
      %231 = vperm.xlu0 %230, %v228
      %v232 = vpop.permute.xlu0 %231
      %v234 = vmul.f32 %v227, %v232
      %235 = vst.msk [vmem:[#allocation11] sm:$0x3] %vm225, %v234
    $region33: #{model_forward.17} parent=1 // pred_fallthru
      _
    // Predicated region
    $region34: #{model_forward.17} parent=1 // pred_check
      _
    $region35: #{model_forward.17} parent=1 // pred_check_branch
      %237 = sbr.rel (0) target = $region37
    $region36: #{model_forward.17} parent=1 // pred_region
      %s239 = ssub.s32 32, 32
      %240 = vsyncadd [#allocation6], %s239
      %s242 = sshll.u32 [#allocation10], 4
      %s243 = int_to_ptr.vmem [resolvable:$true] %s242
      %245 = dma.vmem_to_hbm [thread:$0]  %s243, 32, %s3, [#allocation6]
    $region37: #{model_forward.17} parent=1 // pred_fallthru
      _
    // Predicated region
    $region38: #{model_forward.17} parent=1 // pred_check
      _
    $region39: #{model_forward.17} parent=1 // pred_check_branch
      %247 = sbr.rel (0) target = $region41
    $region40: #{model_forward.17} parent=1 // pred_region
      %s249 = ssub.s32 32, 32
      %250 = vsyncadd [#allocation12], %s249
      %s252 = sshll.u32 [#allocation11], 4
      %s253 = int_to_ptr.vmem [resolvable:$true] %s252
      %255 = dma.vmem_to_hbm [thread:$0]  %s253, 32, %s4, [#allocation12]
    $region41: #{model_forward.17} parent=1 // pred_fallthru
      _
    // Predicated region
    $region42: #{model_forward.17} parent=1 // pred_check
      _
    $region43: #{model_forward.17} parent=1 // pred_check_branch
      %257 = sbr.rel (0) target = $region45
    $region44: #{model_forward.17} parent=1 // pred_region
      %258 = dma.done [#allocation6], 32
    $region45: #{model_forward.17} parent=1 // pred_fallthru
      _
    // Predicated region
    $region46: #{model_forward.17} parent=1 // pred_check
      _
    $region47: #{model_forward.17} parent=1 // pred_check_branch
      %260 = sbr.rel (0) target = $region49
    $region48: #{model_forward.17} parent=1 // pred_region
      %261 = dma.done [#allocation12], 32
    $region49: #{model_forward.17} parent=1 // pred_fallthru
      _
    %262 = vsyncpa [#allocation5], 1
    %263 = vsyncpa [#allocation8], 1
    %264 = vsyncpa [#allocation6], 1
    %265 = vsyncpa [#allocation12], 1

// kernel: model_forward.23
$region0: #{model_forward.23}
  #allocation0 [shape = 'u32[]', space=smem, size = 0x4, offset = 0x4, fixed_abs, tag = 'smem constant byte address 0x4 - core index']
  #allocation1 [shape = 'u32[144,128]{1,0:T(1,128)}', space=vmem, size = 0x12000, scoped, tag = 'internal scratch']
  #allocation2 [shape = 'f32[1,1]{1,0:T(1,128)S(1)}', space=vmem, size = 0x200, scoped, tag = 'scoped memory for model_forward.23']
  %s0 = inlined_call_operand.hbm [shape: f32[2,80], index: 0, kind: input, shape index: {}]
  %s1 = inlined_call_operand.hbm [shape: f32[80,64], index: 1, kind: input, shape index: {}]
  %s2 = inlined_call_operand.hbm [shape: f32[1,64], index: 2, kind: input, shape index: {}]
  %s3 = inlined_call_operand.hbm [shape: f32[1,64], index: 3, kind: input, shape index: {}]
  %s4 = inlined_call_operand.hbm [shape: f32[1,64], index: 4, kind: input, shape index: {}]
  %s5 = inlined_call_operand.hbm [shape: f32[64,64], index: 5, kind: input, shape index: {}]
  %s6 = inlined_call_operand.hbm [shape: f32[1,64], index: 6, kind: input, shape index: {}]
  %s7 = inlined_call_operand.hbm [shape: f32[1,64], index: 7, kind: input, shape index: {}]
  %s8 = inlined_call_operand.hbm [shape: f32[1,64], index: 8, kind: input, shape index: {}]
  %s9 = inlined_call_operand.hbm [shape: f32[64,1], index: 9, kind: input, shape index: {}]
  %s10 = inlined_call_operand.<no memory space> [shape: f32[1,1], index: 10, kind: input, shape index: {}]
  %s11 = inlined_call_operand.hbm [shape: f32[2,1], index: 11, kind: output, shape index: {}]
  %s12 = sld [smem:[#allocation0]]
  $region94: #{model_forward.23} parent=0
    _
  %s14 = ssub.s32 1, %s12
  %s15 = scalar_select 0, %s14, %s12
  %v16 = vstv %s10
  %17 = vst [vmem:[#allocation2] sm:$0x1] %v16
  $region1: #{model_forward.23} parent=0
    #allocation3 [shape = 'u8[1024]{0}', space=vmem, size = 0x400, scoped, tag = 'input window, operand 0, single buffered']
    #allocation4 [shape = 's32[1]{0}', space=sflag, size = 0x4, scoped, tag = 'scoped memory for model_forward.23']
    #allocation5 [shape = 's32[1]{0}', space=sflag, size = 0x4, scoped, tag = 'scoped memory for model_forward.23']
    #allocation6 [shape = 'u8[40960]{0}', space=vmem, size = 0xa000, scoped, tag = 'input window, operand 1, single buffered']
    #allocation7 [shape = 's32[1]{0}', space=sflag, size = 0x4, scoped, tag = 'scoped memory for model_forward.23']
    #allocation8 [shape = 'u8[512]{0}', space=vmem, size = 0x400, scoped, tag = 'input window, operand 2, single buffered']
    #allocation9 [shape = 'u8[512]{0}', space=vmem, size = 0x400, scoped, tag = 'input window, operand 3, single buffered']
    #allocation10 [shape = 's32[1]{0}', space=sflag, size = 0x4, scoped, tag = 'scoped memory for model_forward.23']
    #allocation11 [shape = 'u8[512]{0}', space=vmem, size = 0x400, scoped, tag = 'input window, operand 4, single buffered']
    #allocation12 [shape = 'u8[32768]{0}', space=vmem, size = 0x8000, scoped, tag = 'input window, operand 5, single buffered']
    #allocation13 [shape = 's32[1]{0}', space=sflag, size = 0x4, scoped, tag = 'scoped memory for model_forward.23']
    #allocation14 [shape = 'u8[512]{0}', space=vmem, size = 0x400, scoped, tag = 'input window, operand 6, single buffered']
    #allocation15 [shape = 'u8[512]{0}', space=vmem, size = 0x400, scoped, tag = 'input window, operand 7, single buffered']
    #allocation16 [shape = 's32[1]{0}', space=sflag, size = 0x4, scoped, tag = 'scoped memory for model_forward.23']
    #allocation17 [shape = 'u8[512]{0}', space=vmem, size = 0x400, scoped, tag = 'input window, operand 8, single buffered']
    #allocation18 [shape = 'u8[32768]{0}', space=vmem, size = 0x8000, scoped, tag = 'input window, operand 9, single buffered']
    #allocation19 [shape = 's32[1]{0}', space=sflag, size = 0x4, scoped, tag = 'scoped memory for model_forward.23']
    #allocation20 [shape = 'u8[1024]{0}', space=vmem, size = 0x400, scoped, tag = 'output window, operand 0, single buffered']
    %18 = vsyncpa [#allocation4], 0
    %19 = vsyncpa [#allocation7], 0
    %20 = vsyncpa [#allocation10], 0
    %21 = vsyncpa [#allocation13], 0
    %22 = vsyncpa [#allocation16], 0
    %23 = vsyncpa [#allocation19], 0
    %24 = vsyncpa [#allocation5], 0
    // Predicated region
    $region2: #{model_forward.23} parent=1 // pred_check
      _
    $region3: #{model_forward.23} parent=1 // pred_check_branch
      %26 = sbr.rel (0) target = $region5
    $region4: #{model_forward.23} parent=1 // pred_region
      %s28 = ssub.s32 32, 32
      %29 = vsyncadd [#allocation4], %s28
      %s31 = sshll.u32 [#allocation3], 4
      %s32 = int_to_ptr.vmem [resolvable:$true] %s31
      %34 = dma.hbm_to_vmem [thread:$0]  %s0, 32, %s32, [#allocation4]
    $region5: #{model_forward.23} parent=1 // pred_fallthru
      _
    // Predicated region
    $region6: #{model_forward.23} parent=1 // pred_check
      _
    $region7: #{model_forward.23} parent=1 // pred_check_branch
      %36 = sbr.rel (0) target = $region9
    $region8: #{model_forward.23} parent=1 // pred_region
      %s38 = ssub.s32 1280, 1280
      %39 = vsyncadd [#allocation7], %s38
      %s40 = sshll.u32 [#allocation6], 4
      %s41 = int_to_ptr.vmem [resolvable:$true] %s40
      %46 = dma.hbm_to_vmem [thread:$0]  %s1, 1280, %s41, [#allocation7], 128, 128, 8
    $region9: #{model_forward.23} parent=1 // pred_fallthru
      _
    // Predicated region
    $region10: #{model_forward.23} parent=1 // pred_check
      _
    $region11: #{model_forward.23} parent=1 // pred_check_branch
      %48 = sbr.rel (0) target = $region13
    $region12: #{model_forward.23} parent=1 // pred_region
      %s50 = ssub.s32 16, 16
      %51 = vsyncadd [#allocation7], %s50
      %s53 = sshll.u32 [#allocation8], 4
      %s54 = int_to_ptr.vmem [resolvable:$true] %s53
      %56 = dma.hbm_to_vmem [thread:$0]  %s2, 16, %s54, [#allocation7]
    $region13: #{model_forward.23} parent=1 // pred_fallthru
      _
    // Predicated region
    $region14: #{model_forward.23} parent=1 // pred_check
      _
    $region15: #{model_forward.23} parent=1 // pred_check_branch
      %58 = sbr.rel (0) target = $region17
    $region16: #{model_forward.23} parent=1 // pred_region
      %s60 = ssub.s32 16, 16
      %61 = vsyncadd [#allocation10], %s60
      %s63 = sshll.u32 [#allocation9], 4
      %s64 = int_to_ptr.vmem [resolvable:$true] %s63
      %66 = dma.hbm_to_vmem [thread:$0]  %s3, 16, %s64, [#allocation10]
    $region17: #{model_forward.23} parent=1 // pred_fallthru
      _
    // Predicated region
    $region18: #{model_forward.23} parent=1 // pred_check
      _
    $region19: #{model_forward.23} parent=1 // pred_check_branch
      %68 = sbr.rel (0) target = $region21
    $region20: #{model_forward.23} parent=1 // pred_region
      %s70 = ssub.s32 16, 16
      %71 = vsyncadd [#allocation10], %s70
      %s73 = sshll.u32 [#allocation11], 4
      %s74 = int_to_ptr.vmem [resolvable:$true] %s73
      %76 = dma.hbm_to_vmem [thread:$0]  %s4, 16, %s74, [#allocation10]
    $region21: #{model_forward.23} parent=1 // pred_fallthru
      _
    // Predicated region
    $region22: #{model_forward.23} parent=1 // pred_check
      _
    $region23: #{model_forward.23} parent=1 // pred_check_branch
      %78 = sbr.rel (0) target = $region25
    $region24: #{model_forward.23} parent=1 // pred_region
      %s80 = ssub.s32 1024, 1024
      %81 = vsyncadd [#allocation13], %s80
      %s82 = sshll.u32 [#allocation12], 4
      %s83 = int_to_ptr.vmem [resolvable:$true] %s82
      %88 = dma.hbm_to_vmem [thread:$0]  %s5, 1024, %s83, [#allocation13], 128, 128, 8
    $region25: #{model_forward.23} parent=1 // pred_fallthru
      _
    // Predicated region
    $region26: #{model_forward.23} parent=1 // pred_check
      _
    $region27: #{model_forward.23} parent=1 // pred_check_branch
      %90 = sbr.rel (0) target = $region29
    $region28: #{model_forward.23} parent=1 // pred_region
      %s92 = ssub.s32 16, 16
      %93 = vsyncadd [#allocation13], %s92
      %s95 = sshll.u32 [#allocation14], 4
      %s96 = int_to_ptr.vmem [resolvable:$true] %s95
      %98 = dma.hbm_to_vmem [thread:$0]  %s6, 16, %s96, [#allocation13]
    $region29: #{model_forward.23} parent=1 // pred_fallthru
      _
    // Predicated region
    $region30: #{model_forward.23} parent=1 // pred_check
      _
    $region31: #{model_forward.23} parent=1 // pred_check_branch
      %100 = sbr.rel (0) target = $region33
    $region32: #{model_forward.23} parent=1 // pred_region
      %s102 = ssub.s32 16, 16
      %103 = vsyncadd [#allocation16], %s102
      %s105 = sshll.u32 [#allocation15], 4
      %s106 = int_to_ptr.vmem [resolvable:$true] %s105
      %108 = dma.hbm_to_vmem [thread:$0]  %s7, 16, %s106, [#allocation16]
    $region33: #{model_forward.23} parent=1 // pred_fallthru
      _
    // Predicated region
    $region34: #{model_forward.23} parent=1 // pred_check
      _
    $region35: #{model_forward.23} parent=1 // pred_check_branch
      %110 = sbr.rel (0) target = $region37
    $region36: #{model_forward.23} parent=1 // pred_region
      %s112 = ssub.s32 16, 16
      %113 = vsyncadd [#allocation16], %s112
      %s115 = sshll.u32 [#allocation17], 4
      %s116 = int_to_ptr.vmem [resolvable:$true] %s115
      %118 = dma.hbm_to_vmem [thread:$0]  %s8, 16, %s116, [#allocation16]
    $region37: #{model_forward.23} parent=1 // pred_fallthru
      _
    // Predicated region
    $region38: #{model_forward.23} parent=1 // pred_check
      _
    $region39: #{model_forward.23} parent=1 // pred_check_branch
      %120 = sbr.rel (0) target = $region41
    $region40: #{model_forward.23} parent=1 // pred_region
      %s122 = ssub.s32 1024, 1024
      %123 = vsyncadd [#allocation19], %s122
      %s124 = sshll.u32 [#allocation18], 4
      %s125 = int_to_ptr.vmem [resolvable:$true] %s124
      %130 = dma.hbm_to_vmem [thread:$0]  %s9, 1024, %s125, [#allocation19], 128, 128, 8
    $region41: #{model_forward.23} parent=1 // pred_fallthru
      _
    // Predicated region
    $region42: #{model_forward.23} parent=1 // pred_check
      _
    $region43: #{model_forward.23} parent=1 // pred_check_branch
      %132 = sbr.rel (0) target = $region45
    $region44: #{model_forward.23} parent=1 // pred_region
      _
    $region45: #{model_forward.23} parent=1 // pred_fallthru
      _
    // Predicated region
    $region46: #{model_forward.23} parent=1 // pred_check
      _
    $region47: #{model_forward.23} parent=1 // pred_check_branch
      %134 = sbr.rel (0) target = $region49
    $region48: #{model_forward.23} parent=1 // pred_region
      %135 = dma.done [#allocation4], 32
    $region49: #{model_forward.23} parent=1 // pred_fallthru
      _
    // Predicated region
    $region50: #{model_forward.23} parent=1 // pred_check
      _
    $region51: #{model_forward.23} parent=1 // pred_check_branch
      %137 = sbr.rel (0) target = $region53
    $region52: #{model_forward.23} parent=1 // pred_region
      %138 = dma.done [#allocation7], 1280
    $region53: #{model_forward.23} parent=1 // pred_fallthru
      _
    // Predicated region
    $region54: #{model_forward.23} parent=1 // pred_check
      _
    $region55: #{model_forward.23} parent=1 // pred_check_branch
      %140 = sbr.rel (0) target = $region57
    $region56: #{model_forward.23} parent=1 // pred_region
      %141 = dma.done [#allocation7], 16
    $region57: #{model_forward.23} parent=1 // pred_fallthru
      _
    // Predicated region
    $region58: #{model_forward.23} parent=1 // pred_check
      _
    $region59: #{model_forward.23} parent=1 // pred_check_branch
      %143 = sbr.rel (0) target = $region61
    $region60: #{model_forward.23} parent=1 // pred_region
      %144 = dma.done [#allocation10], 16
    $region61: #{model_forward.23} parent=1 // pred_fallthru
      _
    // Predicated region
    $region62: #{model_forward.23} parent=1 // pred_check
      _
    $region63: #{model_forward.23} parent=1 // pred_check_branch
      %146 = sbr.rel (0) target = $region65
    $region64: #{model_forward.23} parent=1 // pred_region
      %147 = dma.done [#allocation10], 16
    $region65: #{model_forward.23} parent=1 // pred_fallthru
      _
    // Predicated region
    $region66: #{model_forward.23} parent=1 // pred_check
      _
    $region67: #{model_forward.23} parent=1 // pred_check_branch
      %149 = sbr.rel (0) target = $region69
    $region68: #{model_forward.23} parent=1 // pred_region
      %150 = dma.done [#allocation13], 1024
    $region69: #{model_forward.23} parent=1 // pred_fallthru
      _
    // Predicated region
    $region70: #{model_forward.23} parent=1 // pred_check
      _
    $region71: #{model_forward.23} parent=1 // pred_check_branch
      %152 = sbr.rel (0) target = $region73
    $region72: #{model_forward.23} parent=1 // pred_region
      %153 = dma.done [#allocation13], 16
    $region73: #{model_forward.23} parent=1 // pred_fallthru
      _
    // Predicated region
    $region74: #{model_forward.23} parent=1 // pred_check
      _
    $region75: #{model_forward.23} parent=1 // pred_check_branch
      %155 = sbr.rel (0) target = $region77
    $region76: #{model_forward.23} parent=1 // pred_region
      %156 = dma.done [#allocation16], 16
    $region77: #{model_forward.23} parent=1 // pred_fallthru
      _
    // Predicated region
    $region78: #{model_forward.23} parent=1 // pred_check
      _
    $region79: #{model_forward.23} parent=1 // pred_check_branch
      %158 = sbr.rel (0) target = $region81
    $region80: #{model_forward.23} parent=1 // pred_region
      %159 = dma.done [#allocation16], 16
    $region81: #{model_forward.23} parent=1 // pred_fallthru
      _
    // Predicated region
    $region82: #{model_forward.23} parent=1 // pred_check
      _
    $region83: #{model_forward.23} parent=1 // pred_check_branch
      %161 = sbr.rel (0) target = $region85
    $region84: #{model_forward.23} parent=1 // pred_region
      %162 = dma.done [#allocation19], 1024
    $region85: #{model_forward.23} parent=1 // pred_fallthru
      _
    %v163 = vld [vmem:[#allocation3] sm:$0x3]
    %v164 = vld [vmem:[#allocation6] sm:$0xff]
    %v165 = vld [vmem:[#allocation6 + $0x8] sm:$0xff]
    %v166 = vld [vmem:[#allocation6 + $0x10] sm:$0xff]
    %v167 = vld [vmem:[#allocation6 + $0x18] sm:$0xff]
    %v168 = vld [vmem:[#allocation6 + $0x20] sm:$0xff]
    %v169 = vld [vmem:[#allocation6 + $0x28] sm:$0xff]
    %v170 = vld [vmem:[#allocation6 + $0x30] sm:$0xff]
    %v171 = vld [vmem:[#allocation6 + $0x38] sm:$0xff]
    %v172 = vld [vmem:[#allocation6 + $0x40] sm:$0xff]
    %v173 = vld [vmem:[#allocation6 + $0x48] sm:$0xff]
    %v174 = vld [vmem:[#allocation8] sm:$0x1]
    %v176 = vlaneseq
    %v177 = vshrl.u32 %v176, 7
    %v178 = vsub.s32 0, %v177
    %v179 = vrot.slane %v174, %v178
    %vm181 = vcmask 654336
    %v183 = vsel %vm181, %v163, 0
    %185 = vmatprep.subr.mxu0 0.0
    %186 = vmatpush1.msra.mxu0 %v164
    %187 = vmatprep.subr.mxu0 0.0
    %188 = vmatpush1.msra.mxu0 %v165
    %189 = vmatprep.subr.mxu0 0.0
    %190 = vmatpush1.msra.mxu0 %v166
    %191 = vmatprep.subr.mxu0 0.0
    %192 = vmatpush1.msra.mxu0 %v167
    %193 = vmatprep.subr.mxu0 0.0
    %194 = vmatpush1.msra.mxu0 %v168
    %195 = vmatprep.subr.mxu0 0.0
    %196 = vmatpush1.msra.mxu0 %v169
    %197 = vmatprep.subr.mxu0 0.0
    %198 = vmatpush1.msra.mxu0 %v170
    %199 = vmatprep.subr.mxu0 0.0
    %200 = vmatpush1.msra.mxu0 %v171
    %201 = vmatprep.subr.mxu0 0.0
    %202 = vmatpush1.msra.mxu0 %v172
    %203 = vmatprep.subr.mxu0 0.0
    %204 = vmatpush1.msra.mxu0 %v173
    %205 = vmatprep.subr.mxu0 0.0
    %206 = vmatpush1.msra.mxu0 0.0
    %207 = vmatprep.subr.mxu0 0.0
    %208 = vmatpush1.msra.mxu0 0.0
    %209 = vmatprep.subr.mxu0 0.0
    %210 = vmatpush1.msra.mxu0 0.0
    %211 = vmatprep.subr.mxu0 0.0
    %212 = vmatpush1.msra.mxu0 0.0
    %213 = vmatprep.subr.mxu0 0.0
    %214 = vmatpush1.msra.mxu0 0.0
    %215 = vmatprep.subr.mxu0 0.0
    %216 = vmatpush1.msra.mxu0 0.0
    %217 = vmatprep.subr.mxu0 0.0
    %218 = vmatpush1.msra.mxu0 0.0
    %219 = vmatprep.subr.mxu0 0.0
    %220 = vmatpush1.msra.mxu0 0.0
    %221 = vmatprep.subr.mxu0 0.0
    %222 = vmatpush1.msra.mxu0 0.0
    %223 = vmatprep.subr.mxu0 0.0
    %224 = vmatpush1.msra.mxu0 0.0
    %225 = vmatprep.subr.mxu0 0.0
    %226 = vmatpush1.msra.mxu0 0.0
    %227 = vmatprep.subr.mxu0 0.0
    %228 = vmatpush1.msra.mxu0 0.0
    %229 = vmatprep.subr.mxu0 0.0
    %230 = vmatpush1.msra.mxu0 0.0
    %231 = vmatprep.subr.mxu0 0.0
    %232 = vmatpush1.msra.mxu0 0.0
    %233 = vmatprep.subr.mxu0 0.0
    %234 = vmatpush1.msra.mxu0 0.0
    %235 = vmatprep.subr.mxu0 0.0
    %236 = vmatpush1.msra.mxu0 0.0
    %237 = vmatprep.subr.mxu0 0.0
    %238 = vmatpush1.msra.mxu0 0.0
    %239 = vmatprep.subr.mxu0 0.0
    %240 = vmatpush1.msra.mxu0 0.0
    %241 = vmatprep.subr.mxu0 0.0
    %242 = vmatpush1.msra.mxu0 0.0
    %243 = vmatprep.subr.mxu0 0.0
    %244 = vmatpush1.msra.mxu0 0.0
    %245 = vmatprep.subr.mxu0 0.0
    %246 = vmatpush1.msra.mxu0 0.0
    %247 = vmatprep.subr.mxu0 0.0
    %248 = vmatpush1.msra.mxu0 0.0
    %249 = vmatprep.mubr.f32.mxu0 0.0
    %250 = vmatmul.mubr.f32.gmra.mrb[0].mxu0 %v183
    %v251 = vpop.f32.mrb[0].mxu0
    %v252 = vadd.f32 %v179, %v251
    %v253 = vpop.f32.mrb[0].mxu0
    %254 = vdwg.mxu0
    %v255 = vld [vmem:[#allocation9] sm:$0x1]
    %v257 = vlaneseq
    %v258 = vshrl.u32 %v257, 7
    %v259 = vsub.s32 0, %v258
    %v260 = vrot.slane %v255, %v259
    %v262 = vmul.f32 %v252, %v260
    %v263 = vld [vmem:[#allocation11] sm:$0x1]
    %v265 = vlaneseq
    %v266 = vshrl.u32 %v265, 7
    %v267 = vsub.s32 0, %v266
    %v268 = vrot.slane %v263, %v267
    %v270 = vadd.f32 %v262, %v268
    %v271 = vmax.f32 %v270, 0.0
    %v272 = vld [vmem:[#allocation12] sm:$0xff]
    %v273 = vld [vmem:[#allocation12 + $0x8] sm:$0xff]
    %v274 = vld [vmem:[#allocation12 + $0x10] sm:$0xff]
    %v275 = vld [vmem:[#allocation12 + $0x18] sm:$0xff]
    %v276 = vld [vmem:[#allocation12 + $0x20] sm:$0xff]
    %v277 = vld [vmem:[#allocation12 + $0x28] sm:$0xff]
    %v278 = vld [vmem:[#allocation12 + $0x30] sm:$0xff]
    %v279 = vld [vmem:[#allocation12 + $0x38] sm:$0xff]
    %v280 = vld [vmem:[#allocation14] sm:$0x1]
    %v282 = vlaneseq
    %v283 = vshrl.u32 %v282, 7
    %v284 = vsub.s32 0, %v283
    %v285 = vrot.slane %v280, %v284
    %vm287 = vcmask 523264
    %v289 = vsel %vm287, %v271, 0
    %291 = vmatprep.subr.mxu0 0.0
    %292 = vmatpush1.msra.mxu0 %v272
    %293 = vmatprep.subr.mxu0 0.0
    %294 = vmatpush1.msra.mxu0 %v273
    %295 = vmatprep.subr.mxu0 0.0
    %296 = vmatpush1.msra.mxu0 %v274
    %297 = vmatprep.subr.mxu0 0.0
    %298 = vmatpush1.msra.mxu0 %v275
    %299 = vmatprep.subr.mxu0 0.0
    %300 = vmatpush1.msra.mxu0 %v276
    %301 = vmatprep.subr.mxu0 0.0
    %302 = vmatpush1.msra.mxu0 %v277
    %303 = vmatprep.subr.mxu0 0.0
    %304 = vmatpush1.msra.mxu0 %v278
    %305 = vmatprep.subr.mxu0 0.0
    %306 = vmatpush1.msra.mxu0 %v279
    %307 = vmatprep.subr.mxu0 0.0
    %308 = vmatpush1.msra.mxu0 0.0
    %309 = vmatprep.subr.mxu0 0.0
    %310 = vmatpush1.msra.mxu0 0.0
    %311 = vmatprep.subr.mxu0 0.0
    %312 = vmatpush1.msra.mxu0 0.0
    %313 = vmatprep.subr.mxu0 0.0
    %314 = vmatpush1.msra.mxu0 0.0
    %315 = vmatprep.subr.mxu0 0.0
    %316 = vmatpush1.msra.mxu0 0.0
    %317 = vmatprep.subr.mxu0 0.0
    %318 = vmatpush1.msra.mxu0 0.0
    %319 = vmatprep.subr.mxu0 0.0
    %320 = vmatpush1.msra.mxu0 0.0
    %321 = vmatprep.subr.mxu0 0.0
    %322 = vmatpush1.msra.mxu0 0.0
    %323 = vmatprep.subr.mxu0 0.0
    %324 = vmatpush1.msra.mxu0 0.0
    %325 = vmatprep.subr.mxu0 0.0
    %326 = vmatpush1.msra.mxu0 0.0
    %327 = vmatprep.subr.mxu0 0.0
    %328 = vmatpush1.msra.mxu0 0.0
    %329 = vmatprep.subr.mxu0 0.0
    %330 = vmatpush1.msra.mxu0 0.0
    %331 = vmatprep.subr.mxu0 0.0
    %332 = vmatpush1.msra.mxu0 0.0
    %333 = vmatprep.subr.mxu0 0.0
    %334 = vmatpush1.msra.mxu0 0.0
    %335 = vmatprep.subr.mxu0 0.0
    %336 = vmatpush1.msra.mxu0 0.0
    %337 = vmatprep.subr.mxu0 0.0
    %338 = vmatpush1.msra.mxu0 0.0
    %339 = vmatprep.subr.mxu0 0.0
    %340 = vmatpush1.msra.mxu0 0.0
    %341 = vmatprep.subr.mxu0 0.0
    %342 = vmatpush1.msra.mxu0 0.0
    %343 = vmatprep.subr.mxu0 0.0
    %344 = vmatpush1.msra.mxu0 0.0
    %345 = vmatprep.subr.mxu0 0.0
    %346 = vmatpush1.msra.mxu0 0.0
    %347 = vmatprep.subr.mxu0 0.0
    %348 = vmatpush1.msra.mxu0 0.0
    %349 = vmatprep.subr.mxu0 0.0
    %350 = vmatpush1.msra.mxu0 0.0
    %351 = vmatprep.subr.mxu0 0.0
    %352 = vmatpush1.msra.mxu0 0.0
    %353 = vmatprep.subr.mxu0 0.0
    %354 = vmatpush1.msra.mxu0 0.0
    %355 = vmatprep.mubr.f32.mxu0 0.0
    %356 = vmatmul.mubr.f32.gmra.mrb[0].mxu0 %v289
    %v357 = vpop.f32.mrb[0].mxu0
    %v358 = vadd.f32 %v285, %v357
    %v359 = vpop.f32.mrb[0].mxu0
    %360 = vdwg.mxu0
    %v361 = vld [vmem:[#allocation15] sm:$0x1]
    %v363 = vlaneseq
    %v364 = vshrl.u32 %v363, 7
    %v365 = vsub.s32 0, %v364
    %v366 = vrot.slane %v361, %v365
    %v368 = vmul.f32 %v358, %v366
    %v369 = vld [vmem:[#allocation17] sm:$0x1]
    %v371 = vlaneseq
    %v372 = vshrl.u32 %v371, 7
    %v373 = vsub.s32 0, %v372
    %v374 = vrot.slane %v369, %v373
    %v376 = vadd.f32 %v368, %v374
    %v377 = vmax.f32 %v376, 0.0
    %v378 = vld [vmem:[#allocation18] sm:$0xff]
    %v379 = vld [vmem:[#allocation18 + $0x8] sm:$0xff]
    %v380 = vld [vmem:[#allocation18 + $0x10] sm:$0xff]
    %v381 = vld [vmem:[#allocation18 + $0x18] sm:$0xff]
    %v382 = vld [vmem:[#allocation18 + $0x20] sm:$0xff]
    %v383 = vld [vmem:[#allocation18 + $0x28] sm:$0xff]
    %v384 = vld [vmem:[#allocation18 + $0x30] sm:$0xff]
    %v385 = vld [vmem:[#allocation18 + $0x38] sm:$0xff]
    %v386 = vld [vmem:[#allocation2] sm:$0x1]
    %v388 = vlaneseq
    %v389 = vshrl.u32 %v388, 7
    %v390 = vsub.s32 0, %v389
    %v391 = vrot.slane %v386, %v390
    %v394 = vsel %vm287, %v377, 0
    %396 = vmatprep.subr.mxu0 0.0
    %397 = vmatpush1.msra.mxu0 %v378
    %398 = vmatprep.subr.mxu0 0.0
    %399 = vmatpush1.msra.mxu0 %v379
    %400 = vmatprep.subr.mxu0 0.0
    %401 = vmatpush1.msra.mxu0 %v380
    %402 = vmatprep.subr.mxu0 0.0
    %403 = vmatpush1.msra.mxu0 %v381
    %404 = vmatprep.subr.mxu0 0.0
    %405 = vmatpush1.msra.mxu0 %v382
    %406 = vmatprep.subr.mxu0 0.0
    %407 = vmatpush1.msra.mxu0 %v383
    %408 = vmatprep.subr.mxu0 0.0
    %409 = vmatpush1.msra.mxu0 %v384
    %410 = vmatprep.subr.mxu0 0.0
    %411 = vmatpush1.msra.mxu0 %v385
    %412 = vmatprep.subr.mxu0 0.0
    %413 = vmatpush1.msra.mxu0 0.0
    %414 = vmatprep.subr.mxu0 0.0
    %415 = vmatpush1.msra.mxu0 0.0
    %416 = vmatprep.subr.mxu0 0.0
    %417 = vmatpush1.msra.mxu0 0.0
    %418 = vmatprep.subr.mxu0 0.0
    %419 = vmatpush1.msra.mxu0 0.0
    %420 = vmatprep.subr.mxu0 0.0
    %421 = vmatpush1.msra.mxu0 0.0
    %422 = vmatprep.subr.mxu0 0.0
    %423 = vmatpush1.msra.mxu0 0.0
    %424 = vmatprep.subr.mxu0 0.0
    %425 = vmatpush1.msra.mxu0 0.0
    %426 = vmatprep.subr.mxu0 0.0
    %427 = vmatpush1.msra.mxu0 0.0
    %428 = vmatprep.subr.mxu0 0.0
    %429 = vmatpush1.msra.mxu0 0.0
    %430 = vmatprep.subr.mxu0 0.0
    %431 = vmatpush1.msra.mxu0 0.0
    %432 = vmatprep.subr.mxu0 0.0
    %433 = vmatpush1.msra.mxu0 0.0
    %434 = vmatprep.subr.mxu0 0.0
    %435 = vmatpush1.msra.mxu0 0.0
    %436 = vmatprep.subr.mxu0 0.0
    %437 = vmatpush1.msra.mxu0 0.0
    %438 = vmatprep.subr.mxu0 0.0
    %439 = vmatpush1.msra.mxu0 0.0
    %440 = vmatprep.subr.mxu0 0.0
    %441 = vmatpush1.msra.mxu0 0.0
    %442 = vmatprep.subr.mxu0 0.0
    %443 = vmatpush1.msra.mxu0 0.0
    %444 = vmatprep.subr.mxu0 0.0
    %445 = vmatpush1.msra.mxu0 0.0
    %446 = vmatprep.subr.mxu0 0.0
    %447 = vmatpush1.msra.mxu0 0.0
    %448 = vmatprep.subr.mxu0 0.0
    %449 = vmatpush1.msra.mxu0 0.0
    %450 = vmatprep.subr.mxu0 0.0
    %451 = vmatpush1.msra.mxu0 0.0
    %452 = vmatprep.subr.mxu0 0.0
    %453 = vmatpush1.msra.mxu0 0.0
    %454 = vmatprep.subr.mxu0 0.0
    %455 = vmatpush1.msra.mxu0 0.0
    %456 = vmatprep.subr.mxu0 0.0
    %457 = vmatpush1.msra.mxu0 0.0
    %458 = vmatprep.subr.mxu0 0.0
    %459 = vmatpush1.msra.mxu0 0.0
    %460 = vmatprep.mubr.f32.mxu0 0.0
    %461 = vmatmul.mubr.f32.gmra.mrb[0].mxu0 %v394
    %v462 = vpop.f32.mrb[0].mxu0
    %v463 = vadd.f32 %v391, %v462
    %v464 = vpop.f32.mrb[0].mxu0
    %465 = vdwg.mxu0
    %v466 = vxor.u32 %v463, 2147483648
    %v467 = vmul.f32 %v466, 1.442695
    %v468 = vpow.pop %v467
    %v469 = vadd.f32 %v468, 1.0
    %v470 = vrcp.pop %v469
    %v471 = vmul.f32 1.0, %v470
    %vm472 = vcmask 1024
    %473 = vst.msk [vmem:[#allocation20] sm:$0x3] %vm472, %v471
    // Predicated region
    $region86: #{model_forward.23} parent=1 // pred_check
      _
    $region87: #{model_forward.23} parent=1 // pred_check_branch
      %475 = sbr.rel (0) target = $region89
    $region88: #{model_forward.23} parent=1 // pred_region
      %s477 = ssub.s32 32, 32
      %478 = vsyncadd [#allocation5], %s477
      %s480 = sshll.u32 [#allocation20], 4
      %s481 = int_to_ptr.vmem [resolvable:$true] %s480
      %483 = dma.vmem_to_hbm [thread:$0]  %s481, 32, %s11, [#allocation5]
    $region89: #{model_forward.23} parent=1 // pred_fallthru
      _
    // Predicated region
    $region90: #{model_forward.23} parent=1 // pred_check
      _
    $region91: #{model_forward.23} parent=1 // pred_check_branch
      %485 = sbr.rel (0) target = $region93
    $region92: #{model_forward.23} parent=1 // pred_region
      %486 = dma.done [#allocation5], 32
    $region93: #{model_forward.23} parent=1 // pred_fallthru
      _
    %487 = vsyncpa [#allocation4], 1
    %488 = vsyncpa [#allocation7], 1
    %489 = vsyncpa [#allocation10], 1
    %490 = vsyncpa [#allocation13], 1
    %491 = vsyncpa [#allocation16], 1
    %492 = vsyncpa [#allocation19], 1
    %493 = vsyncpa [#allocation5], 1

</llo_original>
